<compile_context>
chip_gen: v7x
topology: tpu7x:2x2x1
jax: 0.10.0
libtpu: 0.0.40
codegen_flags: <defaults>
</compile_context>

<pallas_src>
import functools

import jax
import jax.numpy as jnp
from jax import lax
from jax.experimental import pallas as pl
from jax.experimental.pallas import tpu as pltpu


# ---------------- tiling heuristic --------------------------------------------

def _choose_depth_tile(D, HW, hidden, vmem_budget=8 << 20):
    """Depth slices per grid step: must divide D; TD*HW must be a multiple of
    128 lanes (or the full extent) so the main/out blocks are lane-dense; the
    (TD+2, hidden, HW) f32 scratch must fit the budget; prefer TD*HW >= 256
    (fills the MXU M dimension on v6e/v7x, >=128 on v5e)."""
    cands = [td for td in range(1, D + 1)
             if D % td == 0 and ((td * HW) % 128 == 0 or td == D)]
    hw_pad = -(-HW // 128) * 128
    sub_pad = -(-max(hidden, 1) // 8) * 8
    fitting = [td for td in cands
               if (td + 2) * sub_pad * hw_pad * 4 <= vmem_budget]
    fitting = fitting or [min(cands)]
    big = [td for td in fitting if td * HW >= 256 and td >= min(4, D)]
    return min(big) if big else max(fitting)


# ---------------- fused kernel ------------------------------------------------

def _inverted_residual_kernel(*refs, TD, H, W, hidden, oup, use_res, has_expand):
    HW = H * W
    if has_expand:
        (xm_ref, xp_ref, xn_ref, m9_ref, w_exp_ref, b1_ref,
         w_dw_ref, b2_ref, w_proj_ref, b3_ref, o_ref, hid_ref) = refs
    else:
        (xm_ref, xp_ref, xn_ref, m9_ref,
         w_dw_ref, b2_ref, w_proj_ref, b3_ref, o_ref, hid_ref) = refs
        w_exp_ref = b1_ref = None

    t = pl.program_id(1)
    n_t = pl.num_programs(1)

    def expand(x_cs):                            # (C, S) -> (hidden, S)
        x_cs = x_cs.astype(jnp.float32)
        if not has_expand:
            return x_cs                          # hidden == C: identity
        h = jnp.dot(w_exp_ref[...], x_cs, preferred_element_type=jnp.float32)
        return jnp.clip(h + b1_ref[...], 0.0, 6.0)

    # ---- Stage 1: 1x1x1 expand + BN + ReLU6 for the TD main depth slices
    #      (one lane-dense MXU matmul, N = TD*HW columns).
    hid_main = expand(xm_ref[0])                 # (hidden, TD*HW)
    for j in range(TD):
        hid_ref[1 + j] = hid_main[:, j * HW:(j + 1) * HW]

    # Depth-halo planes.  The depthwise conv zero-pads the *hidden* activation
    # along depth, so the halo is zero at the volume boundary and expand(x) of
    # the neighbouring depth slice otherwise.
    @pl.when(t > 0)
    def _():
        hid_ref[0] = expand(xp_ref[0, :, (TD - 1) * HW:TD * HW])

    @pl.when(t == 0)
    def _():
        hid_ref[0] = jnp.zeros((hidden, HW), jnp.float32)

    @pl.when(t < n_t - 1)
    def _():
        hid_ref[TD + 1] = expand(xn_ref[0, :, 0:HW])

    @pl.when(t == n_t - 1)
    def _():
        hid_ref[TD + 1] = jnp.zeros((hidden, HW), jnp.float32)

    # ---- Stage 2+3: depthwise 3x3x3 (+BN+ReLU6) and 1x1x1 projection
    #      (+BN, +residual) per output depth slice.
    for j in range(TD):
        p0 = hid_ref[j]          # depth d-1
        p1 = hid_ref[j + 1]      # depth d
        p2 = hid_ref[j + 2]      # depth d+1
        acc = jnp.zeros((hidden, HW), jnp.float32)
        for kh in range(3):
            for kw in range(3):
                k = kh * 3 + kw
                # Sum the 3 depth taps first (same spatial shift for all of
                # them), then one circular roll + one border mask.
                s = (w_dw_ref[k] * p0 + w_dw_ref[9 + k] * p1 +
                     w_dw_ref[18 + k] * p2)
                delta = (kh - 1) * W + (kw - 1)
                if delta != 0:
                    s = jnp.roll(s, -delta, axis=1)
                acc = acc + m9_ref[k] * s
        y = jnp.clip(acc + b2_ref[...], 0.0, 6.0)
        out = jnp.dot(w_proj_ref[...], y, preferred_element_type=jnp.float32)
        out = out + b3_ref[...]
        if use_res:
            out = out + xm_ref[0, :, j * HW:(j + 1) * HW].astype(jnp.float32)
        o_ref[0, :, j * HW:(j + 1) * HW] = out.astype(o_ref.dtype)


# ---------------- module wrapper ---------------------------------------------

def inverted_residual(x, params, *, inp, oup, stride, expand_ratio):
    """Fused InvertedResidual forward.  x is NCDHW (native torch layout)."""
    # TODO(synk): strided depthwise (stride != (1,1,1)) not implemented.
    assert stride == (1, 1, 1)
    N, C, D, H, W = x.shape
    assert C == inp
    hidden = int(round(inp * expand_ratio))
    has_expand = expand_ratio != 1
    use_res = stride == (1, 1, 1) and inp == oup
    HW = H * W

    TD = _choose_depth_tile(D, HW, hidden)
    n_t = D // TD

    # Fold the BN scale into the conv weights; orient everything channels-first
    # so kernels are (out_ch, in_ch) @ (in_ch, spatial) with spatial on lanes.
    f32 = jnp.float32
    if has_expand:
        w_exp = (params["w_expand"] * params["s1"][None, :]).T.astype(f32)  # (hidden, C)
        b1 = params["b1"].reshape(hidden, 1).astype(f32)
    w_dw = (params["w_dw"].reshape(27, hidden) * params["s2"][None, :])
    w_dw = w_dw.reshape(27, hidden, 1).astype(f32)
    b2 = params["b2"].reshape(hidden, 1).astype(f32)
    w_proj = (params["w_proj"] * params["s3"][None, :]).T.astype(f32)       # (oup, hidden)
    b3 = params["b3"].reshape(oup, 1).astype(f32)

    # 0/1 validity masks for the 9 in-plane depthwise taps: the conv's H/W
    # zero-padding is realised by masking the circularly-rolled tap.
    hh = jnp.arange(H)[:, None]
    ww = jnp.arange(W)[None, :]
    m9 = jnp.stack([
        (((hh + kh - 1) >= 0) & ((hh + kh - 1) < H) &
         ((ww + kw - 1) >= 0) & ((ww + kw - 1) < W)).astype(f32).reshape(1, HW)
        for kh in range(3) for kw in range(3)])                             # (9, 1, HW)

    # Free reshape: NCDHW is already channels-first; flatten (D, H, W).
    x_flat = x.reshape(N, C, D * HW)

    blk_x = (1, C, TD * HW)
    xm_spec = pl.BlockSpec(blk_x, lambda b, t: (b, 0, t))
    # Depth-halo planes come from the last / first slice of the neighbouring
    # depth block (clamped at the boundaries; the kernel zeroes them there).
    xp_spec = pl.BlockSpec(blk_x, lambda b, t: (b, 0, jnp.maximum(t - 1, 0)))
    xn_spec = pl.BlockSpec(blk_x, lambda b, t: (b, 0, jnp.minimum(t + 1, n_t - 1)))

    def _const_spec(a):
        nd = a.ndim
        return pl.BlockSpec(a.shape, lambda b, t: (0,) * nd)

    args = [x_flat, x_flat, x_flat, m9]
    in_specs = [xm_spec, xp_spec, xn_spec, _const_spec(m9)]
    if has_expand:
        args += [w_exp, b1]
        in_specs += [_const_spec(w_exp), _const_spec(b1)]
    args += [w_dw, b2, w_proj, b3]
    in_specs += [_const_spec(w_dw), _const_spec(b2),
                 _const_spec(w_proj), _const_spec(b3)]

    out_spec = pl.BlockSpec((1, oup, TD * HW), lambda b, t: (b, 0, t))

    kernel = functools.partial(
        _inverted_residual_kernel, TD=TD, H=H, W=W, hidden=hidden, oup=oup,
        use_res=use_res, has_expand=has_expand)

    flops_per_vox = 2 * hidden * ((C if has_expand else 0) + 27 + oup)
    cost = pl.CostEstimate(
        flops=int(N * D * HW * flops_per_vox),
        transcendentals=0,
        bytes_accessed=int(4 * (3 * x_flat.size + N * oup * D * HW)))

    out = pl.pallas_call(
        kernel,
        out_shape=jax.ShapeDtypeStruct((N, oup, D * HW), x.dtype),
        grid=(N, n_t),
        in_specs=in_specs,
        out_specs=out_spec,
        scratch_shapes=[pltpu.VMEM((TD + 2, hidden, HW), jnp.float32)],
        compiler_params=pltpu.CompilerParams(
            dimension_semantics=("parallel", "parallel"),
            vmem_limit_bytes=32 * 1024 * 1024),
        cost_estimate=cost,
    )(*args)

    return out.reshape(N, oup, D, H, W)      # free reshape, already NCDHW


# ---------------- deterministic params + pure-JAX reference -------------------

def fold_bn(gamma, beta, mean, var, eps=1e-5):
    scale = gamma / jnp.sqrt(var + eps)
    return scale, beta - mean * scale


def init_params(key, inp, oup, expand_ratio):
    hidden = int(round(inp * expand_ratio))
    ks = jax.random.split(key, 15)
    p = {}

    def bn_params(c, k0, k1, k2, k3):
        gamma = jax.random.uniform(k0, (c,), jnp.float32, 0.5, 1.5)
        beta = 0.1 * jax.random.normal(k1, (c,), jnp.float32)
        mean = 0.1 * jax.random.normal(k2, (c,), jnp.float32)
        var = jax.random.uniform(k3, (c,), jnp.float32, 0.5, 1.5)
        return fold_bn(gamma, beta, mean, var)

    if expand_ratio != 1:
        p["w_expand"] = 0.1 * jax.random.normal(ks[0], (inp, hidden), jnp.float32)
        p["s1"], p["b1"] = bn_params(hidden, ks[1], ks[2], ks[3], ks[4])
    p["w_dw"] = 0.1 * jax.random.normal(ks[5], (3, 3, 3, hidden), jnp.float32)
    p["s2"], p["b2"] = bn_params(hidden, ks[6], ks[7], ks[8], ks[9])
    p["w_proj"] = 0.1 * jax.random.normal(ks[10], (hidden, oup), jnp.float32)
    p["s3"], p["b3"] = bn_params(oup, ks[11], ks[12], ks[13], ks[14])
    return p


def inverted_residual_ref(x_ncdhw, params, *, inp, oup, stride, expand_ratio):
    hidden = int(round(inp * expand_ratio))
    use_res = stride == (1, 1, 1) and inp == oup
    xt = jnp.transpose(x_ncdhw, (0, 2, 3, 4, 1)).astype(jnp.float32)
    h = xt
    if expand_ratio != 1:
        h = jnp.einsum("ndhwc,ce->ndhwe", h, params["w_expand"])
        h = jnp.clip(h * params["s1"] + params["b1"], 0.0, 6.0)
    wd = params["w_dw"].reshape(3, 3, 3, 1, hidden)
    h = lax.conv_general_dilated(
        h, wd, window_strides=stride, padding=((1, 1), (1, 1), (1, 1)),
        dimension_numbers=("NDHWC", "DHWIO", "NDHWC"),
        feature_group_count=hidden)
    h = jnp.clip(h * params["s2"] + params["b2"], 0.0, 6.0)
    h = jnp.einsum("ndhwe,eo->ndhwo", h, params["w_proj"])
    h = h * params["s3"] + params["b3"]
    if use_res:
        h = h + xt
    return jnp.transpose(h, (0, 4, 1, 2, 3))


if __name__ == "__main__":
    N, C, D, H, W = 2, 8, 8, 8, 8
    inp, oup = C, C
    stride = (1, 1, 1)
    expand_ratio = 2     # hidden = 16, use_res = True, TD = 4 -> grid (2, 2)

    key = jax.random.PRNGKey(0)
    kx, kp = jax.random.split(key)
    x = jax.random.normal(kx, (N, C, D, H, W), jnp.float32)
    params = init_params(kp, inp, oup, expand_ratio)

    fwd = jax.jit(functools.partial(inverted_residual, inp=inp, oup=oup,
                                    stride=stride, expand_ratio=expand_ratio))
    out = jax.block_until_ready(fwd(x, params))

    ref = inverted_residual_ref(x, params, inp=inp, oup=oup, stride=stride,
                                expand_ratio=expand_ratio)
    assert out.shape == (N, oup, D, H, W)
    err = float(jnp.max(jnp.abs(out - ref)))
    if not jnp.allclose(out, ref, atol=1e-4, rtol=1e-4):
        raise AssertionError(f"mismatch vs reference, max abs err = {err:e}")
    print("KERNEL_OK")
</pallas_src>

<mosaic_0001>
module attributes {stable_mosaic.version = 11 : i64} {
  func.func @_inverted_residual_kernel(%arg0: i32, %arg1: i32, %arg2: memref<1x8x256xf32, #tpu.memory_space<vmem>>, %arg3: memref<1x8x256xf32, #tpu.memory_space<vmem>>, %arg4: memref<1x8x256xf32, #tpu.memory_space<vmem>>, %arg5: memref<9x1x64xf32, #tpu.memory_space<vmem>>, %arg6: memref<16x8xf32, #tpu.memory_space<vmem>>, %arg7: memref<16x1xf32, #tpu.memory_space<vmem>>, %arg8: memref<27x16x1xf32, #tpu.memory_space<vmem>>, %arg9: memref<16x1xf32, #tpu.memory_space<vmem>>, %arg10: memref<8x16xf32, #tpu.memory_space<vmem>>, %arg11: memref<8x1xf32, #tpu.memory_space<vmem>>, %arg12: memref<1x8x256xf32, #tpu.memory_space<vmem>>, %arg13: memref<6x16x64xf32, #tpu.memory_space<vmem>>) attributes {dimension_semantics = [#tpu.dimension_semantics<parallel>, #tpu.dimension_semantics<parallel>], iteration_bounds = array<i64: 2, 2>, scalar_prefetch = 0 : i64, scratch_operands = 1 : i64, tpu.core_type = #tpu.core_type<tc>, window_params = [{transform_indices = @transform_0, window_bounds = array<i64: 1, 8, 256>}, {transform_indices = @transform_1, window_bounds = array<i64: 1, 8, 256>}, {transform_indices = @transform_2, window_bounds = array<i64: 1, 8, 256>}, {pipeline_mode = #tpu.pipeline_mode<synchronous>, transform_indices = @transform_3, window_bounds = array<i64: 9, 1, 64>}, {pipeline_mode = #tpu.pipeline_mode<synchronous>, transform_indices = @transform_4, window_bounds = array<i64: 16, 8>}, {pipeline_mode = #tpu.pipeline_mode<synchronous>, transform_indices = @transform_5, window_bounds = array<i64: 16, 1>}, {pipeline_mode = #tpu.pipeline_mode<synchronous>, transform_indices = @transform_6, window_bounds = array<i64: 27, 16, 1>}, {pipeline_mode = #tpu.pipeline_mode<synchronous>, transform_indices = @transform_7, window_bounds = array<i64: 16, 1>}, {pipeline_mode = #tpu.pipeline_mode<synchronous>, transform_indices = @transform_8, window_bounds = array<i64: 8, 16>}, {pipeline_mode = #tpu.pipeline_mode<synchronous>, transform_indices = @transform_9, window_bounds = array<i64: 8, 1>}, {transform_indices = @transform_10, window_bounds = array<i64: 1, 8, 256>}]} {
    %c0 = arith.constant 0 : index
    %c0_0 = arith.constant 0 : index
    %c0_1 = arith.constant 0 : index
    %0 = vector.load %arg2[%c0, %c0_0, %c0_1] : memref<1x8x256xf32, #tpu.memory_space<vmem>>, vector<1x8x256xf32>
    %1 = vector.shape_cast %0 : vector<1x8x256xf32> to vector<8x256xf32>
    %c0_2 = arith.constant 0 : index
    %c0_3 = arith.constant 0 : index
    %2 = vector.load %arg6[%c0_2, %c0_3] : memref<16x8xf32, #tpu.memory_space<vmem>>, vector<16x8xf32>
    %cst = arith.constant dense<0.000000e+00> : vector<16x256xf32>
    %3 = tpu.matmul %2, %1, %cst {dimension_numbers = #tpu.dot_dimension_numbers<[1], [0], [0], [1], [0, 0, 1, 1], [], []>} : vector<16x8xf32>, vector<8x256xf32>, vector<16x256xf32> -> vector<16x256xf32>
    %c0_4 = arith.constant 0 : index
    %c0_5 = arith.constant 0 : index
    %4 = vector.load %arg7[%c0_4, %c0_5] : memref<16x1xf32, #tpu.memory_space<vmem>>, vector<16x1xf32>
    %5 = vector.broadcast %4 : vector<16x1xf32> to vector<16x256xf32>
    %6 = arith.addf %3, %5 : vector<16x256xf32>
    %cst_6 = arith.constant 0.000000e+00 : f32
    %cst_7 = arith.constant 6.000000e+00 : f32
    %7 = vector.broadcast %cst_6 : f32 to vector<16x256xf32>
    %8 = arith.maximumf %7, %6 : vector<16x256xf32>
    %9 = vector.broadcast %cst_7 : f32 to vector<16x256xf32>
    %10 = arith.minimumf %9, %8 : vector<16x256xf32>
    %11 = vector.extract_strided_slice %10 {offsets = [0, 0], sizes = [16, 64], strides = [1, 1]} : vector<16x256xf32> to vector<16x64xf32>
    %c1 = arith.constant 1 : index
    %c0_8 = arith.constant 0 : index
    %c0_9 = arith.constant 0 : index
    %12 = vector.load %arg13[%c1, %c0_8, %c0_9] : memref<6x16x64xf32, #tpu.memory_space<vmem>>, vector<1x16x64xf32>
    %13 = vector.shape_cast %12 : vector<1x16x64xf32> to vector<16x64xf32>
    %14 = vector.shape_cast %11 : vector<16x64xf32> to vector<1x16x64xf32>
    tpu.vector_store %arg13[%c1, %c0_8, %c0_9], %14 {strides = array<i32>} : memref<6x16x64xf32, #tpu.memory_space<vmem>>, vector<1x16x64xf32>,
    %15 = vector.extract_strided_slice %10 {offsets = [0, 64], sizes = [16, 64], strides = [1, 1]} : vector<16x256xf32> to vector<16x64xf32>
    %c2 = arith.constant 2 : index
    %c0_10 = arith.constant 0 : index
    %c0_11 = arith.constant 0 : index
    %16 = vector.load %arg13[%c2, %c0_10, %c0_11] : memref<6x16x64xf32, #tpu.memory_space<vmem>>, vector<1x16x64xf32>
    %17 = vector.shape_cast %16 : vector<1x16x64xf32> to vector<16x64xf32>
    %18 = vector.shape_cast %15 : vector<16x64xf32> to vector<1x16x64xf32>
    tpu.vector_store %arg13[%c2, %c0_10, %c0_11], %18 {strides = array<i32>} : memref<6x16x64xf32, #tpu.memory_space<vmem>>, vector<1x16x64xf32>,
    %19 = vector.extract_strided_slice %10 {offsets = [0, 128], sizes = [16, 64], strides = [1, 1]} : vector<16x256xf32> to vector<16x64xf32>
    %c3 = arith.constant 3 : index
    %c0_12 = arith.constant 0 : index
    %c0_13 = arith.constant 0 : index
    %20 = vector.load %arg13[%c3, %c0_12, %c0_13] : memref<6x16x64xf32, #tpu.memory_space<vmem>>, vector<1x16x64xf32>
    %21 = vector.shape_cast %20 : vector<1x16x64xf32> to vector<16x64xf32>
    %22 = vector.shape_cast %19 : vector<16x64xf32> to vector<1x16x64xf32>
    tpu.vector_store %arg13[%c3, %c0_12, %c0_13], %22 {strides = array<i32>} : memref<6x16x64xf32, #tpu.memory_space<vmem>>, vector<1x16x64xf32>,
    %23 = vector.extract_strided_slice %10 {offsets = [0, 192], sizes = [16, 64], strides = [1, 1]} : vector<16x256xf32> to vector<16x64xf32>
    %c4 = arith.constant 4 : index
    %c0_14 = arith.constant 0 : index
    %c0_15 = arith.constant 0 : index
    %24 = vector.load %arg13[%c4, %c0_14, %c0_15] : memref<6x16x64xf32, #tpu.memory_space<vmem>>, vector<1x16x64xf32>
    %25 = vector.shape_cast %24 : vector<1x16x64xf32> to vector<16x64xf32>
    %26 = vector.shape_cast %23 : vector<16x64xf32> to vector<1x16x64xf32>
    tpu.vector_store %arg13[%c4, %c0_14, %c0_15], %26 {strides = array<i32>} : memref<6x16x64xf32, #tpu.memory_space<vmem>>, vector<1x16x64xf32>,
    %c0_i32 = arith.constant 0 : i32
    %27 = arith.cmpi sgt, %arg1, %c0_i32 : i32
    %28 = arith.extui %27 : i1 to i32
    %c0_i32_16 = arith.constant 0 : i32
    %29 = arith.cmpi ne, %28, %c0_i32_16 : i32
    scf.if %29 {
      %c0_529 = arith.constant 0 : index
      %c0_530 = arith.constant 0 : index
      %c192_531 = arith.constant 192 : index
      %919 = vector.load %arg3[%c0_529, %c0_530, %c192_531] : memref<1x8x256xf32, #tpu.memory_space<vmem>>, vector<1x8x64xf32>
      %920 = vector.shape_cast %919 : vector<1x8x64xf32> to vector<8x64xf32>
      %c0_532 = arith.constant 0 : index
      %c0_533 = arith.constant 0 : index
      %921 = vector.load %arg6[%c0_532, %c0_533] : memref<16x8xf32, #tpu.memory_space<vmem>>, vector<16x8xf32>
      %cst_534 = arith.constant dense<0.000000e+00> : vector<16x64xf32>
      %922 = tpu.matmul %921, %920, %cst_534 {dimension_numbers = #tpu.dot_dimension_numbers<[1], [0], [0], [1], [0, 0, 1, 1], [], []>} : vector<16x8xf32>, vector<8x64xf32>, vector<16x64xf32> -> vector<16x64xf32>
      %c0_535 = arith.constant 0 : index
      %c0_536 = arith.constant 0 : index
      %923 = vector.load %arg7[%c0_535, %c0_536] : memref<16x1xf32, #tpu.memory_space<vmem>>, vector<16x1xf32>
      %924 = vector.broadcast %923 : vector<16x1xf32> to vector<16x64xf32>
      %925 = arith.addf %922, %924 : vector<16x64xf32>
      %cst_537 = arith.constant 0.000000e+00 : f32
      %cst_538 = arith.constant 6.000000e+00 : f32
      %926 = vector.broadcast %cst_537 : f32 to vector<16x64xf32>
      %927 = arith.maximumf %926, %925 : vector<16x64xf32>
      %928 = vector.broadcast %cst_538 : f32 to vector<16x64xf32>
      %929 = arith.minimumf %928, %927 : vector<16x64xf32>
      %c0_539 = arith.constant 0 : index
      %c0_540 = arith.constant 0 : index
      %c0_541 = arith.constant 0 : index
      %930 = vector.load %arg13[%c0_539, %c0_540, %c0_541] : memref<6x16x64xf32, #tpu.memory_space<vmem>>, vector<1x16x64xf32>
      %931 = vector.shape_cast %930 : vector<1x16x64xf32> to vector<16x64xf32>
      %932 = vector.shape_cast %929 : vector<16x64xf32> to vector<1x16x64xf32>
      tpu.vector_store %arg13[%c0_539, %c0_540, %c0_541], %932 {strides = array<i32>} : memref<6x16x64xf32, #tpu.memory_space<vmem>>, vector<1x16x64xf32>,
    } else {
    }
    %c0_i32_17 = arith.constant 0 : i32
    %30 = arith.cmpi eq, %arg1, %c0_i32_17 : i32
    %31 = arith.extui %30 : i1 to i32
    %c0_i32_18 = arith.constant 0 : i32
    %32 = arith.cmpi ne, %31, %c0_i32_18 : i32
    scf.if %32 {
      %cst_529 = arith.constant 0.000000e+00 : f32
      %919 = vector.broadcast %cst_529 : f32 to vector<16x64xf32>
      %c0_530 = arith.constant 0 : index
      %c0_531 = arith.constant 0 : index
      %c0_532 = arith.constant 0 : index
      %920 = vector.load %arg13[%c0_530, %c0_531, %c0_532] : memref<6x16x64xf32, #tpu.memory_space<vmem>>, vector<1x16x64xf32>
      %921 = vector.shape_cast %920 : vector<1x16x64xf32> to vector<16x64xf32>
      %922 = vector.shape_cast %919 : vector<16x64xf32> to vector<1x16x64xf32>
      tpu.vector_store %arg13[%c0_530, %c0_531, %c0_532], %922 {strides = array<i32>} : memref<6x16x64xf32, #tpu.memory_space<vmem>>, vector<1x16x64xf32>,
    } else {
    }
    %c1_i32 = arith.constant 1 : i32
    %33 = arith.cmpi slt, %arg1, %c1_i32 : i32
    %34 = arith.extui %33 : i1 to i32
    %c0_i32_19 = arith.constant 0 : i32
    %35 = arith.cmpi ne, %34, %c0_i32_19 : i32
    scf.if %35 {
      %c0_529 = arith.constant 0 : index
      %c0_530 = arith.constant 0 : index
      %c0_531 = arith.constant 0 : index
      %919 = vector.load %arg4[%c0_529, %c0_530, %c0_531] : memref<1x8x256xf32, #tpu.memory_space<vmem>>, vector<1x8x64xf32>
      %920 = vector.shape_cast %919 : vector<1x8x64xf32> to vector<8x64xf32>
      %c0_532 = arith.constant 0 : index
      %c0_533 = arith.constant 0 : index
      %921 = vector.load %arg6[%c0_532, %c0_533] : memref<16x8xf32, #tpu.memory_space<vmem>>, vector<16x8xf32>
      %cst_534 = arith.constant dense<0.000000e+00> : vector<16x64xf32>
      %922 = tpu.matmul %921, %920, %cst_534 {dimension_numbers = #tpu.dot_dimension_numbers<[1], [0], [0], [1], [0, 0, 1, 1], [], []>} : vector<16x8xf32>, vector<8x64xf32>, vector<16x64xf32> -> vector<16x64xf32>
      %c0_535 = arith.constant 0 : index
      %c0_536 = arith.constant 0 : index
      %923 = vector.load %arg7[%c0_535, %c0_536] : memref<16x1xf32, #tpu.memory_space<vmem>>, vector<16x1xf32>
      %924 = vector.broadcast %923 : vector<16x1xf32> to vector<16x64xf32>
      %925 = arith.addf %922, %924 : vector<16x64xf32>
      %cst_537 = arith.constant 0.000000e+00 : f32
      %cst_538 = arith.constant 6.000000e+00 : f32
      %926 = vector.broadcast %cst_537 : f32 to vector<16x64xf32>
      %927 = arith.maximumf %926, %925 : vector<16x64xf32>
      %928 = vector.broadcast %cst_538 : f32 to vector<16x64xf32>
      %929 = arith.minimumf %928, %927 : vector<16x64xf32>
      %c5_539 = arith.constant 5 : index
      %c0_540 = arith.constant 0 : index
      %c0_541 = arith.constant 0 : index
      %930 = vector.load %arg13[%c5_539, %c0_540, %c0_541] : memref<6x16x64xf32, #tpu.memory_space<vmem>>, vector<1x16x64xf32>
      %931 = vector.shape_cast %930 : vector<1x16x64xf32> to vector<16x64xf32>
      %932 = vector.shape_cast %929 : vector<16x64xf32> to vector<1x16x64xf32>
      tpu.vector_store %arg13[%c5_539, %c0_540, %c0_541], %932 {strides = array<i32>} : memref<6x16x64xf32, #tpu.memory_space<vmem>>, vector<1x16x64xf32>,
    } else {
    }
    %c1_i32_20 = arith.constant 1 : i32
    %36 = arith.cmpi eq, %arg1, %c1_i32_20 : i32
    %37 = arith.extui %36 : i1 to i32
    %c0_i32_21 = arith.constant 0 : i32
    %38 = arith.cmpi ne, %37, %c0_i32_21 : i32
    scf.if %38 {
      %cst_529 = arith.constant 0.000000e+00 : f32
      %919 = vector.broadcast %cst_529 : f32 to vector<16x64xf32>
      %c5_530 = arith.constant 5 : index
      %c0_531 = arith.constant 0 : index
      %c0_532 = arith.constant 0 : index
      %920 = vector.load %arg13[%c5_530, %c0_531, %c0_532] : memref<6x16x64xf32, #tpu.memory_space<vmem>>, vector<1x16x64xf32>
      %921 = vector.shape_cast %920 : vector<1x16x64xf32> to vector<16x64xf32>
      %922 = vector.shape_cast %919 : vector<16x64xf32> to vector<1x16x64xf32>
      tpu.vector_store %arg13[%c5_530, %c0_531, %c0_532], %922 {strides = array<i32>} : memref<6x16x64xf32, #tpu.memory_space<vmem>>, vector<1x16x64xf32>,
    } else {
    }
    %c0_22 = arith.constant 0 : index
    %c0_23 = arith.constant 0 : index
    %c0_24 = arith.constant 0 : index
    %39 = vector.load %arg13[%c0_22, %c0_23, %c0_24] : memref<6x16x64xf32, #tpu.memory_space<vmem>>, vector<1x16x64xf32>
    %40 = vector.shape_cast %39 : vector<1x16x64xf32> to vector<16x64xf32>
    %c1_25 = arith.constant 1 : index
    %c0_26 = arith.constant 0 : index
    %c0_27 = arith.constant 0 : index
    %41 = vector.load %arg13[%c1_25, %c0_26, %c0_27] : memref<6x16x64xf32, #tpu.memory_space<vmem>>, vector<1x16x64xf32>
    %42 = vector.shape_cast %41 : vector<1x16x64xf32> to vector<16x64xf32>
    %c2_28 = arith.constant 2 : index
    %c0_29 = arith.constant 0 : index
    %c0_30 = arith.constant 0 : index
    %43 = vector.load %arg13[%c2_28, %c0_29, %c0_30] : memref<6x16x64xf32, #tpu.memory_space<vmem>>, vector<1x16x64xf32>
    %44 = vector.shape_cast %43 : vector<1x16x64xf32> to vector<16x64xf32>
    %cst_31 = arith.constant 0.000000e+00 : f32
    %45 = vector.broadcast %cst_31 : f32 to vector<16x64xf32>
    %c0_32 = arith.constant 0 : index
    %c0_33 = arith.constant 0 : index
    %c0_34 = arith.constant 0 : index
    %46 = vector.load %arg8[%c0_32, %c0_33, %c0_34] : memref<27x16x1xf32, #tpu.memory_space<vmem>>, vector<1x16x1xf32>
    %47 = vector.shape_cast %46 : vector<1x16x1xf32> to vector<16x1xf32>
    %48 = vector.broadcast %47 : vector<16x1xf32> to vector<16x64xf32>
    %49 = arith.mulf %48, %40 : vector<16x64xf32>
    %c9 = arith.constant 9 : index
    %c0_35 = arith.constant 0 : index
    %c0_36 = arith.constant 0 : index
    %50 = vector.load %arg8[%c9, %c0_35, %c0_36] : memref<27x16x1xf32, #tpu.memory_space<vmem>>, vector<1x16x1xf32>
    %51 = vector.shape_cast %50 : vector<1x16x1xf32> to vector<16x1xf32>
    %52 = vector.broadcast %51 : vector<16x1xf32> to vector<16x64xf32>
    %53 = arith.mulf %52, %42 : vector<16x64xf32>
    %54 = arith.addf %49, %53 : vector<16x64xf32>
    %c18 = arith.constant 18 : index
    %c0_37 = arith.constant 0 : index
    %c0_38 = arith.constant 0 : index
    %55 = vector.load %arg8[%c18, %c0_37, %c0_38] : memref<27x16x1xf32, #tpu.memory_space<vmem>>, vector<1x16x1xf32>
    %56 = vector.shape_cast %55 : vector<1x16x1xf32> to vector<16x1xf32>
    %57 = vector.broadcast %56 : vector<16x1xf32> to vector<16x64xf32>
    %58 = arith.mulf %57, %44 : vector<16x64xf32>
    %59 = arith.addf %54, %58 : vector<16x64xf32>
    %60 = vector.extract_strided_slice %59 {offsets = [0, 55], sizes = [16, 9], strides = [1, 1]} : vector<16x64xf32> to vector<16x9xf32>
    %61 = vector.extract_strided_slice %59 {offsets = [0, 0], sizes = [16, 55], strides = [1, 1]} : vector<16x64xf32> to vector<16x55xf32>
    %62 = tpu.concatenate %60, %61 in 1 : vector<16x9xf32>, vector<16x55xf32> -> vector<16x64xf32>
    %c0_39 = arith.constant 0 : index
    %c0_40 = arith.constant 0 : index
    %c0_41 = arith.constant 0 : index
    %63 = vector.load %arg5[%c0_39, %c0_40, %c0_41] : memref<9x1x64xf32, #tpu.memory_space<vmem>>, vector<1x1x64xf32>
    %64 = vector.shape_cast %63 : vector<1x1x64xf32> to vector<1x64xf32>
    %65 = vector.broadcast %64 : vector<1x64xf32> to vector<16x64xf32>
    %66 = arith.mulf %65, %62 : vector<16x64xf32>
    %67 = arith.addf %45, %66 : vector<16x64xf32>
    %c1_42 = arith.constant 1 : index
    %c0_43 = arith.constant 0 : index
    %c0_44 = arith.constant 0 : index
    %68 = vector.load %arg8[%c1_42, %c0_43, %c0_44] : memref<27x16x1xf32, #tpu.memory_space<vmem>>, vector<1x16x1xf32>
    %69 = vector.shape_cast %68 : vector<1x16x1xf32> to vector<16x1xf32>
    %70 = vector.broadcast %69 : vector<16x1xf32> to vector<16x64xf32>
    %71 = arith.mulf %70, %40 : vector<16x64xf32>
    %c10 = arith.constant 10 : index
    %c0_45 = arith.constant 0 : index
    %c0_46 = arith.constant 0 : index
    %72 = vector.load %arg8[%c10, %c0_45, %c0_46] : memref<27x16x1xf32, #tpu.memory_space<vmem>>, vector<1x16x1xf32>
    %73 = vector.shape_cast %72 : vector<1x16x1xf32> to vector<16x1xf32>
    %74 = vector.broadcast %73 : vector<16x1xf32> to vector<16x64xf32>
    %75 = arith.mulf %74, %42 : vector<16x64xf32>
    %76 = arith.addf %71, %75 : vector<16x64xf32>
    %c19 = arith.constant 19 : index
    %c0_47 = arith.constant 0 : index
    %c0_48 = arith.constant 0 : index
    %77 = vector.load %arg8[%c19, %c0_47, %c0_48] : memref<27x16x1xf32, #tpu.memory_space<vmem>>, vector<1x16x1xf32>
    %78 = vector.shape_cast %77 : vector<1x16x1xf32> to vector<16x1xf32>
    %79 = vector.broadcast %78 : vector<16x1xf32> to vector<16x64xf32>
    %80 = arith.mulf %79, %44 : vector<16x64xf32>
    %81 = arith.addf %76, %80 : vector<16x64xf32>
    %82 = vector.extract_strided_slice %81 {offsets = [0, 56], sizes = [16, 8], strides = [1, 1]} : vector<16x64xf32> to vector<16x8xf32>
    %83 = vector.extract_strided_slice %81 {offsets = [0, 0], sizes = [16, 56], strides = [1, 1]} : vector<16x64xf32> to vector<16x56xf32>
    %84 = tpu.concatenate %82, %83 in 1 : vector<16x8xf32>, vector<16x56xf32> -> vector<16x64xf32>
    %c1_49 = arith.constant 1 : index
    %c0_50 = arith.constant 0 : index
    %c0_51 = arith.constant 0 : index
    %85 = vector.load %arg5[%c1_49, %c0_50, %c0_51] : memref<9x1x64xf32, #tpu.memory_space<vmem>>, vector<1x1x64xf32>
    %86 = vector.shape_cast %85 : vector<1x1x64xf32> to vector<1x64xf32>
    %87 = vector.broadcast %86 : vector<1x64xf32> to vector<16x64xf32>
    %88 = arith.mulf %87, %84 : vector<16x64xf32>
    %89 = arith.addf %67, %88 : vector<16x64xf32>
    %c2_52 = arith.constant 2 : index
    %c0_53 = arith.constant 0 : index
    %c0_54 = arith.constant 0 : index
    %90 = vector.load %arg8[%c2_52, %c0_53, %c0_54] : memref<27x16x1xf32, #tpu.memory_space<vmem>>, vector<1x16x1xf32>
    %91 = vector.shape_cast %90 : vector<1x16x1xf32> to vector<16x1xf32>
    %92 = vector.broadcast %91 : vector<16x1xf32> to vector<16x64xf32>
    %93 = arith.mulf %92, %40 : vector<16x64xf32>
    %c11 = arith.constant 11 : index
    %c0_55 = arith.constant 0 : index
    %c0_56 = arith.constant 0 : index
    %94 = vector.load %arg8[%c11, %c0_55, %c0_56] : memref<27x16x1xf32, #tpu.memory_space<vmem>>, vector<1x16x1xf32>
    %95 = vector.shape_cast %94 : vector<1x16x1xf32> to vector<16x1xf32>
    %96 = vector.broadcast %95 : vector<16x1xf32> to vector<16x64xf32>
    %97 = arith.mulf %96, %42 : vector<16x64xf32>
    %98 = arith.addf %93, %97 : vector<16x64xf32>
    %c20 = arith.constant 20 : index
    %c0_57 = arith.constant 0 : index
    %c0_58 = arith.constant 0 : index
    %99 = vector.load %arg8[%c20, %c0_57, %c0_58] : memref<27x16x1xf32, #tpu.memory_space<vmem>>, vector<1x16x1xf32>
    %100 = vector.shape_cast %99 : vector<1x16x1xf32> to vector<16x1xf32>
    %101 = vector.broadcast %100 : vector<16x1xf32> to vector<16x64xf32>
    %102 = arith.mulf %101, %44 : vector<16x64xf32>
    %103 = arith.addf %98, %102 : vector<16x64xf32>
    %104 = vector.extract_strided_slice %103 {offsets = [0, 57], sizes = [16, 7], strides = [1, 1]} : vector<16x64xf32> to vector<16x7xf32>
    %105 = vector.extract_strided_slice %103 {offsets = [0, 0], sizes = [16, 57], strides = [1, 1]} : vector<16x64xf32> to vector<16x57xf32>
    %106 = tpu.concatenate %104, %105 in 1 : vector<16x7xf32>, vector<16x57xf32> -> vector<16x64xf32>
    %c2_59 = arith.constant 2 : index
    %c0_60 = arith.constant 0 : index
    %c0_61 = arith.constant 0 : index
    %107 = vector.load %arg5[%c2_59, %c0_60, %c0_61] : memref<9x1x64xf32, #tpu.memory_space<vmem>>, vector<1x1x64xf32>
    %108 = vector.shape_cast %107 : vector<1x1x64xf32> to vector<1x64xf32>
    %109 = vector.broadcast %108 : vector<1x64xf32> to vector<16x64xf32>
    %110 = arith.mulf %109, %106 : vector<16x64xf32>
    %111 = arith.addf %89, %110 : vector<16x64xf32>
    %c3_62 = arith.constant 3 : index
    %c0_63 = arith.constant 0 : index
    %c0_64 = arith.constant 0 : index
    %112 = vector.load %arg8[%c3_62, %c0_63, %c0_64] : memref<27x16x1xf32, #tpu.memory_space<vmem>>, vector<1x16x1xf32>
    %113 = vector.shape_cast %112 : vector<1x16x1xf32> to vector<16x1xf32>
    %114 = vector.broadcast %113 : vector<16x1xf32> to vector<16x64xf32>
    %115 = arith.mulf %114, %40 : vector<16x64xf32>
    %c12 = arith.constant 12 : index
    %c0_65 = arith.constant 0 : index
    %c0_66 = arith.constant 0 : index
    %116 = vector.load %arg8[%c12, %c0_65, %c0_66] : memref<27x16x1xf32, #tpu.memory_space<vmem>>, vector<1x16x1xf32>
    %117 = vector.shape_cast %116 : vector<1x16x1xf32> to vector<16x1xf32>
    %118 = vector.broadcast %117 : vector<16x1xf32> to vector<16x64xf32>
    %119 = arith.mulf %118, %42 : vector<16x64xf32>
    %120 = arith.addf %115, %119 : vector<16x64xf32>
    %c21 = arith.constant 21 : index
    %c0_67 = arith.constant 0 : index
    %c0_68 = arith.constant 0 : index
    %121 = vector.load %arg8[%c21, %c0_67, %c0_68] : memref<27x16x1xf32, #tpu.memory_space<vmem>>, vector<1x16x1xf32>
    %122 = vector.shape_cast %121 : vector<1x16x1xf32> to vector<16x1xf32>
    %123 = vector.broadcast %122 : vector<16x1xf32> to vector<16x64xf32>
    %124 = arith.mulf %123, %44 : vector<16x64xf32>
    %125 = arith.addf %120, %124 : vector<16x64xf32>
    %126 = vector.extract_strided_slice %125 {offsets = [0, 63], sizes = [16, 1], strides = [1, 1]} : vector<16x64xf32> to vector<16x1xf32>
    %127 = vector.extract_strided_slice %125 {offsets = [0, 0], sizes = [16, 63], strides = [1, 1]} : vector<16x64xf32> to vector<16x63xf32>
    %128 = tpu.concatenate %126, %127 in 1 : vector<16x1xf32>, vector<16x63xf32> -> vector<16x64xf32>
    %c3_69 = arith.constant 3 : index
    %c0_70 = arith.constant 0 : index
    %c0_71 = arith.constant 0 : index
    %129 = vector.load %arg5[%c3_69, %c0_70, %c0_71] : memref<9x1x64xf32, #tpu.memory_space<vmem>>, vector<1x1x64xf32>
    %130 = vector.shape_cast %129 : vector<1x1x64xf32> to vector<1x64xf32>
    %131 = vector.broadcast %130 : vector<1x64xf32> to vector<16x64xf32>
    %132 = arith.mulf %131, %128 : vector<16x64xf32>
    %133 = arith.addf %111, %132 : vector<16x64xf32>
    %c4_72 = arith.constant 4 : index
    %c0_73 = arith.constant 0 : index
    %c0_74 = arith.constant 0 : index
    %134 = vector.load %arg8[%c4_72, %c0_73, %c0_74] : memref<27x16x1xf32, #tpu.memory_space<vmem>>, vector<1x16x1xf32>
    %135 = vector.shape_cast %134 : vector<1x16x1xf32> to vector<16x1xf32>
    %136 = vector.broadcast %135 : vector<16x1xf32> to vector<16x64xf32>
    %137 = arith.mulf %136, %40 : vector<16x64xf32>
    %c13 = arith.constant 13 : index
    %c0_75 = arith.constant 0 : index
    %c0_76 = arith.constant 0 : index
    %138 = vector.load %arg8[%c13, %c0_75, %c0_76] : memref<27x16x1xf32, #tpu.memory_space<vmem>>, vector<1x16x1xf32>
    %139 = vector.shape_cast %138 : vector<1x16x1xf32> to vector<16x1xf32>
    %140 = vector.broadcast %139 : vector<16x1xf32> to vector<16x64xf32>
    %141 = arith.mulf %140, %42 : vector<16x64xf32>
    %142 = arith.addf %137, %141 : vector<16x64xf32>
    %c22 = arith.constant 22 : index
    %c0_77 = arith.constant 0 : index
    %c0_78 = arith.constant 0 : index
    %143 = vector.load %arg8[%c22, %c0_77, %c0_78] : memref<27x16x1xf32, #tpu.memory_space<vmem>>, vector<1x16x1xf32>
    %144 = vector.shape_cast %143 : vector<1x16x1xf32> to vector<16x1xf32>
    %145 = vector.broadcast %144 : vector<16x1xf32> to vector<16x64xf32>
    %146 = arith.mulf %145, %44 : vector<16x64xf32>
    %147 = arith.addf %142, %146 : vector<16x64xf32>
    %c4_79 = arith.constant 4 : index
    %c0_80 = arith.constant 0 : index
    %c0_81 = arith.constant 0 : index
    %148 = vector.load %arg5[%c4_79, %c0_80, %c0_81] : memref<9x1x64xf32, #tpu.memory_space<vmem>>, vector<1x1x64xf32>
    %149 = vector.shape_cast %148 : vector<1x1x64xf32> to vector<1x64xf32>
    %150 = vector.broadcast %149 : vector<1x64xf32> to vector<16x64xf32>
    %151 = arith.mulf %150, %147 : vector<16x64xf32>
    %152 = arith.addf %133, %151 : vector<16x64xf32>
    %c5 = arith.constant 5 : index
    %c0_82 = arith.constant 0 : index
    %c0_83 = arith.constant 0 : index
    %153 = vector.load %arg8[%c5, %c0_82, %c0_83] : memref<27x16x1xf32, #tpu.memory_space<vmem>>, vector<1x16x1xf32>
    %154 = vector.shape_cast %153 : vector<1x16x1xf32> to vector<16x1xf32>
    %155 = vector.broadcast %154 : vector<16x1xf32> to vector<16x64xf32>
    %156 = arith.mulf %155, %40 : vector<16x64xf32>
    %c14 = arith.constant 14 : index
    %c0_84 = arith.constant 0 : index
    %c0_85 = arith.constant 0 : index
    %157 = vector.load %arg8[%c14, %c0_84, %c0_85] : memref<27x16x1xf32, #tpu.memory_space<vmem>>, vector<1x16x1xf32>
    %158 = vector.shape_cast %157 : vector<1x16x1xf32> to vector<16x1xf32>
    %159 = vector.broadcast %158 : vector<16x1xf32> to vector<16x64xf32>
    %160 = arith.mulf %159, %42 : vector<16x64xf32>
    %161 = arith.addf %156, %160 : vector<16x64xf32>
    %c23 = arith.constant 23 : index
    %c0_86 = arith.constant 0 : index
    %c0_87 = arith.constant 0 : index
    %162 = vector.load %arg8[%c23, %c0_86, %c0_87] : memref<27x16x1xf32, #tpu.memory_space<vmem>>, vector<1x16x1xf32>
    %163 = vector.shape_cast %162 : vector<1x16x1xf32> to vector<16x1xf32>
    %164 = vector.broadcast %163 : vector<16x1xf32> to vector<16x64xf32>
    %165 = arith.mulf %164, %44 : vector<16x64xf32>
    %166 = arith.addf %161, %165 : vector<16x64xf32>
    %167 = vector.extract_strided_slice %166 {offsets = [0, 1], sizes = [16, 63], strides = [1, 1]} : vector<16x64xf32> to vector<16x63xf32>
    %168 = vector.extract_strided_slice %166 {offsets = [0, 0], sizes = [16, 1], strides = [1, 1]} : vector<16x64xf32> to vector<16x1xf32>
    %169 = tpu.concatenate %167, %168 in 1 : vector<16x63xf32>, vector<16x1xf32> -> vector<16x64xf32>
    %c5_88 = arith.constant 5 : index
    %c0_89 = arith.constant 0 : index
    %c0_90 = arith.constant 0 : index
    %170 = vector.load %arg5[%c5_88, %c0_89, %c0_90] : memref<9x1x64xf32, #tpu.memory_space<vmem>>, vector<1x1x64xf32>
    %171 = vector.shape_cast %170 : vector<1x1x64xf32> to vector<1x64xf32>
    %172 = vector.broadcast %171 : vector<1x64xf32> to vector<16x64xf32>
    %173 = arith.mulf %172, %169 : vector<16x64xf32>
    %174 = arith.addf %152, %173 : vector<16x64xf32>
    %c6 = arith.constant 6 : index
    %c0_91 = arith.constant 0 : index
    %c0_92 = arith.constant 0 : index
    %175 = vector.load %arg8[%c6, %c0_91, %c0_92] : memref<27x16x1xf32, #tpu.memory_space<vmem>>, vector<1x16x1xf32>
    %176 = vector.shape_cast %175 : vector<1x16x1xf32> to vector<16x1xf32>
    %177 = vector.broadcast %176 : vector<16x1xf32> to vector<16x64xf32>
    %178 = arith.mulf %177, %40 : vector<16x64xf32>
    %c15 = arith.constant 15 : index
    %c0_93 = arith.constant 0 : index
    %c0_94 = arith.constant 0 : index
    %179 = vector.load %arg8[%c15, %c0_93, %c0_94] : memref<27x16x1xf32, #tpu.memory_space<vmem>>, vector<1x16x1xf32>
    %180 = vector.shape_cast %179 : vector<1x16x1xf32> to vector<16x1xf32>
    %181 = vector.broadcast %180 : vector<16x1xf32> to vector<16x64xf32>
    %182 = arith.mulf %181, %42 : vector<16x64xf32>
    %183 = arith.addf %178, %182 : vector<16x64xf32>
    %c24 = arith.constant 24 : index
    %c0_95 = arith.constant 0 : index
    %c0_96 = arith.constant 0 : index
    %184 = vector.load %arg8[%c24, %c0_95, %c0_96] : memref<27x16x1xf32, #tpu.memory_space<vmem>>, vector<1x16x1xf32>
    %185 = vector.shape_cast %184 : vector<1x16x1xf32> to vector<16x1xf32>
    %186 = vector.broadcast %185 : vector<16x1xf32> to vector<16x64xf32>
    %187 = arith.mulf %186, %44 : vector<16x64xf32>
    %188 = arith.addf %183, %187 : vector<16x64xf32>
    %189 = vector.extract_strided_slice %188 {offsets = [0, 7], sizes = [16, 57], strides = [1, 1]} : vector<16x64xf32> to vector<16x57xf32>
    %190 = vector.extract_strided_slice %188 {offsets = [0, 0], sizes = [16, 7], strides = [1, 1]} : vector<16x64xf32> to vector<16x7xf32>
    %191 = tpu.concatenate %189, %190 in 1 : vector<16x57xf32>, vector<16x7xf32> -> vector<16x64xf32>
    %c6_97 = arith.constant 6 : index
    %c0_98 = arith.constant 0 : index
    %c0_99 = arith.constant 0 : index
    %192 = vector.load %arg5[%c6_97, %c0_98, %c0_99] : memref<9x1x64xf32, #tpu.memory_space<vmem>>, vector<1x1x64xf32>
    %193 = vector.shape_cast %192 : vector<1x1x64xf32> to vector<1x64xf32>
    %194 = vector.broadcast %193 : vector<1x64xf32> to vector<16x64xf32>
    %195 = arith.mulf %194, %191 : vector<16x64xf32>
    %196 = arith.addf %174, %195 : vector<16x64xf32>
    %c7 = arith.constant 7 : index
    %c0_100 = arith.constant 0 : index
    %c0_101 = arith.constant 0 : index
    %197 = vector.load %arg8[%c7, %c0_100, %c0_101] : memref<27x16x1xf32, #tpu.memory_space<vmem>>, vector<1x16x1xf32>
    %198 = vector.shape_cast %197 : vector<1x16x1xf32> to vector<16x1xf32>
    %199 = vector.broadcast %198 : vector<16x1xf32> to vector<16x64xf32>
    %200 = arith.mulf %199, %40 : vector<16x64xf32>
    %c16 = arith.constant 16 : index
    %c0_102 = arith.constant 0 : index
    %c0_103 = arith.constant 0 : index
    %201 = vector.load %arg8[%c16, %c0_102, %c0_103] : memref<27x16x1xf32, #tpu.memory_space<vmem>>, vector<1x16x1xf32>
    %202 = vector.shape_cast %201 : vector<1x16x1xf32> to vector<16x1xf32>
    %203 = vector.broadcast %202 : vector<16x1xf32> to vector<16x64xf32>
    %204 = arith.mulf %203, %42 : vector<16x64xf32>
    %205 = arith.addf %200, %204 : vector<16x64xf32>
    %c25 = arith.constant 25 : index
    %c0_104 = arith.constant 0 : index
    %c0_105 = arith.constant 0 : index
    %206 = vector.load %arg8[%c25, %c0_104, %c0_105] : memref<27x16x1xf32, #tpu.memory_space<vmem>>, vector<1x16x1xf32>
    %207 = vector.shape_cast %206 : vector<1x16x1xf32> to vector<16x1xf32>
    %208 = vector.broadcast %207 : vector<16x1xf32> to vector<16x64xf32>
    %209 = arith.mulf %208, %44 : vector<16x64xf32>
    %210 = arith.addf %205, %209 : vector<16x64xf32>
    %211 = vector.extract_strided_slice %210 {offsets = [0, 8], sizes = [16, 56], strides = [1, 1]} : vector<16x64xf32> to vector<16x56xf32>
    %212 = vector.extract_strided_slice %210 {offsets = [0, 0], sizes = [16, 8], strides = [1, 1]} : vector<16x64xf32> to vector<16x8xf32>
    %213 = tpu.concatenate %211, %212 in 1 : vector<16x56xf32>, vector<16x8xf32> -> vector<16x64xf32>
    %c7_106 = arith.constant 7 : index
    %c0_107 = arith.constant 0 : index
    %c0_108 = arith.constant 0 : index
    %214 = vector.load %arg5[%c7_106, %c0_107, %c0_108] : memref<9x1x64xf32, #tpu.memory_space<vmem>>, vector<1x1x64xf32>
    %215 = vector.shape_cast %214 : vector<1x1x64xf32> to vector<1x64xf32>
    %216 = vector.broadcast %215 : vector<1x64xf32> to vector<16x64xf32>
    %217 = arith.mulf %216, %213 : vector<16x64xf32>
    %218 = arith.addf %196, %217 : vector<16x64xf32>
    %c8 = arith.constant 8 : index
    %c0_109 = arith.constant 0 : index
    %c0_110 = arith.constant 0 : index
    %219 = vector.load %arg8[%c8, %c0_109, %c0_110] : memref<27x16x1xf32, #tpu.memory_space<vmem>>, vector<1x16x1xf32>
    %220 = vector.shape_cast %219 : vector<1x16x1xf32> to vector<16x1xf32>
    %221 = vector.broadcast %220 : vector<16x1xf32> to vector<16x64xf32>
    %222 = arith.mulf %221, %40 : vector<16x64xf32>
    %c17 = arith.constant 17 : index
    %c0_111 = arith.constant 0 : index
    %c0_112 = arith.constant 0 : index
    %223 = vector.load %arg8[%c17, %c0_111, %c0_112] : memref<27x16x1xf32, #tpu.memory_space<vmem>>, vector<1x16x1xf32>
    %224 = vector.shape_cast %223 : vector<1x16x1xf32> to vector<16x1xf32>
    %225 = vector.broadcast %224 : vector<16x1xf32> to vector<16x64xf32>
    %226 = arith.mulf %225, %42 : vector<16x64xf32>
    %227 = arith.addf %222, %226 : vector<16x64xf32>
    %c26 = arith.constant 26 : index
    %c0_113 = arith.constant 0 : index
    %c0_114 = arith.constant 0 : index
    %228 = vector.load %arg8[%c26, %c0_113, %c0_114] : memref<27x16x1xf32, #tpu.memory_space<vmem>>, vector<1x16x1xf32>
    %229 = vector.shape_cast %228 : vector<1x16x1xf32> to vector<16x1xf32>
    %230 = vector.broadcast %229 : vector<16x1xf32> to vector<16x64xf32>
    %231 = arith.mulf %230, %44 : vector<16x64xf32>
    %232 = arith.addf %227, %231 : vector<16x64xf32>
    %233 = vector.extract_strided_slice %232 {offsets = [0, 9], sizes = [16, 55], strides = [1, 1]} : vector<16x64xf32> to vector<16x55xf32>
    %234 = vector.extract_strided_slice %232 {offsets = [0, 0], sizes = [16, 9], strides = [1, 1]} : vector<16x64xf32> to vector<16x9xf32>
    %235 = tpu.concatenate %233, %234 in 1 : vector<16x55xf32>, vector<16x9xf32> -> vector<16x64xf32>
    %c8_115 = arith.constant 8 : index
    %c0_116 = arith.constant 0 : index
    %c0_117 = arith.constant 0 : index
    %236 = vector.load %arg5[%c8_115, %c0_116, %c0_117] : memref<9x1x64xf32, #tpu.memory_space<vmem>>, vector<1x1x64xf32>
    %237 = vector.shape_cast %236 : vector<1x1x64xf32> to vector<1x64xf32>
    %238 = vector.broadcast %237 : vector<1x64xf32> to vector<16x64xf32>
    %239 = arith.mulf %238, %235 : vector<16x64xf32>
    %240 = arith.addf %218, %239 : vector<16x64xf32>
    %c0_118 = arith.constant 0 : index
    %c0_119 = arith.constant 0 : index
    %241 = vector.load %arg9[%c0_118, %c0_119] : memref<16x1xf32, #tpu.memory_space<vmem>>, vector<16x1xf32>
    %242 = vector.broadcast %241 : vector<16x1xf32> to vector<16x64xf32>
    %243 = arith.addf %240, %242 : vector<16x64xf32>
    %cst_120 = arith.constant 0.000000e+00 : f32
    %cst_121 = arith.constant 6.000000e+00 : f32
    %244 = vector.broadcast %cst_120 : f32 to vector<16x64xf32>
    %245 = arith.maximumf %244, %243 : vector<16x64xf32>
    %246 = vector.broadcast %cst_121 : f32 to vector<16x64xf32>
    %247 = arith.minimumf %246, %245 : vector<16x64xf32>
    %c0_122 = arith.constant 0 : index
    %c0_123 = arith.constant 0 : index
    %248 = vector.load %arg10[%c0_122, %c0_123] : memref<8x16xf32, #tpu.memory_space<vmem>>, vector<8x16xf32>
    %cst_124 = arith.constant dense<0.000000e+00> : vector<8x64xf32>
    %249 = tpu.matmul %248, %247, %cst_124 {dimension_numbers = #tpu.dot_dimension_numbers<[1], [0], [0], [1], [0, 0, 1, 1], [], []>} : vector<8x16xf32>, vector<16x64xf32>, vector<8x64xf32> -> vector<8x64xf32>
    %c0_125 = arith.constant 0 : index
    %c0_126 = arith.constant 0 : index
    %250 = vector.load %arg11[%c0_125, %c0_126] : memref<8x1xf32, #tpu.memory_space<vmem>>, vector<8x1xf32>
    %251 = vector.broadcast %250 : vector<8x1xf32> to vector<8x64xf32>
    %252 = arith.addf %249, %251 : vector<8x64xf32>
    %c0_127 = arith.constant 0 : index
    %c0_128 = arith.constant 0 : index
    %c0_129 = arith.constant 0 : index
    %253 = vector.load %arg2[%c0_127, %c0_128, %c0_129] : memref<1x8x256xf32, #tpu.memory_space<vmem>>, vector<1x8x64xf32>
    %254 = vector.shape_cast %253 : vector<1x8x64xf32> to vector<8x64xf32>
    %255 = arith.addf %252, %254 : vector<8x64xf32>
    %c0_130 = arith.constant 0 : index
    %c0_131 = arith.constant 0 : index
    %c0_132 = arith.constant 0 : index
    %256 = vector.load %arg12[%c0_130, %c0_131, %c0_132] : memref<1x8x256xf32, #tpu.memory_space<vmem>>, vector<1x8x64xf32>
    %257 = vector.shape_cast %256 : vector<1x8x64xf32> to vector<8x64xf32>
    %258 = vector.shape_cast %255 : vector<8x64xf32> to vector<1x8x64xf32>
    tpu.vector_store %arg12[%c0_130, %c0_131, %c0_132], %258 {strides = array<i32>} : memref<1x8x256xf32, #tpu.memory_space<vmem>>, vector<1x8x64xf32>,
    %c1_133 = arith.constant 1 : index
    %c0_134 = arith.constant 0 : index
    %c0_135 = arith.constant 0 : index
    %259 = vector.load %arg13[%c1_133, %c0_134, %c0_135] : memref<6x16x64xf32, #tpu.memory_space<vmem>>, vector<1x16x64xf32>
    %260 = vector.shape_cast %259 : vector<1x16x64xf32> to vector<16x64xf32>
    %c2_136 = arith.constant 2 : index
    %c0_137 = arith.constant 0 : index
    %c0_138 = arith.constant 0 : index
    %261 = vector.load %arg13[%c2_136, %c0_137, %c0_138] : memref<6x16x64xf32, #tpu.memory_space<vmem>>, vector<1x16x64xf32>
    %262 = vector.shape_cast %261 : vector<1x16x64xf32> to vector<16x64xf32>
    %c3_139 = arith.constant 3 : index
    %c0_140 = arith.constant 0 : index
    %c0_141 = arith.constant 0 : index
    %263 = vector.load %arg13[%c3_139, %c0_140, %c0_141] : memref<6x16x64xf32, #tpu.memory_space<vmem>>, vector<1x16x64xf32>
    %264 = vector.shape_cast %263 : vector<1x16x64xf32> to vector<16x64xf32>
    %cst_142 = arith.constant 0.000000e+00 : f32
    %265 = vector.broadcast %cst_142 : f32 to vector<16x64xf32>
    %c0_143 = arith.constant 0 : index
    %c0_144 = arith.constant 0 : index
    %c0_145 = arith.constant 0 : index
    %266 = vector.load %arg8[%c0_143, %c0_144, %c0_145] : memref<27x16x1xf32, #tpu.memory_space<vmem>>, vector<1x16x1xf32>
    %267 = vector.shape_cast %266 : vector<1x16x1xf32> to vector<16x1xf32>
    %268 = vector.broadcast %267 : vector<16x1xf32> to vector<16x64xf32>
    %269 = arith.mulf %268, %260 : vector<16x64xf32>
    %c9_146 = arith.constant 9 : index
    %c0_147 = arith.constant 0 : index
    %c0_148 = arith.constant 0 : index
    %270 = vector.load %arg8[%c9_146, %c0_147, %c0_148] : memref<27x16x1xf32, #tpu.memory_space<vmem>>, vector<1x16x1xf32>
    %271 = vector.shape_cast %270 : vector<1x16x1xf32> to vector<16x1xf32>
    %272 = vector.broadcast %271 : vector<16x1xf32> to vector<16x64xf32>
    %273 = arith.mulf %272, %262 : vector<16x64xf32>
    %274 = arith.addf %269, %273 : vector<16x64xf32>
    %c18_149 = arith.constant 18 : index
    %c0_150 = arith.constant 0 : index
    %c0_151 = arith.constant 0 : index
    %275 = vector.load %arg8[%c18_149, %c0_150, %c0_151] : memref<27x16x1xf32, #tpu.memory_space<vmem>>, vector<1x16x1xf32>
    %276 = vector.shape_cast %275 : vector<1x16x1xf32> to vector<16x1xf32>
    %277 = vector.broadcast %276 : vector<16x1xf32> to vector<16x64xf32>
    %278 = arith.mulf %277, %264 : vector<16x64xf32>
    %279 = arith.addf %274, %278 : vector<16x64xf32>
    %280 = vector.extract_strided_slice %279 {offsets = [0, 55], sizes = [16, 9], strides = [1, 1]} : vector<16x64xf32> to vector<16x9xf32>
    %281 = vector.extract_strided_slice %279 {offsets = [0, 0], sizes = [16, 55], strides = [1, 1]} : vector<16x64xf32> to vector<16x55xf32>
    %282 = tpu.concatenate %280, %281 in 1 : vector<16x9xf32>, vector<16x55xf32> -> vector<16x64xf32>
    %c0_152 = arith.constant 0 : index
    %c0_153 = arith.constant 0 : index
    %c0_154 = arith.constant 0 : index
    %283 = vector.load %arg5[%c0_152, %c0_153, %c0_154] : memref<9x1x64xf32, #tpu.memory_space<vmem>>, vector<1x1x64xf32>
    %284 = vector.shape_cast %283 : vector<1x1x64xf32> to vector<1x64xf32>
    %285 = vector.broadcast %284 : vector<1x64xf32> to vector<16x64xf32>
    %286 = arith.mulf %285, %282 : vector<16x64xf32>
    %287 = arith.addf %265, %286 : vector<16x64xf32>
    %c1_155 = arith.constant 1 : index
    %c0_156 = arith.constant 0 : index
    %c0_157 = arith.constant 0 : index
    %288 = vector.load %arg8[%c1_155, %c0_156, %c0_157] : memref<27x16x1xf32, #tpu.memory_space<vmem>>, vector<1x16x1xf32>
    %289 = vector.shape_cast %288 : vector<1x16x1xf32> to vector<16x1xf32>
    %290 = vector.broadcast %289 : vector<16x1xf32> to vector<16x64xf32>
    %291 = arith.mulf %290, %260 : vector<16x64xf32>
    %c10_158 = arith.constant 10 : index
    %c0_159 = arith.constant 0 : index
    %c0_160 = arith.constant 0 : index
    %292 = vector.load %arg8[%c10_158, %c0_159, %c0_160] : memref<27x16x1xf32, #tpu.memory_space<vmem>>, vector<1x16x1xf32>
    %293 = vector.shape_cast %292 : vector<1x16x1xf32> to vector<16x1xf32>
    %294 = vector.broadcast %293 : vector<16x1xf32> to vector<16x64xf32>
    %295 = arith.mulf %294, %262 : vector<16x64xf32>
    %296 = arith.addf %291, %295 : vector<16x64xf32>
    %c19_161 = arith.constant 19 : index
    %c0_162 = arith.constant 0 : index
    %c0_163 = arith.constant 0 : index
    %297 = vector.load %arg8[%c19_161, %c0_162, %c0_163] : memref<27x16x1xf32, #tpu.memory_space<vmem>>, vector<1x16x1xf32>
    %298 = vector.shape_cast %297 : vector<1x16x1xf32> to vector<16x1xf32>
    %299 = vector.broadcast %298 : vector<16x1xf32> to vector<16x64xf32>
    %300 = arith.mulf %299, %264 : vector<16x64xf32>
    %301 = arith.addf %296, %300 : vector<16x64xf32>
    %302 = vector.extract_strided_slice %301 {offsets = [0, 56], sizes = [16, 8], strides = [1, 1]} : vector<16x64xf32> to vector<16x8xf32>
    %303 = vector.extract_strided_slice %301 {offsets = [0, 0], sizes = [16, 56], strides = [1, 1]} : vector<16x64xf32> to vector<16x56xf32>
    %304 = tpu.concatenate %302, %303 in 1 : vector<16x8xf32>, vector<16x56xf32> -> vector<16x64xf32>
    %c1_164 = arith.constant 1 : index
    %c0_165 = arith.constant 0 : index
    %c0_166 = arith.constant 0 : index
    %305 = vector.load %arg5[%c1_164, %c0_165, %c0_166] : memref<9x1x64xf32, #tpu.memory_space<vmem>>, vector<1x1x64xf32>
    %306 = vector.shape_cast %305 : vector<1x1x64xf32> to vector<1x64xf32>
    %307 = vector.broadcast %306 : vector<1x64xf32> to vector<16x64xf32>
    %308 = arith.mulf %307, %304 : vector<16x64xf32>
    %309 = arith.addf %287, %308 : vector<16x64xf32>
    %c2_167 = arith.constant 2 : index
    %c0_168 = arith.constant 0 : index
    %c0_169 = arith.constant 0 : index
    %310 = vector.load %arg8[%c2_167, %c0_168, %c0_169] : memref<27x16x1xf32, #tpu.memory_space<vmem>>, vector<1x16x1xf32>
    %311 = vector.shape_cast %310 : vector<1x16x1xf32> to vector<16x1xf32>
    %312 = vector.broadcast %311 : vector<16x1xf32> to vector<16x64xf32>
    %313 = arith.mulf %312, %260 : vector<16x64xf32>
    %c11_170 = arith.constant 11 : index
    %c0_171 = arith.constant 0 : index
    %c0_172 = arith.constant 0 : index
    %314 = vector.load %arg8[%c11_170, %c0_171, %c0_172] : memref<27x16x1xf32, #tpu.memory_space<vmem>>, vector<1x16x1xf32>
    %315 = vector.shape_cast %314 : vector<1x16x1xf32> to vector<16x1xf32>
    %316 = vector.broadcast %315 : vector<16x1xf32> to vector<16x64xf32>
    %317 = arith.mulf %316, %262 : vector<16x64xf32>
    %318 = arith.addf %313, %317 : vector<16x64xf32>
    %c20_173 = arith.constant 20 : index
    %c0_174 = arith.constant 0 : index
    %c0_175 = arith.constant 0 : index
    %319 = vector.load %arg8[%c20_173, %c0_174, %c0_175] : memref<27x16x1xf32, #tpu.memory_space<vmem>>, vector<1x16x1xf32>
    %320 = vector.shape_cast %319 : vector<1x16x1xf32> to vector<16x1xf32>
    %321 = vector.broadcast %320 : vector<16x1xf32> to vector<16x64xf32>
    %322 = arith.mulf %321, %264 : vector<16x64xf32>
    %323 = arith.addf %318, %322 : vector<16x64xf32>
    %324 = vector.extract_strided_slice %323 {offsets = [0, 57], sizes = [16, 7], strides = [1, 1]} : vector<16x64xf32> to vector<16x7xf32>
    %325 = vector.extract_strided_slice %323 {offsets = [0, 0], sizes = [16, 57], strides = [1, 1]} : vector<16x64xf32> to vector<16x57xf32>
    %326 = tpu.concatenate %324, %325 in 1 : vector<16x7xf32>, vector<16x57xf32> -> vector<16x64xf32>
    %c2_176 = arith.constant 2 : index
    %c0_177 = arith.constant 0 : index
    %c0_178 = arith.constant 0 : index
    %327 = vector.load %arg5[%c2_176, %c0_177, %c0_178] : memref<9x1x64xf32, #tpu.memory_space<vmem>>, vector<1x1x64xf32>
    %328 = vector.shape_cast %327 : vector<1x1x64xf32> to vector<1x64xf32>
    %329 = vector.broadcast %328 : vector<1x64xf32> to vector<16x64xf32>
    %330 = arith.mulf %329, %326 : vector<16x64xf32>
    %331 = arith.addf %309, %330 : vector<16x64xf32>
    %c3_179 = arith.constant 3 : index
    %c0_180 = arith.constant 0 : index
    %c0_181 = arith.constant 0 : index
    %332 = vector.load %arg8[%c3_179, %c0_180, %c0_181] : memref<27x16x1xf32, #tpu.memory_space<vmem>>, vector<1x16x1xf32>
    %333 = vector.shape_cast %332 : vector<1x16x1xf32> to vector<16x1xf32>
    %334 = vector.broadcast %333 : vector<16x1xf32> to vector<16x64xf32>
    %335 = arith.mulf %334, %260 : vector<16x64xf32>
    %c12_182 = arith.constant 12 : index
    %c0_183 = arith.constant 0 : index
    %c0_184 = arith.constant 0 : index
    %336 = vector.load %arg8[%c12_182, %c0_183, %c0_184] : memref<27x16x1xf32, #tpu.memory_space<vmem>>, vector<1x16x1xf32>
    %337 = vector.shape_cast %336 : vector<1x16x1xf32> to vector<16x1xf32>
    %338 = vector.broadcast %337 : vector<16x1xf32> to vector<16x64xf32>
    %339 = arith.mulf %338, %262 : vector<16x64xf32>
    %340 = arith.addf %335, %339 : vector<16x64xf32>
    %c21_185 = arith.constant 21 : index
    %c0_186 = arith.constant 0 : index
    %c0_187 = arith.constant 0 : index
    %341 = vector.load %arg8[%c21_185, %c0_186, %c0_187] : memref<27x16x1xf32, #tpu.memory_space<vmem>>, vector<1x16x1xf32>
    %342 = vector.shape_cast %341 : vector<1x16x1xf32> to vector<16x1xf32>
    %343 = vector.broadcast %342 : vector<16x1xf32> to vector<16x64xf32>
    %344 = arith.mulf %343, %264 : vector<16x64xf32>
    %345 = arith.addf %340, %344 : vector<16x64xf32>
    %346 = vector.extract_strided_slice %345 {offsets = [0, 63], sizes = [16, 1], strides = [1, 1]} : vector<16x64xf32> to vector<16x1xf32>
    %347 = vector.extract_strided_slice %345 {offsets = [0, 0], sizes = [16, 63], strides = [1, 1]} : vector<16x64xf32> to vector<16x63xf32>
    %348 = tpu.concatenate %346, %347 in 1 : vector<16x1xf32>, vector<16x63xf32> -> vector<16x64xf32>
    %c3_188 = arith.constant 3 : index
    %c0_189 = arith.constant 0 : index
    %c0_190 = arith.constant 0 : index
    %349 = vector.load %arg5[%c3_188, %c0_189, %c0_190] : memref<9x1x64xf32, #tpu.memory_space<vmem>>, vector<1x1x64xf32>
    %350 = vector.shape_cast %349 : vector<1x1x64xf32> to vector<1x64xf32>
    %351 = vector.broadcast %350 : vector<1x64xf32> to vector<16x64xf32>
    %352 = arith.mulf %351, %348 : vector<16x64xf32>
    %353 = arith.addf %331, %352 : vector<16x64xf32>
    %c4_191 = arith.constant 4 : index
    %c0_192 = arith.constant 0 : index
    %c0_193 = arith.constant 0 : index
    %354 = vector.load %arg8[%c4_191, %c0_192, %c0_193] : memref<27x16x1xf32, #tpu.memory_space<vmem>>, vector<1x16x1xf32>
    %355 = vector.shape_cast %354 : vector<1x16x1xf32> to vector<16x1xf32>
    %356 = vector.broadcast %355 : vector<16x1xf32> to vector<16x64xf32>
    %357 = arith.mulf %356, %260 : vector<16x64xf32>
    %c13_194 = arith.constant 13 : index
    %c0_195 = arith.constant 0 : index
    %c0_196 = arith.constant 0 : index
    %358 = vector.load %arg8[%c13_194, %c0_195, %c0_196] : memref<27x16x1xf32, #tpu.memory_space<vmem>>, vector<1x16x1xf32>
    %359 = vector.shape_cast %358 : vector<1x16x1xf32> to vector<16x1xf32>
    %360 = vector.broadcast %359 : vector<16x1xf32> to vector<16x64xf32>
    %361 = arith.mulf %360, %262 : vector<16x64xf32>
    %362 = arith.addf %357, %361 : vector<16x64xf32>
    %c22_197 = arith.constant 22 : index
    %c0_198 = arith.constant 0 : index
    %c0_199 = arith.constant 0 : index
    %363 = vector.load %arg8[%c22_197, %c0_198, %c0_199] : memref<27x16x1xf32, #tpu.memory_space<vmem>>, vector<1x16x1xf32>
    %364 = vector.shape_cast %363 : vector<1x16x1xf32> to vector<16x1xf32>
    %365 = vector.broadcast %364 : vector<16x1xf32> to vector<16x64xf32>
    %366 = arith.mulf %365, %264 : vector<16x64xf32>
    %367 = arith.addf %362, %366 : vector<16x64xf32>
    %c4_200 = arith.constant 4 : index
    %c0_201 = arith.constant 0 : index
    %c0_202 = arith.constant 0 : index
    %368 = vector.load %arg5[%c4_200, %c0_201, %c0_202] : memref<9x1x64xf32, #tpu.memory_space<vmem>>, vector<1x1x64xf32>
    %369 = vector.shape_cast %368 : vector<1x1x64xf32> to vector<1x64xf32>
    %370 = vector.broadcast %369 : vector<1x64xf32> to vector<16x64xf32>
    %371 = arith.mulf %370, %367 : vector<16x64xf32>
    %372 = arith.addf %353, %371 : vector<16x64xf32>
    %c5_203 = arith.constant 5 : index
    %c0_204 = arith.constant 0 : index
    %c0_205 = arith.constant 0 : index
    %373 = vector.load %arg8[%c5_203, %c0_204, %c0_205] : memref<27x16x1xf32, #tpu.memory_space<vmem>>, vector<1x16x1xf32>
    %374 = vector.shape_cast %373 : vector<1x16x1xf32> to vector<16x1xf32>
    %375 = vector.broadcast %374 : vector<16x1xf32> to vector<16x64xf32>
    %376 = arith.mulf %375, %260 : vector<16x64xf32>
    %c14_206 = arith.constant 14 : index
    %c0_207 = arith.constant 0 : index
    %c0_208 = arith.constant 0 : index
    %377 = vector.load %arg8[%c14_206, %c0_207, %c0_208] : memref<27x16x1xf32, #tpu.memory_space<vmem>>, vector<1x16x1xf32>
    %378 = vector.shape_cast %377 : vector<1x16x1xf32> to vector<16x1xf32>
    %379 = vector.broadcast %378 : vector<16x1xf32> to vector<16x64xf32>
    %380 = arith.mulf %379, %262 : vector<16x64xf32>
    %381 = arith.addf %376, %380 : vector<16x64xf32>
    %c23_209 = arith.constant 23 : index
    %c0_210 = arith.constant 0 : index
    %c0_211 = arith.constant 0 : index
    %382 = vector.load %arg8[%c23_209, %c0_210, %c0_211] : memref<27x16x1xf32, #tpu.memory_space<vmem>>, vector<1x16x1xf32>
    %383 = vector.shape_cast %382 : vector<1x16x1xf32> to vector<16x1xf32>
    %384 = vector.broadcast %383 : vector<16x1xf32> to vector<16x64xf32>
    %385 = arith.mulf %384, %264 : vector<16x64xf32>
    %386 = arith.addf %381, %385 : vector<16x64xf32>
    %387 = vector.extract_strided_slice %386 {offsets = [0, 1], sizes = [16, 63], strides = [1, 1]} : vector<16x64xf32> to vector<16x63xf32>
    %388 = vector.extract_strided_slice %386 {offsets = [0, 0], sizes = [16, 1], strides = [1, 1]} : vector<16x64xf32> to vector<16x1xf32>
    %389 = tpu.concatenate %387, %388 in 1 : vector<16x63xf32>, vector<16x1xf32> -> vector<16x64xf32>
    %c5_212 = arith.constant 5 : index
    %c0_213 = arith.constant 0 : index
    %c0_214 = arith.constant 0 : index
    %390 = vector.load %arg5[%c5_212, %c0_213, %c0_214] : memref<9x1x64xf32, #tpu.memory_space<vmem>>, vector<1x1x64xf32>
    %391 = vector.shape_cast %390 : vector<1x1x64xf32> to vector<1x64xf32>
    %392 = vector.broadcast %391 : vector<1x64xf32> to vector<16x64xf32>
    %393 = arith.mulf %392, %389 : vector<16x64xf32>
    %394 = arith.addf %372, %393 : vector<16x64xf32>
    %c6_215 = arith.constant 6 : index
    %c0_216 = arith.constant 0 : index
    %c0_217 = arith.constant 0 : index
    %395 = vector.load %arg8[%c6_215, %c0_216, %c0_217] : memref<27x16x1xf32, #tpu.memory_space<vmem>>, vector<1x16x1xf32>
    %396 = vector.shape_cast %395 : vector<1x16x1xf32> to vector<16x1xf32>
    %397 = vector.broadcast %396 : vector<16x1xf32> to vector<16x64xf32>
    %398 = arith.mulf %397, %260 : vector<16x64xf32>
    %c15_218 = arith.constant 15 : index
    %c0_219 = arith.constant 0 : index
    %c0_220 = arith.constant 0 : index
    %399 = vector.load %arg8[%c15_218, %c0_219, %c0_220] : memref<27x16x1xf32, #tpu.memory_space<vmem>>, vector<1x16x1xf32>
    %400 = vector.shape_cast %399 : vector<1x16x1xf32> to vector<16x1xf32>
    %401 = vector.broadcast %400 : vector<16x1xf32> to vector<16x64xf32>
    %402 = arith.mulf %401, %262 : vector<16x64xf32>
    %403 = arith.addf %398, %402 : vector<16x64xf32>
    %c24_221 = arith.constant 24 : index
    %c0_222 = arith.constant 0 : index
    %c0_223 = arith.constant 0 : index
    %404 = vector.load %arg8[%c24_221, %c0_222, %c0_223] : memref<27x16x1xf32, #tpu.memory_space<vmem>>, vector<1x16x1xf32>
    %405 = vector.shape_cast %404 : vector<1x16x1xf32> to vector<16x1xf32>
    %406 = vector.broadcast %405 : vector<16x1xf32> to vector<16x64xf32>
    %407 = arith.mulf %406, %264 : vector<16x64xf32>
    %408 = arith.addf %403, %407 : vector<16x64xf32>
    %409 = vector.extract_strided_slice %408 {offsets = [0, 7], sizes = [16, 57], strides = [1, 1]} : vector<16x64xf32> to vector<16x57xf32>
    %410 = vector.extract_strided_slice %408 {offsets = [0, 0], sizes = [16, 7], strides = [1, 1]} : vector<16x64xf32> to vector<16x7xf32>
    %411 = tpu.concatenate %409, %410 in 1 : vector<16x57xf32>, vector<16x7xf32> -> vector<16x64xf32>
    %c6_224 = arith.constant 6 : index
    %c0_225 = arith.constant 0 : index
    %c0_226 = arith.constant 0 : index
    %412 = vector.load %arg5[%c6_224, %c0_225, %c0_226] : memref<9x1x64xf32, #tpu.memory_space<vmem>>, vector<1x1x64xf32>
    %413 = vector.shape_cast %412 : vector<1x1x64xf32> to vector<1x64xf32>
    %414 = vector.broadcast %413 : vector<1x64xf32> to vector<16x64xf32>
    %415 = arith.mulf %414, %411 : vector<16x64xf32>
    %416 = arith.addf %394, %415 : vector<16x64xf32>
    %c7_227 = arith.constant 7 : index
    %c0_228 = arith.constant 0 : index
    %c0_229 = arith.constant 0 : index
    %417 = vector.load %arg8[%c7_227, %c0_228, %c0_229] : memref<27x16x1xf32, #tpu.memory_space<vmem>>, vector<1x16x1xf32>
    %418 = vector.shape_cast %417 : vector<1x16x1xf32> to vector<16x1xf32>
    %419 = vector.broadcast %418 : vector<16x1xf32> to vector<16x64xf32>
    %420 = arith.mulf %419, %260 : vector<16x64xf32>
    %c16_230 = arith.constant 16 : index
    %c0_231 = arith.constant 0 : index
    %c0_232 = arith.constant 0 : index
    %421 = vector.load %arg8[%c16_230, %c0_231, %c0_232] : memref<27x16x1xf32, #tpu.memory_space<vmem>>, vector<1x16x1xf32>
    %422 = vector.shape_cast %421 : vector<1x16x1xf32> to vector<16x1xf32>
    %423 = vector.broadcast %422 : vector<16x1xf32> to vector<16x64xf32>
    %424 = arith.mulf %423, %262 : vector<16x64xf32>
    %425 = arith.addf %420, %424 : vector<16x64xf32>
    %c25_233 = arith.constant 25 : index
    %c0_234 = arith.constant 0 : index
    %c0_235 = arith.constant 0 : index
    %426 = vector.load %arg8[%c25_233, %c0_234, %c0_235] : memref<27x16x1xf32, #tpu.memory_space<vmem>>, vector<1x16x1xf32>
    %427 = vector.shape_cast %426 : vector<1x16x1xf32> to vector<16x1xf32>
    %428 = vector.broadcast %427 : vector<16x1xf32> to vector<16x64xf32>
    %429 = arith.mulf %428, %264 : vector<16x64xf32>
    %430 = arith.addf %425, %429 : vector<16x64xf32>
    %431 = vector.extract_strided_slice %430 {offsets = [0, 8], sizes = [16, 56], strides = [1, 1]} : vector<16x64xf32> to vector<16x56xf32>
    %432 = vector.extract_strided_slice %430 {offsets = [0, 0], sizes = [16, 8], strides = [1, 1]} : vector<16x64xf32> to vector<16x8xf32>
    %433 = tpu.concatenate %431, %432 in 1 : vector<16x56xf32>, vector<16x8xf32> -> vector<16x64xf32>
    %c7_236 = arith.constant 7 : index
    %c0_237 = arith.constant 0 : index
    %c0_238 = arith.constant 0 : index
    %434 = vector.load %arg5[%c7_236, %c0_237, %c0_238] : memref<9x1x64xf32, #tpu.memory_space<vmem>>, vector<1x1x64xf32>
    %435 = vector.shape_cast %434 : vector<1x1x64xf32> to vector<1x64xf32>
    %436 = vector.broadcast %435 : vector<1x64xf32> to vector<16x64xf32>
    %437 = arith.mulf %436, %433 : vector<16x64xf32>
    %438 = arith.addf %416, %437 : vector<16x64xf32>
    %c8_239 = arith.constant 8 : index
    %c0_240 = arith.constant 0 : index
    %c0_241 = arith.constant 0 : index
    %439 = vector.load %arg8[%c8_239, %c0_240, %c0_241] : memref<27x16x1xf32, #tpu.memory_space<vmem>>, vector<1x16x1xf32>
    %440 = vector.shape_cast %439 : vector<1x16x1xf32> to vector<16x1xf32>
    %441 = vector.broadcast %440 : vector<16x1xf32> to vector<16x64xf32>
    %442 = arith.mulf %441, %260 : vector<16x64xf32>
    %c17_242 = arith.constant 17 : index
    %c0_243 = arith.constant 0 : index
    %c0_244 = arith.constant 0 : index
    %443 = vector.load %arg8[%c17_242, %c0_243, %c0_244] : memref<27x16x1xf32, #tpu.memory_space<vmem>>, vector<1x16x1xf32>
    %444 = vector.shape_cast %443 : vector<1x16x1xf32> to vector<16x1xf32>
    %445 = vector.broadcast %444 : vector<16x1xf32> to vector<16x64xf32>
    %446 = arith.mulf %445, %262 : vector<16x64xf32>
    %447 = arith.addf %442, %446 : vector<16x64xf32>
    %c26_245 = arith.constant 26 : index
    %c0_246 = arith.constant 0 : index
    %c0_247 = arith.constant 0 : index
    %448 = vector.load %arg8[%c26_245, %c0_246, %c0_247] : memref<27x16x1xf32, #tpu.memory_space<vmem>>, vector<1x16x1xf32>
    %449 = vector.shape_cast %448 : vector<1x16x1xf32> to vector<16x1xf32>
    %450 = vector.broadcast %449 : vector<16x1xf32> to vector<16x64xf32>
    %451 = arith.mulf %450, %264 : vector<16x64xf32>
    %452 = arith.addf %447, %451 : vector<16x64xf32>
    %453 = vector.extract_strided_slice %452 {offsets = [0, 9], sizes = [16, 55], strides = [1, 1]} : vector<16x64xf32> to vector<16x55xf32>
    %454 = vector.extract_strided_slice %452 {offsets = [0, 0], sizes = [16, 9], strides = [1, 1]} : vector<16x64xf32> to vector<16x9xf32>
    %455 = tpu.concatenate %453, %454 in 1 : vector<16x55xf32>, vector<16x9xf32> -> vector<16x64xf32>
    %c8_248 = arith.constant 8 : index
    %c0_249 = arith.constant 0 : index
    %c0_250 = arith.constant 0 : index
    %456 = vector.load %arg5[%c8_248, %c0_249, %c0_250] : memref<9x1x64xf32, #tpu.memory_space<vmem>>, vector<1x1x64xf32>
    %457 = vector.shape_cast %456 : vector<1x1x64xf32> to vector<1x64xf32>
    %458 = vector.broadcast %457 : vector<1x64xf32> to vector<16x64xf32>
    %459 = arith.mulf %458, %455 : vector<16x64xf32>
    %460 = arith.addf %438, %459 : vector<16x64xf32>
    %c0_251 = arith.constant 0 : index
    %c0_252 = arith.constant 0 : index
    %461 = vector.load %arg9[%c0_251, %c0_252] : memref<16x1xf32, #tpu.memory_space<vmem>>, vector<16x1xf32>
    %462 = vector.broadcast %461 : vector<16x1xf32> to vector<16x64xf32>
    %463 = arith.addf %460, %462 : vector<16x64xf32>
    %cst_253 = arith.constant 0.000000e+00 : f32
    %cst_254 = arith.constant 6.000000e+00 : f32
    %464 = vector.broadcast %cst_253 : f32 to vector<16x64xf32>
    %465 = arith.maximumf %464, %463 : vector<16x64xf32>
    %466 = vector.broadcast %cst_254 : f32 to vector<16x64xf32>
    %467 = arith.minimumf %466, %465 : vector<16x64xf32>
    %c0_255 = arith.constant 0 : index
    %c0_256 = arith.constant 0 : index
    %468 = vector.load %arg10[%c0_255, %c0_256] : memref<8x16xf32, #tpu.memory_space<vmem>>, vector<8x16xf32>
    %cst_257 = arith.constant dense<0.000000e+00> : vector<8x64xf32>
    %469 = tpu.matmul %468, %467, %cst_257 {dimension_numbers = #tpu.dot_dimension_numbers<[1], [0], [0], [1], [0, 0, 1, 1], [], []>} : vector<8x16xf32>, vector<16x64xf32>, vector<8x64xf32> -> vector<8x64xf32>
    %c0_258 = arith.constant 0 : index
    %c0_259 = arith.constant 0 : index
    %470 = vector.load %arg11[%c0_258, %c0_259] : memref<8x1xf32, #tpu.memory_space<vmem>>, vector<8x1xf32>
    %471 = vector.broadcast %470 : vector<8x1xf32> to vector<8x64xf32>
    %472 = arith.addf %469, %471 : vector<8x64xf32>
    %c0_260 = arith.constant 0 : index
    %c0_261 = arith.constant 0 : index
    %c64 = arith.constant 64 : index
    %473 = vector.load %arg2[%c0_260, %c0_261, %c64] : memref<1x8x256xf32, #tpu.memory_space<vmem>>, vector<1x8x64xf32>
    %474 = vector.shape_cast %473 : vector<1x8x64xf32> to vector<8x64xf32>
    %475 = arith.addf %472, %474 : vector<8x64xf32>
    %c0_262 = arith.constant 0 : index
    %c0_263 = arith.constant 0 : index
    %c64_264 = arith.constant 64 : index
    %476 = vector.load %arg12[%c0_262, %c0_263, %c64_264] : memref<1x8x256xf32, #tpu.memory_space<vmem>>, vector<1x8x64xf32>
    %477 = vector.shape_cast %476 : vector<1x8x64xf32> to vector<8x64xf32>
    %478 = vector.shape_cast %475 : vector<8x64xf32> to vector<1x8x64xf32>
    tpu.vector_store %arg12[%c0_262, %c0_263, %c64_264], %478 {strides = array<i32>} : memref<1x8x256xf32, #tpu.memory_space<vmem>>, vector<1x8x64xf32>,
    %c2_265 = arith.constant 2 : index
    %c0_266 = arith.constant 0 : index
    %c0_267 = arith.constant 0 : index
    %479 = vector.load %arg13[%c2_265, %c0_266, %c0_267] : memref<6x16x64xf32, #tpu.memory_space<vmem>>, vector<1x16x64xf32>
    %480 = vector.shape_cast %479 : vector<1x16x64xf32> to vector<16x64xf32>
    %c3_268 = arith.constant 3 : index
    %c0_269 = arith.constant 0 : index
    %c0_270 = arith.constant 0 : index
    %481 = vector.load %arg13[%c3_268, %c0_269, %c0_270] : memref<6x16x64xf32, #tpu.memory_space<vmem>>, vector<1x16x64xf32>
    %482 = vector.shape_cast %481 : vector<1x16x64xf32> to vector<16x64xf32>
    %c4_271 = arith.constant 4 : index
    %c0_272 = arith.constant 0 : index
    %c0_273 = arith.constant 0 : index
    %483 = vector.load %arg13[%c4_271, %c0_272, %c0_273] : memref<6x16x64xf32, #tpu.memory_space<vmem>>, vector<1x16x64xf32>
    %484 = vector.shape_cast %483 : vector<1x16x64xf32> to vector<16x64xf32>
    %cst_274 = arith.constant 0.000000e+00 : f32
    %485 = vector.broadcast %cst_274 : f32 to vector<16x64xf32>
    %c0_275 = arith.constant 0 : index
    %c0_276 = arith.constant 0 : index
    %c0_277 = arith.constant 0 : index
    %486 = vector.load %arg8[%c0_275, %c0_276, %c0_277] : memref<27x16x1xf32, #tpu.memory_space<vmem>>, vector<1x16x1xf32>
    %487 = vector.shape_cast %486 : vector<1x16x1xf32> to vector<16x1xf32>
    %488 = vector.broadcast %487 : vector<16x1xf32> to vector<16x64xf32>
    %489 = arith.mulf %488, %480 : vector<16x64xf32>
    %c9_278 = arith.constant 9 : index
    %c0_279 = arith.constant 0 : index
    %c0_280 = arith.constant 0 : index
    %490 = vector.load %arg8[%c9_278, %c0_279, %c0_280] : memref<27x16x1xf32, #tpu.memory_space<vmem>>, vector<1x16x1xf32>
    %491 = vector.shape_cast %490 : vector<1x16x1xf32> to vector<16x1xf32>
    %492 = vector.broadcast %491 : vector<16x1xf32> to vector<16x64xf32>
    %493 = arith.mulf %492, %482 : vector<16x64xf32>
    %494 = arith.addf %489, %493 : vector<16x64xf32>
    %c18_281 = arith.constant 18 : index
    %c0_282 = arith.constant 0 : index
    %c0_283 = arith.constant 0 : index
    %495 = vector.load %arg8[%c18_281, %c0_282, %c0_283] : memref<27x16x1xf32, #tpu.memory_space<vmem>>, vector<1x16x1xf32>
    %496 = vector.shape_cast %495 : vector<1x16x1xf32> to vector<16x1xf32>
    %497 = vector.broadcast %496 : vector<16x1xf32> to vector<16x64xf32>
    %498 = arith.mulf %497, %484 : vector<16x64xf32>
    %499 = arith.addf %494, %498 : vector<16x64xf32>
    %500 = vector.extract_strided_slice %499 {offsets = [0, 55], sizes = [16, 9], strides = [1, 1]} : vector<16x64xf32> to vector<16x9xf32>
    %501 = vector.extract_strided_slice %499 {offsets = [0, 0], sizes = [16, 55], strides = [1, 1]} : vector<16x64xf32> to vector<16x55xf32>
    %502 = tpu.concatenate %500, %501 in 1 : vector<16x9xf32>, vector<16x55xf32> -> vector<16x64xf32>
    %c0_284 = arith.constant 0 : index
    %c0_285 = arith.constant 0 : index
    %c0_286 = arith.constant 0 : index
    %503 = vector.load %arg5[%c0_284, %c0_285, %c0_286] : memref<9x1x64xf32, #tpu.memory_space<vmem>>, vector<1x1x64xf32>
    %504 = vector.shape_cast %503 : vector<1x1x64xf32> to vector<1x64xf32>
    %505 = vector.broadcast %504 : vector<1x64xf32> to vector<16x64xf32>
    %506 = arith.mulf %505, %502 : vector<16x64xf32>
    %507 = arith.addf %485, %506 : vector<16x64xf32>
    %c1_287 = arith.constant 1 : index
    %c0_288 = arith.constant 0 : index
    %c0_289 = arith.constant 0 : index
    %508 = vector.load %arg8[%c1_287, %c0_288, %c0_289] : memref<27x16x1xf32, #tpu.memory_space<vmem>>, vector<1x16x1xf32>
    %509 = vector.shape_cast %508 : vector<1x16x1xf32> to vector<16x1xf32>
    %510 = vector.broadcast %509 : vector<16x1xf32> to vector<16x64xf32>
    %511 = arith.mulf %510, %480 : vector<16x64xf32>
    %c10_290 = arith.constant 10 : index
    %c0_291 = arith.constant 0 : index
    %c0_292 = arith.constant 0 : index
    %512 = vector.load %arg8[%c10_290, %c0_291, %c0_292] : memref<27x16x1xf32, #tpu.memory_space<vmem>>, vector<1x16x1xf32>
    %513 = vector.shape_cast %512 : vector<1x16x1xf32> to vector<16x1xf32>
    %514 = vector.broadcast %513 : vector<16x1xf32> to vector<16x64xf32>
    %515 = arith.mulf %514, %482 : vector<16x64xf32>
    %516 = arith.addf %511, %515 : vector<16x64xf32>
    %c19_293 = arith.constant 19 : index
    %c0_294 = arith.constant 0 : index
    %c0_295 = arith.constant 0 : index
    %517 = vector.load %arg8[%c19_293, %c0_294, %c0_295] : memref<27x16x1xf32, #tpu.memory_space<vmem>>, vector<1x16x1xf32>
    %518 = vector.shape_cast %517 : vector<1x16x1xf32> to vector<16x1xf32>
    %519 = vector.broadcast %518 : vector<16x1xf32> to vector<16x64xf32>
    %520 = arith.mulf %519, %484 : vector<16x64xf32>
    %521 = arith.addf %516, %520 : vector<16x64xf32>
    %522 = vector.extract_strided_slice %521 {offsets = [0, 56], sizes = [16, 8], strides = [1, 1]} : vector<16x64xf32> to vector<16x8xf32>
    %523 = vector.extract_strided_slice %521 {offsets = [0, 0], sizes = [16, 56], strides = [1, 1]} : vector<16x64xf32> to vector<16x56xf32>
    %524 = tpu.concatenate %522, %523 in 1 : vector<16x8xf32>, vector<16x56xf32> -> vector<16x64xf32>
    %c1_296 = arith.constant 1 : index
    %c0_297 = arith.constant 0 : index
    %c0_298 = arith.constant 0 : index
    %525 = vector.load %arg5[%c1_296, %c0_297, %c0_298] : memref<9x1x64xf32, #tpu.memory_space<vmem>>, vector<1x1x64xf32>
    %526 = vector.shape_cast %525 : vector<1x1x64xf32> to vector<1x64xf32>
    %527 = vector.broadcast %526 : vector<1x64xf32> to vector<16x64xf32>
    %528 = arith.mulf %527, %524 : vector<16x64xf32>
    %529 = arith.addf %507, %528 : vector<16x64xf32>
    %c2_299 = arith.constant 2 : index
    %c0_300 = arith.constant 0 : index
    %c0_301 = arith.constant 0 : index
    %530 = vector.load %arg8[%c2_299, %c0_300, %c0_301] : memref<27x16x1xf32, #tpu.memory_space<vmem>>, vector<1x16x1xf32>
    %531 = vector.shape_cast %530 : vector<1x16x1xf32> to vector<16x1xf32>
    %532 = vector.broadcast %531 : vector<16x1xf32> to vector<16x64xf32>
    %533 = arith.mulf %532, %480 : vector<16x64xf32>
    %c11_302 = arith.constant 11 : index
    %c0_303 = arith.constant 0 : index
    %c0_304 = arith.constant 0 : index
    %534 = vector.load %arg8[%c11_302, %c0_303, %c0_304] : memref<27x16x1xf32, #tpu.memory_space<vmem>>, vector<1x16x1xf32>
    %535 = vector.shape_cast %534 : vector<1x16x1xf32> to vector<16x1xf32>
    %536 = vector.broadcast %535 : vector<16x1xf32> to vector<16x64xf32>
    %537 = arith.mulf %536, %482 : vector<16x64xf32>
    %538 = arith.addf %533, %537 : vector<16x64xf32>
    %c20_305 = arith.constant 20 : index
    %c0_306 = arith.constant 0 : index
    %c0_307 = arith.constant 0 : index
    %539 = vector.load %arg8[%c20_305, %c0_306, %c0_307] : memref<27x16x1xf32, #tpu.memory_space<vmem>>, vector<1x16x1xf32>
    %540 = vector.shape_cast %539 : vector<1x16x1xf32> to vector<16x1xf32>
    %541 = vector.broadcast %540 : vector<16x1xf32> to vector<16x64xf32>
    %542 = arith.mulf %541, %484 : vector<16x64xf32>
    %543 = arith.addf %538, %542 : vector<16x64xf32>
    %544 = vector.extract_strided_slice %543 {offsets = [0, 57], sizes = [16, 7], strides = [1, 1]} : vector<16x64xf32> to vector<16x7xf32>
    %545 = vector.extract_strided_slice %543 {offsets = [0, 0], sizes = [16, 57], strides = [1, 1]} : vector<16x64xf32> to vector<16x57xf32>
    %546 = tpu.concatenate %544, %545 in 1 : vector<16x7xf32>, vector<16x57xf32> -> vector<16x64xf32>
    %c2_308 = arith.constant 2 : index
    %c0_309 = arith.constant 0 : index
    %c0_310 = arith.constant 0 : index
    %547 = vector.load %arg5[%c2_308, %c0_309, %c0_310] : memref<9x1x64xf32, #tpu.memory_space<vmem>>, vector<1x1x64xf32>
    %548 = vector.shape_cast %547 : vector<1x1x64xf32> to vector<1x64xf32>
    %549 = vector.broadcast %548 : vector<1x64xf32> to vector<16x64xf32>
    %550 = arith.mulf %549, %546 : vector<16x64xf32>
    %551 = arith.addf %529, %550 : vector<16x64xf32>
    %c3_311 = arith.constant 3 : index
    %c0_312 = arith.constant 0 : index
    %c0_313 = arith.constant 0 : index
    %552 = vector.load %arg8[%c3_311, %c0_312, %c0_313] : memref<27x16x1xf32, #tpu.memory_space<vmem>>, vector<1x16x1xf32>
    %553 = vector.shape_cast %552 : vector<1x16x1xf32> to vector<16x1xf32>
    %554 = vector.broadcast %553 : vector<16x1xf32> to vector<16x64xf32>
    %555 = arith.mulf %554, %480 : vector<16x64xf32>
    %c12_314 = arith.constant 12 : index
    %c0_315 = arith.constant 0 : index
    %c0_316 = arith.constant 0 : index
    %556 = vector.load %arg8[%c12_314, %c0_315, %c0_316] : memref<27x16x1xf32, #tpu.memory_space<vmem>>, vector<1x16x1xf32>
    %557 = vector.shape_cast %556 : vector<1x16x1xf32> to vector<16x1xf32>
    %558 = vector.broadcast %557 : vector<16x1xf32> to vector<16x64xf32>
    %559 = arith.mulf %558, %482 : vector<16x64xf32>
    %560 = arith.addf %555, %559 : vector<16x64xf32>
    %c21_317 = arith.constant 21 : index
    %c0_318 = arith.constant 0 : index
    %c0_319 = arith.constant 0 : index
    %561 = vector.load %arg8[%c21_317, %c0_318, %c0_319] : memref<27x16x1xf32, #tpu.memory_space<vmem>>, vector<1x16x1xf32>
    %562 = vector.shape_cast %561 : vector<1x16x1xf32> to vector<16x1xf32>
    %563 = vector.broadcast %562 : vector<16x1xf32> to vector<16x64xf32>
    %564 = arith.mulf %563, %484 : vector<16x64xf32>
    %565 = arith.addf %560, %564 : vector<16x64xf32>
    %566 = vector.extract_strided_slice %565 {offsets = [0, 63], sizes = [16, 1], strides = [1, 1]} : vector<16x64xf32> to vector<16x1xf32>
    %567 = vector.extract_strided_slice %565 {offsets = [0, 0], sizes = [16, 63], strides = [1, 1]} : vector<16x64xf32> to vector<16x63xf32>
    %568 = tpu.concatenate %566, %567 in 1 : vector<16x1xf32>, vector<16x63xf32> -> vector<16x64xf32>
    %c3_320 = arith.constant 3 : index
    %c0_321 = arith.constant 0 : index
    %c0_322 = arith.constant 0 : index
    %569 = vector.load %arg5[%c3_320, %c0_321, %c0_322] : memref<9x1x64xf32, #tpu.memory_space<vmem>>, vector<1x1x64xf32>
    %570 = vector.shape_cast %569 : vector<1x1x64xf32> to vector<1x64xf32>
    %571 = vector.broadcast %570 : vector<1x64xf32> to vector<16x64xf32>
    %572 = arith.mulf %571, %568 : vector<16x64xf32>
    %573 = arith.addf %551, %572 : vector<16x64xf32>
    %c4_323 = arith.constant 4 : index
    %c0_324 = arith.constant 0 : index
    %c0_325 = arith.constant 0 : index
    %574 = vector.load %arg8[%c4_323, %c0_324, %c0_325] : memref<27x16x1xf32, #tpu.memory_space<vmem>>, vector<1x16x1xf32>
    %575 = vector.shape_cast %574 : vector<1x16x1xf32> to vector<16x1xf32>
    %576 = vector.broadcast %575 : vector<16x1xf32> to vector<16x64xf32>
    %577 = arith.mulf %576, %480 : vector<16x64xf32>
    %c13_326 = arith.constant 13 : index
    %c0_327 = arith.constant 0 : index
    %c0_328 = arith.constant 0 : index
    %578 = vector.load %arg8[%c13_326, %c0_327, %c0_328] : memref<27x16x1xf32, #tpu.memory_space<vmem>>, vector<1x16x1xf32>
    %579 = vector.shape_cast %578 : vector<1x16x1xf32> to vector<16x1xf32>
    %580 = vector.broadcast %579 : vector<16x1xf32> to vector<16x64xf32>
    %581 = arith.mulf %580, %482 : vector<16x64xf32>
    %582 = arith.addf %577, %581 : vector<16x64xf32>
    %c22_329 = arith.constant 22 : index
    %c0_330 = arith.constant 0 : index
    %c0_331 = arith.constant 0 : index
    %583 = vector.load %arg8[%c22_329, %c0_330, %c0_331] : memref<27x16x1xf32, #tpu.memory_space<vmem>>, vector<1x16x1xf32>
    %584 = vector.shape_cast %583 : vector<1x16x1xf32> to vector<16x1xf32>
    %585 = vector.broadcast %584 : vector<16x1xf32> to vector<16x64xf32>
    %586 = arith.mulf %585, %484 : vector<16x64xf32>
    %587 = arith.addf %582, %586 : vector<16x64xf32>
    %c4_332 = arith.constant 4 : index
    %c0_333 = arith.constant 0 : index
    %c0_334 = arith.constant 0 : index
    %588 = vector.load %arg5[%c4_332, %c0_333, %c0_334] : memref<9x1x64xf32, #tpu.memory_space<vmem>>, vector<1x1x64xf32>
    %589 = vector.shape_cast %588 : vector<1x1x64xf32> to vector<1x64xf32>
    %590 = vector.broadcast %589 : vector<1x64xf32> to vector<16x64xf32>
    %591 = arith.mulf %590, %587 : vector<16x64xf32>
    %592 = arith.addf %573, %591 : vector<16x64xf32>
    %c5_335 = arith.constant 5 : index
    %c0_336 = arith.constant 0 : index
    %c0_337 = arith.constant 0 : index
    %593 = vector.load %arg8[%c5_335, %c0_336, %c0_337] : memref<27x16x1xf32, #tpu.memory_space<vmem>>, vector<1x16x1xf32>
    %594 = vector.shape_cast %593 : vector<1x16x1xf32> to vector<16x1xf32>
    %595 = vector.broadcast %594 : vector<16x1xf32> to vector<16x64xf32>
    %596 = arith.mulf %595, %480 : vector<16x64xf32>
    %c14_338 = arith.constant 14 : index
    %c0_339 = arith.constant 0 : index
    %c0_340 = arith.constant 0 : index
    %597 = vector.load %arg8[%c14_338, %c0_339, %c0_340] : memref<27x16x1xf32, #tpu.memory_space<vmem>>, vector<1x16x1xf32>
    %598 = vector.shape_cast %597 : vector<1x16x1xf32> to vector<16x1xf32>
    %599 = vector.broadcast %598 : vector<16x1xf32> to vector<16x64xf32>
    %600 = arith.mulf %599, %482 : vector<16x64xf32>
    %601 = arith.addf %596, %600 : vector<16x64xf32>
    %c23_341 = arith.constant 23 : index
    %c0_342 = arith.constant 0 : index
    %c0_343 = arith.constant 0 : index
    %602 = vector.load %arg8[%c23_341, %c0_342, %c0_343] : memref<27x16x1xf32, #tpu.memory_space<vmem>>, vector<1x16x1xf32>
    %603 = vector.shape_cast %602 : vector<1x16x1xf32> to vector<16x1xf32>
    %604 = vector.broadcast %603 : vector<16x1xf32> to vector<16x64xf32>
    %605 = arith.mulf %604, %484 : vector<16x64xf32>
    %606 = arith.addf %601, %605 : vector<16x64xf32>
    %607 = vector.extract_strided_slice %606 {offsets = [0, 1], sizes = [16, 63], strides = [1, 1]} : vector<16x64xf32> to vector<16x63xf32>
    %608 = vector.extract_strided_slice %606 {offsets = [0, 0], sizes = [16, 1], strides = [1, 1]} : vector<16x64xf32> to vector<16x1xf32>
    %609 = tpu.concatenate %607, %608 in 1 : vector<16x63xf32>, vector<16x1xf32> -> vector<16x64xf32>
    %c5_344 = arith.constant 5 : index
    %c0_345 = arith.constant 0 : index
    %c0_346 = arith.constant 0 : index
    %610 = vector.load %arg5[%c5_344, %c0_345, %c0_346] : memref<9x1x64xf32, #tpu.memory_space<vmem>>, vector<1x1x64xf32>
    %611 = vector.shape_cast %610 : vector<1x1x64xf32> to vector<1x64xf32>
    %612 = vector.broadcast %611 : vector<1x64xf32> to vector<16x64xf32>
    %613 = arith.mulf %612, %609 : vector<16x64xf32>
    %614 = arith.addf %592, %613 : vector<16x64xf32>
    %c6_347 = arith.constant 6 : index
    %c0_348 = arith.constant 0 : index
    %c0_349 = arith.constant 0 : index
    %615 = vector.load %arg8[%c6_347, %c0_348, %c0_349] : memref<27x16x1xf32, #tpu.memory_space<vmem>>, vector<1x16x1xf32>
    %616 = vector.shape_cast %615 : vector<1x16x1xf32> to vector<16x1xf32>
    %617 = vector.broadcast %616 : vector<16x1xf32> to vector<16x64xf32>
    %618 = arith.mulf %617, %480 : vector<16x64xf32>
    %c15_350 = arith.constant 15 : index
    %c0_351 = arith.constant 0 : index
    %c0_352 = arith.constant 0 : index
    %619 = vector.load %arg8[%c15_350, %c0_351, %c0_352] : memref<27x16x1xf32, #tpu.memory_space<vmem>>, vector<1x16x1xf32>
    %620 = vector.shape_cast %619 : vector<1x16x1xf32> to vector<16x1xf32>
    %621 = vector.broadcast %620 : vector<16x1xf32> to vector<16x64xf32>
    %622 = arith.mulf %621, %482 : vector<16x64xf32>
    %623 = arith.addf %618, %622 : vector<16x64xf32>
    %c24_353 = arith.constant 24 : index
    %c0_354 = arith.constant 0 : index
    %c0_355 = arith.constant 0 : index
    %624 = vector.load %arg8[%c24_353, %c0_354, %c0_355] : memref<27x16x1xf32, #tpu.memory_space<vmem>>, vector<1x16x1xf32>
    %625 = vector.shape_cast %624 : vector<1x16x1xf32> to vector<16x1xf32>
    %626 = vector.broadcast %625 : vector<16x1xf32> to vector<16x64xf32>
    %627 = arith.mulf %626, %484 : vector<16x64xf32>
    %628 = arith.addf %623, %627 : vector<16x64xf32>
    %629 = vector.extract_strided_slice %628 {offsets = [0, 7], sizes = [16, 57], strides = [1, 1]} : vector<16x64xf32> to vector<16x57xf32>
    %630 = vector.extract_strided_slice %628 {offsets = [0, 0], sizes = [16, 7], strides = [1, 1]} : vector<16x64xf32> to vector<16x7xf32>
    %631 = tpu.concatenate %629, %630 in 1 : vector<16x57xf32>, vector<16x7xf32> -> vector<16x64xf32>
    %c6_356 = arith.constant 6 : index
    %c0_357 = arith.constant 0 : index
    %c0_358 = arith.constant 0 : index
    %632 = vector.load %arg5[%c6_356, %c0_357, %c0_358] : memref<9x1x64xf32, #tpu.memory_space<vmem>>, vector<1x1x64xf32>
    %633 = vector.shape_cast %632 : vector<1x1x64xf32> to vector<1x64xf32>
    %634 = vector.broadcast %633 : vector<1x64xf32> to vector<16x64xf32>
    %635 = arith.mulf %634, %631 : vector<16x64xf32>
    %636 = arith.addf %614, %635 : vector<16x64xf32>
    %c7_359 = arith.constant 7 : index
    %c0_360 = arith.constant 0 : index
    %c0_361 = arith.constant 0 : index
    %637 = vector.load %arg8[%c7_359, %c0_360, %c0_361] : memref<27x16x1xf32, #tpu.memory_space<vmem>>, vector<1x16x1xf32>
    %638 = vector.shape_cast %637 : vector<1x16x1xf32> to vector<16x1xf32>
    %639 = vector.broadcast %638 : vector<16x1xf32> to vector<16x64xf32>
    %640 = arith.mulf %639, %480 : vector<16x64xf32>
    %c16_362 = arith.constant 16 : index
    %c0_363 = arith.constant 0 : index
    %c0_364 = arith.constant 0 : index
    %641 = vector.load %arg8[%c16_362, %c0_363, %c0_364] : memref<27x16x1xf32, #tpu.memory_space<vmem>>, vector<1x16x1xf32>
    %642 = vector.shape_cast %641 : vector<1x16x1xf32> to vector<16x1xf32>
    %643 = vector.broadcast %642 : vector<16x1xf32> to vector<16x64xf32>
    %644 = arith.mulf %643, %482 : vector<16x64xf32>
    %645 = arith.addf %640, %644 : vector<16x64xf32>
    %c25_365 = arith.constant 25 : index
    %c0_366 = arith.constant 0 : index
    %c0_367 = arith.constant 0 : index
    %646 = vector.load %arg8[%c25_365, %c0_366, %c0_367] : memref<27x16x1xf32, #tpu.memory_space<vmem>>, vector<1x16x1xf32>
    %647 = vector.shape_cast %646 : vector<1x16x1xf32> to vector<16x1xf32>
    %648 = vector.broadcast %647 : vector<16x1xf32> to vector<16x64xf32>
    %649 = arith.mulf %648, %484 : vector<16x64xf32>
    %650 = arith.addf %645, %649 : vector<16x64xf32>
    %651 = vector.extract_strided_slice %650 {offsets = [0, 8], sizes = [16, 56], strides = [1, 1]} : vector<16x64xf32> to vector<16x56xf32>
    %652 = vector.extract_strided_slice %650 {offsets = [0, 0], sizes = [16, 8], strides = [1, 1]} : vector<16x64xf32> to vector<16x8xf32>
    %653 = tpu.concatenate %651, %652 in 1 : vector<16x56xf32>, vector<16x8xf32> -> vector<16x64xf32>
    %c7_368 = arith.constant 7 : index
    %c0_369 = arith.constant 0 : index
    %c0_370 = arith.constant 0 : index
    %654 = vector.load %arg5[%c7_368, %c0_369, %c0_370] : memref<9x1x64xf32, #tpu.memory_space<vmem>>, vector<1x1x64xf32>
    %655 = vector.shape_cast %654 : vector<1x1x64xf32> to vector<1x64xf32>
    %656 = vector.broadcast %655 : vector<1x64xf32> to vector<16x64xf32>
    %657 = arith.mulf %656, %653 : vector<16x64xf32>
    %658 = arith.addf %636, %657 : vector<16x64xf32>
    %c8_371 = arith.constant 8 : index
    %c0_372 = arith.constant 0 : index
    %c0_373 = arith.constant 0 : index
    %659 = vector.load %arg8[%c8_371, %c0_372, %c0_373] : memref<27x16x1xf32, #tpu.memory_space<vmem>>, vector<1x16x1xf32>
    %660 = vector.shape_cast %659 : vector<1x16x1xf32> to vector<16x1xf32>
    %661 = vector.broadcast %660 : vector<16x1xf32> to vector<16x64xf32>
    %662 = arith.mulf %661, %480 : vector<16x64xf32>
    %c17_374 = arith.constant 17 : index
    %c0_375 = arith.constant 0 : index
    %c0_376 = arith.constant 0 : index
    %663 = vector.load %arg8[%c17_374, %c0_375, %c0_376] : memref<27x16x1xf32, #tpu.memory_space<vmem>>, vector<1x16x1xf32>
    %664 = vector.shape_cast %663 : vector<1x16x1xf32> to vector<16x1xf32>
    %665 = vector.broadcast %664 : vector<16x1xf32> to vector<16x64xf32>
    %666 = arith.mulf %665, %482 : vector<16x64xf32>
    %667 = arith.addf %662, %666 : vector<16x64xf32>
    %c26_377 = arith.constant 26 : index
    %c0_378 = arith.constant 0 : index
    %c0_379 = arith.constant 0 : index
    %668 = vector.load %arg8[%c26_377, %c0_378, %c0_379] : memref<27x16x1xf32, #tpu.memory_space<vmem>>, vector<1x16x1xf32>
    %669 = vector.shape_cast %668 : vector<1x16x1xf32> to vector<16x1xf32>
    %670 = vector.broadcast %669 : vector<16x1xf32> to vector<16x64xf32>
    %671 = arith.mulf %670, %484 : vector<16x64xf32>
    %672 = arith.addf %667, %671 : vector<16x64xf32>
    %673 = vector.extract_strided_slice %672 {offsets = [0, 9], sizes = [16, 55], strides = [1, 1]} : vector<16x64xf32> to vector<16x55xf32>
    %674 = vector.extract_strided_slice %672 {offsets = [0, 0], sizes = [16, 9], strides = [1, 1]} : vector<16x64xf32> to vector<16x9xf32>
    %675 = tpu.concatenate %673, %674 in 1 : vector<16x55xf32>, vector<16x9xf32> -> vector<16x64xf32>
    %c8_380 = arith.constant 8 : index
    %c0_381 = arith.constant 0 : index
    %c0_382 = arith.constant 0 : index
    %676 = vector.load %arg5[%c8_380, %c0_381, %c0_382] : memref<9x1x64xf32, #tpu.memory_space<vmem>>, vector<1x1x64xf32>
    %677 = vector.shape_cast %676 : vector<1x1x64xf32> to vector<1x64xf32>
    %678 = vector.broadcast %677 : vector<1x64xf32> to vector<16x64xf32>
    %679 = arith.mulf %678, %675 : vector<16x64xf32>
    %680 = arith.addf %658, %679 : vector<16x64xf32>
    %c0_383 = arith.constant 0 : index
    %c0_384 = arith.constant 0 : index
    %681 = vector.load %arg9[%c0_383, %c0_384] : memref<16x1xf32, #tpu.memory_space<vmem>>, vector<16x1xf32>
    %682 = vector.broadcast %681 : vector<16x1xf32> to vector<16x64xf32>
    %683 = arith.addf %680, %682 : vector<16x64xf32>
    %cst_385 = arith.constant 0.000000e+00 : f32
    %cst_386 = arith.constant 6.000000e+00 : f32
    %684 = vector.broadcast %cst_385 : f32 to vector<16x64xf32>
    %685 = arith.maximumf %684, %683 : vector<16x64xf32>
    %686 = vector.broadcast %cst_386 : f32 to vector<16x64xf32>
    %687 = arith.minimumf %686, %685 : vector<16x64xf32>
    %c0_387 = arith.constant 0 : index
    %c0_388 = arith.constant 0 : index
    %688 = vector.load %arg10[%c0_387, %c0_388] : memref<8x16xf32, #tpu.memory_space<vmem>>, vector<8x16xf32>
    %cst_389 = arith.constant dense<0.000000e+00> : vector<8x64xf32>
    %689 = tpu.matmul %688, %687, %cst_389 {dimension_numbers = #tpu.dot_dimension_numbers<[1], [0], [0], [1], [0, 0, 1, 1], [], []>} : vector<8x16xf32>, vector<16x64xf32>, vector<8x64xf32> -> vector<8x64xf32>
    %c0_390 = arith.constant 0 : index
    %c0_391 = arith.constant 0 : index
    %690 = vector.load %arg11[%c0_390, %c0_391] : memref<8x1xf32, #tpu.memory_space<vmem>>, vector<8x1xf32>
    %691 = vector.broadcast %690 : vector<8x1xf32> to vector<8x64xf32>
    %692 = arith.addf %689, %691 : vector<8x64xf32>
    %c0_392 = arith.constant 0 : index
    %c0_393 = arith.constant 0 : index
    %c128 = arith.constant 128 : index
    %693 = vector.load %arg2[%c0_392, %c0_393, %c128] : memref<1x8x256xf32, #tpu.memory_space<vmem>>, vector<1x8x64xf32>
    %694 = vector.shape_cast %693 : vector<1x8x64xf32> to vector<8x64xf32>
    %695 = arith.addf %692, %694 : vector<8x64xf32>
    %c0_394 = arith.constant 0 : index
    %c0_395 = arith.constant 0 : index
    %c128_396 = arith.constant 128 : index
    %696 = vector.load %arg12[%c0_394, %c0_395, %c128_396] : memref<1x8x256xf32, #tpu.memory_space<vmem>>, vector<1x8x64xf32>
    %697 = vector.shape_cast %696 : vector<1x8x64xf32> to vector<8x64xf32>
    %698 = vector.shape_cast %695 : vector<8x64xf32> to vector<1x8x64xf32>
    tpu.vector_store %arg12[%c0_394, %c0_395, %c128_396], %698 {strides = array<i32>} : memref<1x8x256xf32, #tpu.memory_space<vmem>>, vector<1x8x64xf32>,
    %c3_397 = arith.constant 3 : index
    %c0_398 = arith.constant 0 : index
    %c0_399 = arith.constant 0 : index
    %699 = vector.load %arg13[%c3_397, %c0_398, %c0_399] : memref<6x16x64xf32, #tpu.memory_space<vmem>>, vector<1x16x64xf32>
    %700 = vector.shape_cast %699 : vector<1x16x64xf32> to vector<16x64xf32>
    %c4_400 = arith.constant 4 : index
    %c0_401 = arith.constant 0 : index
    %c0_402 = arith.constant 0 : index
    %701 = vector.load %arg13[%c4_400, %c0_401, %c0_402] : memref<6x16x64xf32, #tpu.memory_space<vmem>>, vector<1x16x64xf32>
    %702 = vector.shape_cast %701 : vector<1x16x64xf32> to vector<16x64xf32>
    %c5_403 = arith.constant 5 : index
    %c0_404 = arith.constant 0 : index
    %c0_405 = arith.constant 0 : index
    %703 = vector.load %arg13[%c5_403, %c0_404, %c0_405] : memref<6x16x64xf32, #tpu.memory_space<vmem>>, vector<1x16x64xf32>
    %704 = vector.shape_cast %703 : vector<1x16x64xf32> to vector<16x64xf32>
    %cst_406 = arith.constant 0.000000e+00 : f32
    %705 = vector.broadcast %cst_406 : f32 to vector<16x64xf32>
    %c0_407 = arith.constant 0 : index
    %c0_408 = arith.constant 0 : index
    %c0_409 = arith.constant 0 : index
    %706 = vector.load %arg8[%c0_407, %c0_408, %c0_409] : memref<27x16x1xf32, #tpu.memory_space<vmem>>, vector<1x16x1xf32>
    %707 = vector.shape_cast %706 : vector<1x16x1xf32> to vector<16x1xf32>
    %708 = vector.broadcast %707 : vector<16x1xf32> to vector<16x64xf32>
    %709 = arith.mulf %708, %700 : vector<16x64xf32>
    %c9_410 = arith.constant 9 : index
    %c0_411 = arith.constant 0 : index
    %c0_412 = arith.constant 0 : index
    %710 = vector.load %arg8[%c9_410, %c0_411, %c0_412] : memref<27x16x1xf32, #tpu.memory_space<vmem>>, vector<1x16x1xf32>
    %711 = vector.shape_cast %710 : vector<1x16x1xf32> to vector<16x1xf32>
    %712 = vector.broadcast %711 : vector<16x1xf32> to vector<16x64xf32>
    %713 = arith.mulf %712, %702 : vector<16x64xf32>
    %714 = arith.addf %709, %713 : vector<16x64xf32>
    %c18_413 = arith.constant 18 : index
    %c0_414 = arith.constant 0 : index
    %c0_415 = arith.constant 0 : index
    %715 = vector.load %arg8[%c18_413, %c0_414, %c0_415] : memref<27x16x1xf32, #tpu.memory_space<vmem>>, vector<1x16x1xf32>
    %716 = vector.shape_cast %715 : vector<1x16x1xf32> to vector<16x1xf32>
    %717 = vector.broadcast %716 : vector<16x1xf32> to vector<16x64xf32>
    %718 = arith.mulf %717, %704 : vector<16x64xf32>
    %719 = arith.addf %714, %718 : vector<16x64xf32>
    %720 = vector.extract_strided_slice %719 {offsets = [0, 55], sizes = [16, 9], strides = [1, 1]} : vector<16x64xf32> to vector<16x9xf32>
    %721 = vector.extract_strided_slice %719 {offsets = [0, 0], sizes = [16, 55], strides = [1, 1]} : vector<16x64xf32> to vector<16x55xf32>
    %722 = tpu.concatenate %720, %721 in 1 : vector<16x9xf32>, vector<16x55xf32> -> vector<16x64xf32>
    %c0_416 = arith.constant 0 : index
    %c0_417 = arith.constant 0 : index
    %c0_418 = arith.constant 0 : index
    %723 = vector.load %arg5[%c0_416, %c0_417, %c0_418] : memref<9x1x64xf32, #tpu.memory_space<vmem>>, vector<1x1x64xf32>
    %724 = vector.shape_cast %723 : vector<1x1x64xf32> to vector<1x64xf32>
    %725 = vector.broadcast %724 : vector<1x64xf32> to vector<16x64xf32>
    %726 = arith.mulf %725, %722 : vector<16x64xf32>
    %727 = arith.addf %705, %726 : vector<16x64xf32>
    %c1_419 = arith.constant 1 : index
    %c0_420 = arith.constant 0 : index
    %c0_421 = arith.constant 0 : index
    %728 = vector.load %arg8[%c1_419, %c0_420, %c0_421] : memref<27x16x1xf32, #tpu.memory_space<vmem>>, vector<1x16x1xf32>
    %729 = vector.shape_cast %728 : vector<1x16x1xf32> to vector<16x1xf32>
    %730 = vector.broadcast %729 : vector<16x1xf32> to vector<16x64xf32>
    %731 = arith.mulf %730, %700 : vector<16x64xf32>
    %c10_422 = arith.constant 10 : index
    %c0_423 = arith.constant 0 : index
    %c0_424 = arith.constant 0 : index
    %732 = vector.load %arg8[%c10_422, %c0_423, %c0_424] : memref<27x16x1xf32, #tpu.memory_space<vmem>>, vector<1x16x1xf32>
    %733 = vector.shape_cast %732 : vector<1x16x1xf32> to vector<16x1xf32>
    %734 = vector.broadcast %733 : vector<16x1xf32> to vector<16x64xf32>
    %735 = arith.mulf %734, %702 : vector<16x64xf32>
    %736 = arith.addf %731, %735 : vector<16x64xf32>
    %c19_425 = arith.constant 19 : index
    %c0_426 = arith.constant 0 : index
    %c0_427 = arith.constant 0 : index
    %737 = vector.load %arg8[%c19_425, %c0_426, %c0_427] : memref<27x16x1xf32, #tpu.memory_space<vmem>>, vector<1x16x1xf32>
    %738 = vector.shape_cast %737 : vector<1x16x1xf32> to vector<16x1xf32>
    %739 = vector.broadcast %738 : vector<16x1xf32> to vector<16x64xf32>
    %740 = arith.mulf %739, %704 : vector<16x64xf32>
    %741 = arith.addf %736, %740 : vector<16x64xf32>
    %742 = vector.extract_strided_slice %741 {offsets = [0, 56], sizes = [16, 8], strides = [1, 1]} : vector<16x64xf32> to vector<16x8xf32>
    %743 = vector.extract_strided_slice %741 {offsets = [0, 0], sizes = [16, 56], strides = [1, 1]} : vector<16x64xf32> to vector<16x56xf32>
    %744 = tpu.concatenate %742, %743 in 1 : vector<16x8xf32>, vector<16x56xf32> -> vector<16x64xf32>
    %c1_428 = arith.constant 1 : index
    %c0_429 = arith.constant 0 : index
    %c0_430 = arith.constant 0 : index
    %745 = vector.load %arg5[%c1_428, %c0_429, %c0_430] : memref<9x1x64xf32, #tpu.memory_space<vmem>>, vector<1x1x64xf32>
    %746 = vector.shape_cast %745 : vector<1x1x64xf32> to vector<1x64xf32>
    %747 = vector.broadcast %746 : vector<1x64xf32> to vector<16x64xf32>
    %748 = arith.mulf %747, %744 : vector<16x64xf32>
    %749 = arith.addf %727, %748 : vector<16x64xf32>
    %c2_431 = arith.constant 2 : index
    %c0_432 = arith.constant 0 : index
    %c0_433 = arith.constant 0 : index
    %750 = vector.load %arg8[%c2_431, %c0_432, %c0_433] : memref<27x16x1xf32, #tpu.memory_space<vmem>>, vector<1x16x1xf32>
    %751 = vector.shape_cast %750 : vector<1x16x1xf32> to vector<16x1xf32>
    %752 = vector.broadcast %751 : vector<16x1xf32> to vector<16x64xf32>
    %753 = arith.mulf %752, %700 : vector<16x64xf32>
    %c11_434 = arith.constant 11 : index
    %c0_435 = arith.constant 0 : index
    %c0_436 = arith.constant 0 : index
    %754 = vector.load %arg8[%c11_434, %c0_435, %c0_436] : memref<27x16x1xf32, #tpu.memory_space<vmem>>, vector<1x16x1xf32>
    %755 = vector.shape_cast %754 : vector<1x16x1xf32> to vector<16x1xf32>
    %756 = vector.broadcast %755 : vector<16x1xf32> to vector<16x64xf32>
    %757 = arith.mulf %756, %702 : vector<16x64xf32>
    %758 = arith.addf %753, %757 : vector<16x64xf32>
    %c20_437 = arith.constant 20 : index
    %c0_438 = arith.constant 0 : index
    %c0_439 = arith.constant 0 : index
    %759 = vector.load %arg8[%c20_437, %c0_438, %c0_439] : memref<27x16x1xf32, #tpu.memory_space<vmem>>, vector<1x16x1xf32>
    %760 = vector.shape_cast %759 : vector<1x16x1xf32> to vector<16x1xf32>
    %761 = vector.broadcast %760 : vector<16x1xf32> to vector<16x64xf32>
    %762 = arith.mulf %761, %704 : vector<16x64xf32>
    %763 = arith.addf %758, %762 : vector<16x64xf32>
    %764 = vector.extract_strided_slice %763 {offsets = [0, 57], sizes = [16, 7], strides = [1, 1]} : vector<16x64xf32> to vector<16x7xf32>
    %765 = vector.extract_strided_slice %763 {offsets = [0, 0], sizes = [16, 57], strides = [1, 1]} : vector<16x64xf32> to vector<16x57xf32>
    %766 = tpu.concatenate %764, %765 in 1 : vector<16x7xf32>, vector<16x57xf32> -> vector<16x64xf32>
    %c2_440 = arith.constant 2 : index
    %c0_441 = arith.constant 0 : index
    %c0_442 = arith.constant 0 : index
    %767 = vector.load %arg5[%c2_440, %c0_441, %c0_442] : memref<9x1x64xf32, #tpu.memory_space<vmem>>, vector<1x1x64xf32>
    %768 = vector.shape_cast %767 : vector<1x1x64xf32> to vector<1x64xf32>
    %769 = vector.broadcast %768 : vector<1x64xf32> to vector<16x64xf32>
    %770 = arith.mulf %769, %766 : vector<16x64xf32>
    %771 = arith.addf %749, %770 : vector<16x64xf32>
    %c3_443 = arith.constant 3 : index
    %c0_444 = arith.constant 0 : index
    %c0_445 = arith.constant 0 : index
    %772 = vector.load %arg8[%c3_443, %c0_444, %c0_445] : memref<27x16x1xf32, #tpu.memory_space<vmem>>, vector<1x16x1xf32>
    %773 = vector.shape_cast %772 : vector<1x16x1xf32> to vector<16x1xf32>
    %774 = vector.broadcast %773 : vector<16x1xf32> to vector<16x64xf32>
    %775 = arith.mulf %774, %700 : vector<16x64xf32>
    %c12_446 = arith.constant 12 : index
    %c0_447 = arith.constant 0 : index
    %c0_448 = arith.constant 0 : index
    %776 = vector.load %arg8[%c12_446, %c0_447, %c0_448] : memref<27x16x1xf32, #tpu.memory_space<vmem>>, vector<1x16x1xf32>
    %777 = vector.shape_cast %776 : vector<1x16x1xf32> to vector<16x1xf32>
    %778 = vector.broadcast %777 : vector<16x1xf32> to vector<16x64xf32>
    %779 = arith.mulf %778, %702 : vector<16x64xf32>
    %780 = arith.addf %775, %779 : vector<16x64xf32>
    %c21_449 = arith.constant 21 : index
    %c0_450 = arith.constant 0 : index
    %c0_451 = arith.constant 0 : index
    %781 = vector.load %arg8[%c21_449, %c0_450, %c0_451] : memref<27x16x1xf32, #tpu.memory_space<vmem>>, vector<1x16x1xf32>
    %782 = vector.shape_cast %781 : vector<1x16x1xf32> to vector<16x1xf32>
    %783 = vector.broadcast %782 : vector<16x1xf32> to vector<16x64xf32>
    %784 = arith.mulf %783, %704 : vector<16x64xf32>
    %785 = arith.addf %780, %784 : vector<16x64xf32>
    %786 = vector.extract_strided_slice %785 {offsets = [0, 63], sizes = [16, 1], strides = [1, 1]} : vector<16x64xf32> to vector<16x1xf32>
    %787 = vector.extract_strided_slice %785 {offsets = [0, 0], sizes = [16, 63], strides = [1, 1]} : vector<16x64xf32> to vector<16x63xf32>
    %788 = tpu.concatenate %786, %787 in 1 : vector<16x1xf32>, vector<16x63xf32> -> vector<16x64xf32>
    %c3_452 = arith.constant 3 : index
    %c0_453 = arith.constant 0 : index
    %c0_454 = arith.constant 0 : index
    %789 = vector.load %arg5[%c3_452, %c0_453, %c0_454] : memref<9x1x64xf32, #tpu.memory_space<vmem>>, vector<1x1x64xf32>
    %790 = vector.shape_cast %789 : vector<1x1x64xf32> to vector<1x64xf32>
    %791 = vector.broadcast %790 : vector<1x64xf32> to vector<16x64xf32>
    %792 = arith.mulf %791, %788 : vector<16x64xf32>
    %793 = arith.addf %771, %792 : vector<16x64xf32>
    %c4_455 = arith.constant 4 : index
    %c0_456 = arith.constant 0 : index
    %c0_457 = arith.constant 0 : index
    %794 = vector.load %arg8[%c4_455, %c0_456, %c0_457] : memref<27x16x1xf32, #tpu.memory_space<vmem>>, vector<1x16x1xf32>
    %795 = vector.shape_cast %794 : vector<1x16x1xf32> to vector<16x1xf32>
    %796 = vector.broadcast %795 : vector<16x1xf32> to vector<16x64xf32>
    %797 = arith.mulf %796, %700 : vector<16x64xf32>
    %c13_458 = arith.constant 13 : index
    %c0_459 = arith.constant 0 : index
    %c0_460 = arith.constant 0 : index
    %798 = vector.load %arg8[%c13_458, %c0_459, %c0_460] : memref<27x16x1xf32, #tpu.memory_space<vmem>>, vector<1x16x1xf32>
    %799 = vector.shape_cast %798 : vector<1x16x1xf32> to vector<16x1xf32>
    %800 = vector.broadcast %799 : vector<16x1xf32> to vector<16x64xf32>
    %801 = arith.mulf %800, %702 : vector<16x64xf32>
    %802 = arith.addf %797, %801 : vector<16x64xf32>
    %c22_461 = arith.constant 22 : index
    %c0_462 = arith.constant 0 : index
    %c0_463 = arith.constant 0 : index
    %803 = vector.load %arg8[%c22_461, %c0_462, %c0_463] : memref<27x16x1xf32, #tpu.memory_space<vmem>>, vector<1x16x1xf32>
    %804 = vector.shape_cast %803 : vector<1x16x1xf32> to vector<16x1xf32>
    %805 = vector.broadcast %804 : vector<16x1xf32> to vector<16x64xf32>
    %806 = arith.mulf %805, %704 : vector<16x64xf32>
    %807 = arith.addf %802, %806 : vector<16x64xf32>
    %c4_464 = arith.constant 4 : index
    %c0_465 = arith.constant 0 : index
    %c0_466 = arith.constant 0 : index
    %808 = vector.load %arg5[%c4_464, %c0_465, %c0_466] : memref<9x1x64xf32, #tpu.memory_space<vmem>>, vector<1x1x64xf32>
    %809 = vector.shape_cast %808 : vector<1x1x64xf32> to vector<1x64xf32>
    %810 = vector.broadcast %809 : vector<1x64xf32> to vector<16x64xf32>
    %811 = arith.mulf %810, %807 : vector<16x64xf32>
    %812 = arith.addf %793, %811 : vector<16x64xf32>
    %c5_467 = arith.constant 5 : index
    %c0_468 = arith.constant 0 : index
    %c0_469 = arith.constant 0 : index
    %813 = vector.load %arg8[%c5_467, %c0_468, %c0_469] : memref<27x16x1xf32, #tpu.memory_space<vmem>>, vector<1x16x1xf32>
    %814 = vector.shape_cast %813 : vector<1x16x1xf32> to vector<16x1xf32>
    %815 = vector.broadcast %814 : vector<16x1xf32> to vector<16x64xf32>
    %816 = arith.mulf %815, %700 : vector<16x64xf32>
    %c14_470 = arith.constant 14 : index
    %c0_471 = arith.constant 0 : index
    %c0_472 = arith.constant 0 : index
    %817 = vector.load %arg8[%c14_470, %c0_471, %c0_472] : memref<27x16x1xf32, #tpu.memory_space<vmem>>, vector<1x16x1xf32>
    %818 = vector.shape_cast %817 : vector<1x16x1xf32> to vector<16x1xf32>
    %819 = vector.broadcast %818 : vector<16x1xf32> to vector<16x64xf32>
    %820 = arith.mulf %819, %702 : vector<16x64xf32>
    %821 = arith.addf %816, %820 : vector<16x64xf32>
    %c23_473 = arith.constant 23 : index
    %c0_474 = arith.constant 0 : index
    %c0_475 = arith.constant 0 : index
    %822 = vector.load %arg8[%c23_473, %c0_474, %c0_475] : memref<27x16x1xf32, #tpu.memory_space<vmem>>, vector<1x16x1xf32>
    %823 = vector.shape_cast %822 : vector<1x16x1xf32> to vector<16x1xf32>
    %824 = vector.broadcast %823 : vector<16x1xf32> to vector<16x64xf32>
    %825 = arith.mulf %824, %704 : vector<16x64xf32>
    %826 = arith.addf %821, %825 : vector<16x64xf32>
    %827 = vector.extract_strided_slice %826 {offsets = [0, 1], sizes = [16, 63], strides = [1, 1]} : vector<16x64xf32> to vector<16x63xf32>
    %828 = vector.extract_strided_slice %826 {offsets = [0, 0], sizes = [16, 1], strides = [1, 1]} : vector<16x64xf32> to vector<16x1xf32>
    %829 = tpu.concatenate %827, %828 in 1 : vector<16x63xf32>, vector<16x1xf32> -> vector<16x64xf32>
    %c5_476 = arith.constant 5 : index
    %c0_477 = arith.constant 0 : index
    %c0_478 = arith.constant 0 : index
    %830 = vector.load %arg5[%c5_476, %c0_477, %c0_478] : memref<9x1x64xf32, #tpu.memory_space<vmem>>, vector<1x1x64xf32>
    %831 = vector.shape_cast %830 : vector<1x1x64xf32> to vector<1x64xf32>
    %832 = vector.broadcast %831 : vector<1x64xf32> to vector<16x64xf32>
    %833 = arith.mulf %832, %829 : vector<16x64xf32>
    %834 = arith.addf %812, %833 : vector<16x64xf32>
    %c6_479 = arith.constant 6 : index
    %c0_480 = arith.constant 0 : index
    %c0_481 = arith.constant 0 : index
    %835 = vector.load %arg8[%c6_479, %c0_480, %c0_481] : memref<27x16x1xf32, #tpu.memory_space<vmem>>, vector<1x16x1xf32>
    %836 = vector.shape_cast %835 : vector<1x16x1xf32> to vector<16x1xf32>
    %837 = vector.broadcast %836 : vector<16x1xf32> to vector<16x64xf32>
    %838 = arith.mulf %837, %700 : vector<16x64xf32>
    %c15_482 = arith.constant 15 : index
    %c0_483 = arith.constant 0 : index
    %c0_484 = arith.constant 0 : index
    %839 = vector.load %arg8[%c15_482, %c0_483, %c0_484] : memref<27x16x1xf32, #tpu.memory_space<vmem>>, vector<1x16x1xf32>
    %840 = vector.shape_cast %839 : vector<1x16x1xf32> to vector<16x1xf32>
    %841 = vector.broadcast %840 : vector<16x1xf32> to vector<16x64xf32>
    %842 = arith.mulf %841, %702 : vector<16x64xf32>
    %843 = arith.addf %838, %842 : vector<16x64xf32>
    %c24_485 = arith.constant 24 : index
    %c0_486 = arith.constant 0 : index
    %c0_487 = arith.constant 0 : index
    %844 = vector.load %arg8[%c24_485, %c0_486, %c0_487] : memref<27x16x1xf32, #tpu.memory_space<vmem>>, vector<1x16x1xf32>
    %845 = vector.shape_cast %844 : vector<1x16x1xf32> to vector<16x1xf32>
    %846 = vector.broadcast %845 : vector<16x1xf32> to vector<16x64xf32>
    %847 = arith.mulf %846, %704 : vector<16x64xf32>
    %848 = arith.addf %843, %847 : vector<16x64xf32>
    %849 = vector.extract_strided_slice %848 {offsets = [0, 7], sizes = [16, 57], strides = [1, 1]} : vector<16x64xf32> to vector<16x57xf32>
    %850 = vector.extract_strided_slice %848 {offsets = [0, 0], sizes = [16, 7], strides = [1, 1]} : vector<16x64xf32> to vector<16x7xf32>
    %851 = tpu.concatenate %849, %850 in 1 : vector<16x57xf32>, vector<16x7xf32> -> vector<16x64xf32>
    %c6_488 = arith.constant 6 : index
    %c0_489 = arith.constant 0 : index
    %c0_490 = arith.constant 0 : index
    %852 = vector.load %arg5[%c6_488, %c0_489, %c0_490] : memref<9x1x64xf32, #tpu.memory_space<vmem>>, vector<1x1x64xf32>
    %853 = vector.shape_cast %852 : vector<1x1x64xf32> to vector<1x64xf32>
    %854 = vector.broadcast %853 : vector<1x64xf32> to vector<16x64xf32>
    %855 = arith.mulf %854, %851 : vector<16x64xf32>
    %856 = arith.addf %834, %855 : vector<16x64xf32>
    %c7_491 = arith.constant 7 : index
    %c0_492 = arith.constant 0 : index
    %c0_493 = arith.constant 0 : index
    %857 = vector.load %arg8[%c7_491, %c0_492, %c0_493] : memref<27x16x1xf32, #tpu.memory_space<vmem>>, vector<1x16x1xf32>
    %858 = vector.shape_cast %857 : vector<1x16x1xf32> to vector<16x1xf32>
    %859 = vector.broadcast %858 : vector<16x1xf32> to vector<16x64xf32>
    %860 = arith.mulf %859, %700 : vector<16x64xf32>
    %c16_494 = arith.constant 16 : index
    %c0_495 = arith.constant 0 : index
    %c0_496 = arith.constant 0 : index
    %861 = vector.load %arg8[%c16_494, %c0_495, %c0_496] : memref<27x16x1xf32, #tpu.memory_space<vmem>>, vector<1x16x1xf32>
    %862 = vector.shape_cast %861 : vector<1x16x1xf32> to vector<16x1xf32>
    %863 = vector.broadcast %862 : vector<16x1xf32> to vector<16x64xf32>
    %864 = arith.mulf %863, %702 : vector<16x64xf32>
    %865 = arith.addf %860, %864 : vector<16x64xf32>
    %c25_497 = arith.constant 25 : index
    %c0_498 = arith.constant 0 : index
    %c0_499 = arith.constant 0 : index
    %866 = vector.load %arg8[%c25_497, %c0_498, %c0_499] : memref<27x16x1xf32, #tpu.memory_space<vmem>>, vector<1x16x1xf32>
    %867 = vector.shape_cast %866 : vector<1x16x1xf32> to vector<16x1xf32>
    %868 = vector.broadcast %867 : vector<16x1xf32> to vector<16x64xf32>
    %869 = arith.mulf %868, %704 : vector<16x64xf32>
    %870 = arith.addf %865, %869 : vector<16x64xf32>
    %871 = vector.extract_strided_slice %870 {offsets = [0, 8], sizes = [16, 56], strides = [1, 1]} : vector<16x64xf32> to vector<16x56xf32>
    %872 = vector.extract_strided_slice %870 {offsets = [0, 0], sizes = [16, 8], strides = [1, 1]} : vector<16x64xf32> to vector<16x8xf32>
    %873 = tpu.concatenate %871, %872 in 1 : vector<16x56xf32>, vector<16x8xf32> -> vector<16x64xf32>
    %c7_500 = arith.constant 7 : index
    %c0_501 = arith.constant 0 : index
    %c0_502 = arith.constant 0 : index
    %874 = vector.load %arg5[%c7_500, %c0_501, %c0_502] : memref<9x1x64xf32, #tpu.memory_space<vmem>>, vector<1x1x64xf32>
    %875 = vector.shape_cast %874 : vector<1x1x64xf32> to vector<1x64xf32>
    %876 = vector.broadcast %875 : vector<1x64xf32> to vector<16x64xf32>
    %877 = arith.mulf %876, %873 : vector<16x64xf32>
    %878 = arith.addf %856, %877 : vector<16x64xf32>
    %c8_503 = arith.constant 8 : index
    %c0_504 = arith.constant 0 : index
    %c0_505 = arith.constant 0 : index
    %879 = vector.load %arg8[%c8_503, %c0_504, %c0_505] : memref<27x16x1xf32, #tpu.memory_space<vmem>>, vector<1x16x1xf32>
    %880 = vector.shape_cast %879 : vector<1x16x1xf32> to vector<16x1xf32>
    %881 = vector.broadcast %880 : vector<16x1xf32> to vector<16x64xf32>
    %882 = arith.mulf %881, %700 : vector<16x64xf32>
    %c17_506 = arith.constant 17 : index
    %c0_507 = arith.constant 0 : index
    %c0_508 = arith.constant 0 : index
    %883 = vector.load %arg8[%c17_506, %c0_507, %c0_508] : memref<27x16x1xf32, #tpu.memory_space<vmem>>, vector<1x16x1xf32>
    %884 = vector.shape_cast %883 : vector<1x16x1xf32> to vector<16x1xf32>
    %885 = vector.broadcast %884 : vector<16x1xf32> to vector<16x64xf32>
    %886 = arith.mulf %885, %702 : vector<16x64xf32>
    %887 = arith.addf %882, %886 : vector<16x64xf32>
    %c26_509 = arith.constant 26 : index
    %c0_510 = arith.constant 0 : index
    %c0_511 = arith.constant 0 : index
    %888 = vector.load %arg8[%c26_509, %c0_510, %c0_511] : memref<27x16x1xf32, #tpu.memory_space<vmem>>, vector<1x16x1xf32>
    %889 = vector.shape_cast %888 : vector<1x16x1xf32> to vector<16x1xf32>
    %890 = vector.broadcast %889 : vector<16x1xf32> to vector<16x64xf32>
    %891 = arith.mulf %890, %704 : vector<16x64xf32>
    %892 = arith.addf %887, %891 : vector<16x64xf32>
    %893 = vector.extract_strided_slice %892 {offsets = [0, 9], sizes = [16, 55], strides = [1, 1]} : vector<16x64xf32> to vector<16x55xf32>
    %894 = vector.extract_strided_slice %892 {offsets = [0, 0], sizes = [16, 9], strides = [1, 1]} : vector<16x64xf32> to vector<16x9xf32>
    %895 = tpu.concatenate %893, %894 in 1 : vector<16x55xf32>, vector<16x9xf32> -> vector<16x64xf32>
    %c8_512 = arith.constant 8 : index
    %c0_513 = arith.constant 0 : index
    %c0_514 = arith.constant 0 : index
    %896 = vector.load %arg5[%c8_512, %c0_513, %c0_514] : memref<9x1x64xf32, #tpu.memory_space<vmem>>, vector<1x1x64xf32>
    %897 = vector.shape_cast %896 : vector<1x1x64xf32> to vector<1x64xf32>
    %898 = vector.broadcast %897 : vector<1x64xf32> to vector<16x64xf32>
    %899 = arith.mulf %898, %895 : vector<16x64xf32>
    %900 = arith.addf %878, %899 : vector<16x64xf32>
    %c0_515 = arith.constant 0 : index
    %c0_516 = arith.constant 0 : index
    %901 = vector.load %arg9[%c0_515, %c0_516] : memref<16x1xf32, #tpu.memory_space<vmem>>, vector<16x1xf32>
    %902 = vector.broadcast %901 : vector<16x1xf32> to vector<16x64xf32>
    %903 = arith.addf %900, %902 : vector<16x64xf32>
    %cst_517 = arith.constant 0.000000e+00 : f32
    %cst_518 = arith.constant 6.000000e+00 : f32
    %904 = vector.broadcast %cst_517 : f32 to vector<16x64xf32>
    %905 = arith.maximumf %904, %903 : vector<16x64xf32>
    %906 = vector.broadcast %cst_518 : f32 to vector<16x64xf32>
    %907 = arith.minimumf %906, %905 : vector<16x64xf32>
    %c0_519 = arith.constant 0 : index
    %c0_520 = arith.constant 0 : index
    %908 = vector.load %arg10[%c0_519, %c0_520] : memref<8x16xf32, #tpu.memory_space<vmem>>, vector<8x16xf32>
    %cst_521 = arith.constant dense<0.000000e+00> : vector<8x64xf32>
    %909 = tpu.matmul %908, %907, %cst_521 {dimension_numbers = #tpu.dot_dimension_numbers<[1], [0], [0], [1], [0, 0, 1, 1], [], []>} : vector<8x16xf32>, vector<16x64xf32>, vector<8x64xf32> -> vector<8x64xf32>
    %c0_522 = arith.constant 0 : index
    %c0_523 = arith.constant 0 : index
    %910 = vector.load %arg11[%c0_522, %c0_523] : memref<8x1xf32, #tpu.memory_space<vmem>>, vector<8x1xf32>
    %911 = vector.broadcast %910 : vector<8x1xf32> to vector<8x64xf32>
    %912 = arith.addf %909, %911 : vector<8x64xf32>
    %c0_524 = arith.constant 0 : index
    %c0_525 = arith.constant 0 : index
    %c192 = arith.constant 192 : index
    %913 = vector.load %arg2[%c0_524, %c0_525, %c192] : memref<1x8x256xf32, #tpu.memory_space<vmem>>, vector<1x8x64xf32>
    %914 = vector.shape_cast %913 : vector<1x8x64xf32> to vector<8x64xf32>
    %915 = arith.addf %912, %914 : vector<8x64xf32>
    %c0_526 = arith.constant 0 : index
    %c0_527 = arith.constant 0 : index
    %c192_528 = arith.constant 192 : index
    %916 = vector.load %arg12[%c0_526, %c0_527, %c192_528] : memref<1x8x256xf32, #tpu.memory_space<vmem>>, vector<1x8x64xf32>
    %917 = vector.shape_cast %916 : vector<1x8x64xf32> to vector<8x64xf32>
    %918 = vector.shape_cast %915 : vector<8x64xf32> to vector<1x8x64xf32>
    tpu.vector_store %arg12[%c0_526, %c0_527, %c192_528], %918 {strides = array<i32>} : memref<1x8x256xf32, #tpu.memory_space<vmem>>, vector<1x8x64xf32>,
    return
  }
  func.func @transform_0(%arg0: i32, %arg1: i32) -> (i32, i32, i32) {
    %c0_i32 = arith.constant 0 : i32
    %c0_i32_0 = arith.constant 0 : i32
    return %arg0, %c0_i32, %arg1 : i32, i32, i32
  }
  func.func @transform_1(%arg0: i32, %arg1: i32) -> (i32, i32, i32) {
    %c1_i32 = arith.constant 1 : i32
    %0 = arith.subi %arg1, %c1_i32 : i32
    %c0_i32 = arith.constant 0 : i32
    %1 = arith.maxsi %0, %c0_i32 : i32
    %c0_i32_0 = arith.constant 0 : i32
    %c0_i32_1 = arith.constant 0 : i32
    return %arg0, %c0_i32_0, %1 : i32, i32, i32
  }
  func.func @transform_2(%arg0: i32, %arg1: i32) -> (i32, i32, i32) {
    %c1_i32 = arith.constant 1 : i32
    %0 = arith.addi %arg1, %c1_i32 : i32
    %c1_i32_0 = arith.constant 1 : i32
    %1 = arith.minsi %0, %c1_i32_0 : i32
    %c0_i32 = arith.constant 0 : i32
    %c0_i32_1 = arith.constant 0 : i32
    return %arg0, %c0_i32, %1 : i32, i32, i32
  }
  func.func @transform_3(%arg0: i32, %arg1: i32) -> (i32, i32, i32) {
    %c0_i32 = arith.constant 0 : i32
    %c0_i32_0 = arith.constant 0 : i32
    %c0_i32_1 = arith.constant 0 : i32
    %c0_i32_2 = arith.constant 0 : i32
    return %c0_i32, %c0_i32_0, %c0_i32_1 : i32, i32, i32
  }
  func.func @transform_4(%arg0: i32, %arg1: i32) -> (i32, i32) {
    %c0_i32 = arith.constant 0 : i32
    %c0_i32_0 = arith.constant 0 : i32
    %c0_i32_1 = arith.constant 0 : i32
    return %c0_i32, %c0_i32_0 : i32, i32
  }
  func.func @transform_5(%arg0: i32, %arg1: i32) -> (i32, i32) {
    %c0_i32 = arith.constant 0 : i32
    %c0_i32_0 = arith.constant 0 : i32
    %c0_i32_1 = arith.constant 0 : i32
    return %c0_i32, %c0_i32_0 : i32, i32
  }
  func.func @transform_6(%arg0: i32, %arg1: i32) -> (i32, i32, i32) {
    %c0_i32 = arith.constant 0 : i32
    %c0_i32_0 = arith.constant 0 : i32
    %c0_i32_1 = arith.constant 0 : i32
    %c0_i32_2 = arith.constant 0 : i32
    return %c0_i32, %c0_i32_0, %c0_i32_1 : i32, i32, i32
  }
  func.func @transform_7(%arg0: i32, %arg1: i32) -> (i32, i32) {
    %c0_i32 = arith.constant 0 : i32
    %c0_i32_0 = arith.constant 0 : i32
    %c0_i32_1 = arith.constant 0 : i32
    return %c0_i32, %c0_i32_0 : i32, i32
  }
  func.func @transform_8(%arg0: i32, %arg1: i32) -> (i32, i32) {
    %c0_i32 = arith.constant 0 : i32
    %c0_i32_0 = arith.constant 0 : i32
    %c0_i32_1 = arith.constant 0 : i32
    return %c0_i32, %c0_i32_0 : i32, i32
  }
  func.func @transform_9(%arg0: i32, %arg1: i32) -> (i32, i32) {
    %c0_i32 = arith.constant 0 : i32
    %c0_i32_0 = arith.constant 0 : i32
    %c0_i32_1 = arith.constant 0 : i32
    return %c0_i32, %c0_i32_0 : i32, i32
  }
  func.func @transform_10(%arg0: i32, %arg1: i32) -> (i32, i32, i32) {
    %c0_i32 = arith.constant 0 : i32
    %c0_i32_0 = arith.constant 0 : i32
    return %arg0, %c0_i32, %arg1 : i32, i32, i32
  }
}

</mosaic_0001>

<llo_original>
// kernel: inverted_residual.1
$region0: #{inverted_residual.1}
  #allocation0 [shape = 'u32[]', space=smem, size = 0x4, offset = 0x4, fixed_abs, tag = 'smem constant byte address 0x4 - core index']
  #allocation1 [shape = 'u32[144,128]{1,0:T(1,128)}', space=vmem, size = 0x12000, scoped, tag = 'internal scratch']
  #allocation2 [shape = 'f32[6,16,64]{2,1,0:T(8,128)}', space=vmem, size = 0xc000, scoped, tag = 'scratch operand']
  %s0 = inlined_call_operand.vmem [shape: f32[2,8,512], index: 0, kind: input, shape index: {}, may-alias: {0,1,2}]
  %s1 = inlined_call_operand.vmem [shape: f32[2,8,512], index: 1, kind: input, shape index: {}, may-alias: {0,1,2}]
  %s2 = inlined_call_operand.vmem [shape: f32[2,8,512], index: 2, kind: input, shape index: {}, may-alias: {0,1,2}]
  %s3 = inlined_call_operand.vmem [shape: f32[9,1,64], index: 3, kind: input, shape index: {}]
  %s4 = inlined_call_operand.vmem [shape: f32[16,8], index: 4, kind: input, shape index: {}]
  %s5 = inlined_call_operand.vmem [shape: f32[16,1], index: 5, kind: input, shape index: {}]
  %s6 = inlined_call_operand.vmem [shape: f32[27,16,1], index: 6, kind: input, shape index: {}]
  %s7 = inlined_call_operand.vmem [shape: f32[16,1], index: 7, kind: input, shape index: {}]
  %s8 = inlined_call_operand.vmem [shape: f32[8,16], index: 8, kind: input, shape index: {}]
  %s9 = inlined_call_operand.vmem [shape: f32[8,1], index: 9, kind: input, shape index: {}]
  %s10 = inlined_call_operand.vmem [shape: f32[2,8,512], index: 10, kind: output, shape index: {}]
  %s11 = sld [smem:[#allocation0]]
  $region89: #{inverted_residual.1} parent=0
    _
  %s13 = ssub.s32 1, %s11
  %s14 = scalar_select 0, %s13, %s11
  loop: start=0, step=1, limit=6
  $region2: #{inverted_residual.1} parent=0 // loop_pre_header
    _
  $region3: #{inverted_residual.1} parent=0 // loop_header
    %s16 = sphi 0, %s20
    %p17 = scmp.ge.s32.totalorder %s16, 6
    %s23 = sphi 0, %s35
    %s24 = sphi 0, %s31
    %s25 = sphi 0, %s23
    %s26 = sphi 0, %s24
    %s27 = sphi 0, %s25
    %s28 = sphi 0, %s26
    %s40 = sphi 0, %s42
    %s43 = sphi 0, %s40
    %s44 = sphi 0, %s43
    %s60 = sphi 0, %s44
    %s74 = sphi 0, %s76
    %s77 = sphi 0, %s74
    %s78 = sphi 0, %s77
    %s94 = sphi 0, %s78
    %s108 = sphi 0, %s110
    %s111 = sphi 0, %s108
    %s112 = sphi 0, %s111
    %s128 = sphi 0, %s112
    %s132 = sphi 0, %s132
    %s134 = sphi 0, %s132
    %s135 = sphi 0, %s134
    %s149 = sphi 0, %s135
    %s153 = sphi 0, %s153
    %s155 = sphi 0, %s153
    %s156 = sphi 0, %s155
    %s170 = sphi 0, %s156
    %s174 = sphi 0, %s174
    %s176 = sphi 0, %s174
    %s177 = sphi 0, %s176
    %s191 = sphi 0, %s177
    %s195 = sphi 0, %s195
    %s197 = sphi 0, %s195
    %s198 = sphi 0, %s197
    %s212 = sphi 0, %s198
    %s216 = sphi 0, %s216
    %s218 = sphi 0, %s216
    %s219 = sphi 0, %s218
    %s233 = sphi 0, %s219
    %s237 = sphi 0, %s237
    %s239 = sphi 0, %s237
    %s240 = sphi 0, %s239
    %s254 = sphi 0, %s240
    %s258 = sphi 0, %s258
    %s260 = sphi 0, %s258
    %s261 = sphi 0, %s260
    %s275 = sphi 0, %s261
    %s283 = sphi 0, %s285
    %s286 = sphi 0, %s283
    %s287 = sphi 0, %s286
    %s303 = sphi 0, %s287
  $region4: #{inverted_residual.1} parent=0 // loop_header_branch
    %19 = sbr.rel (%p17) target = $region8
  $region5: #{inverted_residual.1} parent=0 // loop_body
    %s21 = ssub.s32 %s16, 1
    %s22 = ssub.s32 %s16, 2
    %s29 = sadd.s32 1, %s24
    %p30 = scmp.ge.s32.totalorder %s29, 2
    %s31 = scalar_select %p30, 0, %s29
    %s32 = sadd.s32 1, %s23
    %s33 = scalar_select %p30, %s32, %s23
    %p34 = scmp.ge.s32.totalorder %s33, 2
    %s35 = scalar_select %p34, 0, %s33
    %s36 = ssub.s32 %s23, %s35
    %s37 = ssub.s32 %s24, %s31
    %s38 = sor.u32 %s36, %s37
    %p39 = scmp.eq.s32.totalorder %s38, 0
    %s41 = sadd.s32 %s40, 1
    %s42 = scalar_select %p39, %s40, %s41
    %p45 = pneg %p39
    %p46 = scmp.eq.s32.totalorder %s16, 3
    %p47 = por %p45, %p46
    %p48 = scmp.ne.s32.totalorder %s40, %s43
    %p49 = scmp.eq.s32.totalorder %s16, 0
    %p50 = por %p48, %p49
    %p51 = scmp.ne.s32.totalorder %s40, %s43
    %p52 = scmp.eq.s32.totalorder %s21, 3
    %p53 = por %p51, %p52
    %p54 = scmp.ne.s32.totalorder %s43, %s44
    %p55 = scmp.eq.s32.totalorder %s21, 0
    %p56 = por %p54, %p55
    %p57 = scmp.ne.s32.totalorder %s43, %s44
    %p58 = scmp.eq.s32.totalorder %s22, 3
    %p59 = por %p57, %p58
    %p61 = scmp.ne.s32.totalorder %s44, %s60
    %p62 = scmp.eq.s32.totalorder %s22, 0
    %p63 = por %p61, %p62
    %s64 = ssub.s32 %s24, 1
    %p65 = scmp.gt.s32.totalorder %s64, 0
    %s66 = scalar_select %p65, %s64, 0
    %s67 = ssub.s32 %s31, 1
    %p68 = scmp.gt.s32.totalorder %s67, 0
    %s69 = scalar_select %p68, %s67, 0
    %s70 = ssub.s32 %s23, %s35
    %s71 = ssub.s32 %s66, %s69
    %s72 = sor.u32 %s70, %s71
    %p73 = scmp.eq.s32.totalorder %s72, 0
    %s75 = sadd.s32 %s74, 1
    %s76 = scalar_select %p73, %s74, %s75
    %p79 = pneg %p73
    %p80 = scmp.eq.s32.totalorder %s16, 3
    %p81 = por %p79, %p80
    %p82 = scmp.ne.s32.totalorder %s74, %s77
    %p83 = scmp.eq.s32.totalorder %s16, 0
    %p84 = por %p82, %p83
    %p85 = scmp.ne.s32.totalorder %s74, %s77
    %p86 = scmp.eq.s32.totalorder %s21, 3
    %p87 = por %p85, %p86
    %p88 = scmp.ne.s32.totalorder %s77, %s78
    %p89 = scmp.eq.s32.totalorder %s21, 0
    %p90 = por %p88, %p89
    %p91 = scmp.ne.s32.totalorder %s77, %s78
    %p92 = scmp.eq.s32.totalorder %s22, 3
    %p93 = por %p91, %p92
    %p95 = scmp.ne.s32.totalorder %s78, %s94
    %p96 = scmp.eq.s32.totalorder %s22, 0
    %p97 = por %p95, %p96
    %s98 = sadd.s32 %s24, 1
    %p99 = scmp.lt.s32.totalorder %s98, 1
    %s100 = scalar_select %p99, %s98, 1
    %s101 = sadd.s32 %s31, 1
    %p102 = scmp.lt.s32.totalorder %s101, 1
    %s103 = scalar_select %p102, %s101, 1
    %s104 = ssub.s32 %s23, %s35
    %s105 = ssub.s32 %s100, %s103
    %s106 = sor.u32 %s104, %s105
    %p107 = scmp.eq.s32.totalorder %s106, 0
    %s109 = sadd.s32 %s108, 1
    %s110 = scalar_select %p107, %s108, %s109
    %p113 = pneg %p107
    %p114 = scmp.eq.s32.totalorder %s16, 3
    %p115 = por %p113, %p114
    %p116 = scmp.ne.s32.totalorder %s108, %s111
    %p117 = scmp.eq.s32.totalorder %s16, 0
    %p118 = por %p116, %p117
    %p119 = scmp.ne.s32.totalorder %s108, %s111
    %p120 = scmp.eq.s32.totalorder %s21, 3
    %p121 = por %p119, %p120
    %p122 = scmp.ne.s32.totalorder %s111, %s112
    %p123 = scmp.eq.s32.totalorder %s21, 0
    %p124 = por %p122, %p123
    %p125 = scmp.ne.s32.totalorder %s111, %s112
    %p126 = scmp.eq.s32.totalorder %s22, 3
    %p127 = por %p125, %p126
    %p129 = scmp.ne.s32.totalorder %s112, %s128
    %p130 = scmp.eq.s32.totalorder %s22, 0
    %p131 = por %p129, %p130
    %s133 = sadd.s32 %s132, 1
    %p136 = scmp.eq.s32.totalorder %s16, 3
    %p137 = scmp.ne.s32.totalorder %s132, %s134
    %p138 = scmp.eq.s32.totalorder %s16, 0
    %p139 = por %p137, %p138
    %p140 = scmp.ne.s32.totalorder %s132, %s134
    %p141 = scmp.eq.s32.totalorder %s21, 3
    %p142 = por %p140, %p141
    %p143 = scmp.ne.s32.totalorder %s134, %s135
    %p144 = scmp.eq.s32.totalorder %s21, 0
    %p145 = por %p143, %p144
    %p146 = scmp.ne.s32.totalorder %s134, %s135
    %p147 = scmp.eq.s32.totalorder %s22, 3
    %p148 = por %p146, %p147
    %p150 = scmp.ne.s32.totalorder %s135, %s149
    %p151 = scmp.eq.s32.totalorder %s22, 0
    %p152 = por %p150, %p151
    %s154 = sadd.s32 %s153, 1
    %p157 = scmp.eq.s32.totalorder %s16, 3
    %p158 = scmp.ne.s32.totalorder %s153, %s155
    %p159 = scmp.eq.s32.totalorder %s16, 0
    %p160 = por %p158, %p159
    %p161 = scmp.ne.s32.totalorder %s153, %s155
    %p162 = scmp.eq.s32.totalorder %s21, 3
    %p163 = por %p161, %p162
    %p164 = scmp.ne.s32.totalorder %s155, %s156
    %p165 = scmp.eq.s32.totalorder %s21, 0
    %p166 = por %p164, %p165
    %p167 = scmp.ne.s32.totalorder %s155, %s156
    %p168 = scmp.eq.s32.totalorder %s22, 3
    %p169 = por %p167, %p168
    %p171 = scmp.ne.s32.totalorder %s156, %s170
    %p172 = scmp.eq.s32.totalorder %s22, 0
    %p173 = por %p171, %p172
    %s175 = sadd.s32 %s174, 1
    %p178 = scmp.eq.s32.totalorder %s16, 3
    %p179 = scmp.ne.s32.totalorder %s174, %s176
    %p180 = scmp.eq.s32.totalorder %s16, 0
    %p181 = por %p179, %p180
    %p182 = scmp.ne.s32.totalorder %s174, %s176
    %p183 = scmp.eq.s32.totalorder %s21, 3
    %p184 = por %p182, %p183
    %p185 = scmp.ne.s32.totalorder %s176, %s177
    %p186 = scmp.eq.s32.totalorder %s21, 0
    %p187 = por %p185, %p186
    %p188 = scmp.ne.s32.totalorder %s176, %s177
    %p189 = scmp.eq.s32.totalorder %s22, 3
    %p190 = por %p188, %p189
    %p192 = scmp.ne.s32.totalorder %s177, %s191
    %p193 = scmp.eq.s32.totalorder %s22, 0
    %p194 = por %p192, %p193
    %s196 = sadd.s32 %s195, 1
    %p199 = scmp.eq.s32.totalorder %s16, 3
    %p200 = scmp.ne.s32.totalorder %s195, %s197
    %p201 = scmp.eq.s32.totalorder %s16, 0
    %p202 = por %p200, %p201
    %p203 = scmp.ne.s32.totalorder %s195, %s197
    %p204 = scmp.eq.s32.totalorder %s21, 3
    %p205 = por %p203, %p204
    %p206 = scmp.ne.s32.totalorder %s197, %s198
    %p207 = scmp.eq.s32.totalorder %s21, 0
    %p208 = por %p206, %p207
    %p209 = scmp.ne.s32.totalorder %s197, %s198
    %p210 = scmp.eq.s32.totalorder %s22, 3
    %p211 = por %p209, %p210
    %p213 = scmp.ne.s32.totalorder %s198, %s212
    %p214 = scmp.eq.s32.totalorder %s22, 0
    %p215 = por %p213, %p214
    %s217 = sadd.s32 %s216, 1
    %p220 = scmp.eq.s32.totalorder %s16, 3
    %p221 = scmp.ne.s32.totalorder %s216, %s218
    %p222 = scmp.eq.s32.totalorder %s16, 0
    %p223 = por %p221, %p222
    %p224 = scmp.ne.s32.totalorder %s216, %s218
    %p225 = scmp.eq.s32.totalorder %s21, 3
    %p226 = por %p224, %p225
    %p227 = scmp.ne.s32.totalorder %s218, %s219
    %p228 = scmp.eq.s32.totalorder %s21, 0
    %p229 = por %p227, %p228
    %p230 = scmp.ne.s32.totalorder %s218, %s219
    %p231 = scmp.eq.s32.totalorder %s22, 3
    %p232 = por %p230, %p231
    %p234 = scmp.ne.s32.totalorder %s219, %s233
    %p235 = scmp.eq.s32.totalorder %s22, 0
    %p236 = por %p234, %p235
    %s238 = sadd.s32 %s237, 1
    %p241 = scmp.eq.s32.totalorder %s16, 3
    %p242 = scmp.ne.s32.totalorder %s237, %s239
    %p243 = scmp.eq.s32.totalorder %s16, 0
    %p244 = por %p242, %p243
    %p245 = scmp.ne.s32.totalorder %s237, %s239
    %p246 = scmp.eq.s32.totalorder %s21, 3
    %p247 = por %p245, %p246
    %p248 = scmp.ne.s32.totalorder %s239, %s240
    %p249 = scmp.eq.s32.totalorder %s21, 0
    %p250 = por %p248, %p249
    %p251 = scmp.ne.s32.totalorder %s239, %s240
    %p252 = scmp.eq.s32.totalorder %s22, 3
    %p253 = por %p251, %p252
    %p255 = scmp.ne.s32.totalorder %s240, %s254
    %p256 = scmp.eq.s32.totalorder %s22, 0
    %p257 = por %p255, %p256
    %s259 = sadd.s32 %s258, 1
    %p262 = scmp.eq.s32.totalorder %s16, 3
    %p263 = scmp.ne.s32.totalorder %s258, %s260
    %p264 = scmp.eq.s32.totalorder %s16, 0
    %p265 = por %p263, %p264
    %p266 = scmp.ne.s32.totalorder %s258, %s260
    %p267 = scmp.eq.s32.totalorder %s21, 3
    %p268 = por %p266, %p267
    %p269 = scmp.ne.s32.totalorder %s260, %s261
    %p270 = scmp.eq.s32.totalorder %s21, 0
    %p271 = por %p269, %p270
    %p272 = scmp.ne.s32.totalorder %s260, %s261
    %p273 = scmp.eq.s32.totalorder %s22, 3
    %p274 = por %p272, %p273
    %p276 = scmp.ne.s32.totalorder %s261, %s275
    %p277 = scmp.eq.s32.totalorder %s22, 0
    %p278 = por %p276, %p277
    %s279 = ssub.s32 %s23, %s35
    %s280 = ssub.s32 %s24, %s31
    %s281 = sor.u32 %s279, %s280
    %p282 = scmp.eq.s32.totalorder %s281, 0
    %s284 = sadd.s32 %s283, 1
    %s285 = scalar_select %p282, %s283, %s284
    %p288 = pneg %p282
    %p289 = scmp.eq.s32.totalorder %s16, 3
    %p290 = por %p288, %p289
    %p291 = scmp.ne.s32.totalorder %s283, %s286
    %p292 = scmp.eq.s32.totalorder %s16, 0
    %p293 = por %p291, %p292
    %p294 = scmp.ne.s32.totalorder %s283, %s286
    %p295 = scmp.eq.s32.totalorder %s21, 3
    %p296 = por %p294, %p295
    %p297 = scmp.ne.s32.totalorder %s286, %s287
    %p298 = scmp.eq.s32.totalorder %s21, 0
    %p299 = por %p297, %p298
    %p300 = scmp.ne.s32.totalorder %s286, %s287
    %p301 = scmp.eq.s32.totalorder %s22, 3
    %p302 = por %p300, %p301
    %p304 = scmp.ne.s32.totalorder %s287, %s303
    %p305 = scmp.eq.s32.totalorder %s22, 0
    %p306 = por %p304, %p305
    %p307 = scmp.le.s32.totalorder 1, %s16
    %p308 = scmp.lt.s32.totalorder %s16, 5
    %p309 = pnand %p307, %p308
    %p310 = pneg %p309
    // Predicated region
    $region9: #{inverted_residual.1} parent=5 // pred_check
      _
    $region10: #{inverted_residual.1} parent=5 // pred_check_branch
      %312 = sbr.rel (%p309) target = $region12
    $region11: #{inverted_residual.1} parent=5 // pred_region
      %s313 = ssub.s32 %s16, 1
      // Predicated region
      $region13: #{inverted_residual.1} parent=11 // pred_check
        %p314 = pneg %p145
      $region14: #{inverted_residual.1} parent=11 // pred_check_branch
        %316 = sbr.rel (%p314) target = $region16
      $region15: #{inverted_residual.1} parent=11 // pred_region
        _
      $region16: #{inverted_residual.1} parent=11 // pred_fallthru
        _
      // Predicated region
      $region17: #{inverted_residual.1} parent=11 // pred_check
        %p317 = pneg %p166
      $region18: #{inverted_residual.1} parent=11 // pred_check_branch
        %319 = sbr.rel (%p317) target = $region20
      $region19: #{inverted_residual.1} parent=11 // pred_region
        _
      $region20: #{inverted_residual.1} parent=11 // pred_fallthru
        _
      // Predicated region
      $region21: #{inverted_residual.1} parent=11 // pred_check
        %p320 = pneg %p187
      $region22: #{inverted_residual.1} parent=11 // pred_check_branch
        %322 = sbr.rel (%p320) target = $region24
      $region23: #{inverted_residual.1} parent=11 // pred_region
        _
      $region24: #{inverted_residual.1} parent=11 // pred_fallthru
        _
      // Predicated region
      $region25: #{inverted_residual.1} parent=11 // pred_check
        %p323 = pneg %p208
      $region26: #{inverted_residual.1} parent=11 // pred_check_branch
        %325 = sbr.rel (%p323) target = $region28
      $region27: #{inverted_residual.1} parent=11 // pred_region
        _
      $region28: #{inverted_residual.1} parent=11 // pred_fallthru
        _
      // Predicated region
      $region29: #{inverted_residual.1} parent=11 // pred_check
        %p326 = pneg %p229
      $region30: #{inverted_residual.1} parent=11 // pred_check_branch
        %328 = sbr.rel (%p326) target = $region32
      $region31: #{inverted_residual.1} parent=11 // pred_region
        _
      $region32: #{inverted_residual.1} parent=11 // pred_fallthru
        _
      // Predicated region
      $region33: #{inverted_residual.1} parent=11 // pred_check
        %p329 = pneg %p250
      $region34: #{inverted_residual.1} parent=11 // pred_check_branch
        %331 = sbr.rel (%p329) target = $region36
      $region35: #{inverted_residual.1} parent=11 // pred_region
        _
      $region36: #{inverted_residual.1} parent=11 // pred_fallthru
        _
      // Predicated region
      $region37: #{inverted_residual.1} parent=11 // pred_check
        %p332 = pneg %p271
      $region38: #{inverted_residual.1} parent=11 // pred_check_branch
        %334 = sbr.rel (%p332) target = $region40
      $region39: #{inverted_residual.1} parent=11 // pred_region
        _
      $region40: #{inverted_residual.1} parent=11 // pred_fallthru
        _
    $region12: #{inverted_residual.1} parent=5 // pred_fallthru
      _
    %p335 = scmp.lt.s32.totalorder %s16, 4
    // Predicated region
    $region41: #{inverted_residual.1} parent=5 // pred_check
      %p336 = pneg %p335
    $region42: #{inverted_residual.1} parent=5 // pred_check_branch
      %338 = sbr.rel (%p336) target = $region44
    $region43: #{inverted_residual.1} parent=5 // pred_region
      // Predicated region
      $region45: #{inverted_residual.1} parent=43 // pred_check
        %p339 = pneg %p50
      $region46: #{inverted_residual.1} parent=43 // pred_check_branch
        %341 = sbr.rel (%p339) target = $region48
      $region47: #{inverted_residual.1} parent=43 // pred_region
        %s342 = smul.u32 2, %s24
        %p343 = scmp.lt.s32.totalorder %s23, 1
        %s344 = scalar_select %p343, %s23, 1
        %p345 = scmp.lt.s32.totalorder %s342, 3
        %s346 = scalar_select %p345, %s342, 3
        %s347 = smul.addr %s344, 4
        %s348 = sadd.s32 %s346, %s347
        %s349 = smul.addr %s348, 8
        %s350 = scalar_lea.vmem %s0, %s349
        %s351 = smul.u32 2, %s24
      $region48: #{inverted_residual.1} parent=43 // pred_fallthru
        _
      // Predicated region
      $region49: #{inverted_residual.1} parent=43 // pred_check
        %p352 = pneg %p84
      $region50: #{inverted_residual.1} parent=43 // pred_check_branch
        %354 = sbr.rel (%p352) target = $region52
      $region51: #{inverted_residual.1} parent=43 // pred_region
        %s355 = ssub.s32 %s24, 1
        %p356 = scmp.gt.s32.totalorder %s355, 0
        %s357 = scalar_select %p356, %s355, 0
        %s358 = smul.u32 2, %s357
        %p359 = scmp.lt.s32.totalorder %s23, 1
        %s360 = scalar_select %p359, %s23, 1
        %p361 = scmp.lt.s32.totalorder %s358, 3
        %s362 = scalar_select %p361, %s358, 3
        %s363 = smul.addr %s360, 4
        %s364 = sadd.s32 %s362, %s363
        %s365 = smul.addr %s364, 8
        %s366 = scalar_lea.vmem %s1, %s365
        %s367 = ssub.s32 %s24, 1
        %p368 = scmp.gt.s32.totalorder %s367, 0
        %s369 = scalar_select %p368, %s367, 0
        %s370 = smul.u32 2, %s369
      $region52: #{inverted_residual.1} parent=43 // pred_fallthru
        _
      // Predicated region
      $region53: #{inverted_residual.1} parent=43 // pred_check
        %p371 = pneg %p118
      $region54: #{inverted_residual.1} parent=43 // pred_check_branch
        %373 = sbr.rel (%p371) target = $region56
      $region55: #{inverted_residual.1} parent=43 // pred_region
        %s374 = sadd.s32 %s24, 1
        %p375 = scmp.lt.s32.totalorder %s374, 1
        %s376 = scalar_select %p375, %s374, 1
        %s377 = smul.u32 2, %s376
        %p378 = scmp.lt.s32.totalorder %s23, 1
        %s379 = scalar_select %p378, %s23, 1
        %p380 = scmp.lt.s32.totalorder %s377, 3
        %s381 = scalar_select %p380, %s377, 3
        %s382 = smul.addr %s379, 4
        %s383 = sadd.s32 %s381, %s382
        %s384 = smul.addr %s383, 8
        %s385 = scalar_lea.vmem %s2, %s384
        %s386 = sadd.s32 %s24, 1
        %p387 = scmp.lt.s32.totalorder %s386, 1
        %s388 = scalar_select %p387, %s386, 1
        %s389 = smul.u32 2, %s388
      $region56: #{inverted_residual.1} parent=43 // pred_fallthru
        _
    $region44: #{inverted_residual.1} parent=5 // pred_fallthru
      _
    %p390 = scmp.le.s32.totalorder 1, %s16
    %p391 = scmp.lt.s32.totalorder %s16, 5
    %p392 = pnand %p390, %p391
    %p393 = pneg %p392
    // Predicated region
    $region57: #{inverted_residual.1} parent=5 // pred_check
      _
    $region58: #{inverted_residual.1} parent=5 // pred_check_branch
      %395 = sbr.rel (%p392) target = $region60
    $region59: #{inverted_residual.1} parent=5 // pred_region
      %s396 = ssub.s32 %s16, 1
      %s397 = smul.u32 2, %s26
      %p398 = scmp.lt.s32.totalorder %s25, 1
      %s399 = scalar_select %p398, %s25, 1
      %p400 = scmp.lt.s32.totalorder %s397, 3
      %s401 = scalar_select %p400, %s397, 3
      %s402 = smul.addr %s399, 4
      %s403 = sadd.s32 %s401, %s402
      %s404 = smul.addr %s403, 8
      %s405 = scalar_lea.vmem %s0, %s404
      %p406 = pneg %p56
      %p407 = pneg %p53
      %s408 = ssub.s32 %s26, 1
      %p409 = scmp.gt.s32.totalorder %s408, 0
      %s410 = scalar_select %p409, %s408, 0
      %s411 = smul.u32 2, %s410
      %p412 = scmp.lt.s32.totalorder %s25, 1
      %s413 = scalar_select %p412, %s25, 1
      %p414 = scmp.lt.s32.totalorder %s411, 3
      %s415 = scalar_select %p414, %s411, 3
      %s416 = smul.addr %s413, 4
      %s417 = sadd.s32 %s415, %s416
      %s418 = smul.addr %s417, 8
      %s419 = scalar_lea.vmem %s1, %s418
      %p420 = pneg %p90
      %p421 = pneg %p87
      %s422 = sadd.s32 %s26, 1
      %p423 = scmp.lt.s32.totalorder %s422, 1
      %s424 = scalar_select %p423, %s422, 1
      %s425 = smul.u32 2, %s424
      %p426 = scmp.lt.s32.totalorder %s25, 1
      %s427 = scalar_select %p426, %s25, 1
      %p428 = scmp.lt.s32.totalorder %s425, 3
      %s429 = scalar_select %p428, %s425, 3
      %s430 = smul.addr %s427, 4
      %s431 = sadd.s32 %s429, %s430
      %s432 = smul.addr %s431, 8
      %s433 = scalar_lea.vmem %s2, %s432
      %p434 = pneg %p124
      %p435 = pneg %p121
      %p436 = pneg %p145
      %p437 = pneg %p142
      %p438 = pneg %p166
      %p439 = pneg %p163
      %p440 = pneg %p187
      %p441 = pneg %p184
      %p442 = pneg %p208
      %p443 = pneg %p205
      %p444 = pneg %p229
      %p445 = pneg %p226
      %p446 = pneg %p250
      %p447 = pneg %p247
      %p448 = pneg %p271
      %p449 = pneg %p268
      %p450 = pneg %p299
      %p451 = pneg %p296
      %s452 = smul.u32 2, %s26
      %p453 = scmp.lt.s32.totalorder %s25, 1
      %s454 = scalar_select %p453, %s25, 1
      %p455 = scmp.lt.s32.totalorder %s452, 3
      %s456 = scalar_select %p455, %s452, 3
      %s457 = smul.addr %s454, 4
      %s458 = sadd.s32 %s456, %s457
      %s459 = smul.addr %s458, 8
      %s460 = scalar_lea.vmem %s10, %s459
      %s461 = smul.u32 2, %s26
      %p462 = scmp.lt.s32.totalorder %s25, 1
      %s463 = scalar_select %p462, %s25, 1
      %p464 = scmp.lt.s32.totalorder %s461, 3
      %s465 = scalar_select %p464, %s461, 3
      %s466 = smul.addr %s463, 4
      %s467 = sadd.s32 %s465, %s466
      %s468 = smul.addr %s467, 8
      %s469 = scalar_lea.vmem %s0, %s468
      %s470 = smul.u32 2, %s26
      %s471 = ssub.s32 %s26, 1
      %p472 = scmp.gt.s32.totalorder %s471, 0
      %s473 = scalar_select %p472, %s471, 0
      %s474 = smul.u32 2, %s473
      %p475 = scmp.lt.s32.totalorder %s25, 1
      %s476 = scalar_select %p475, %s25, 1
      %p477 = scmp.lt.s32.totalorder %s474, 3
      %s478 = scalar_select %p477, %s474, 3
      %s479 = smul.addr %s476, 4
      %s480 = sadd.s32 %s478, %s479
      %s481 = smul.addr %s480, 8
      %s482 = scalar_lea.vmem %s1, %s481
      %s483 = ssub.s32 %s26, 1
      %p484 = scmp.gt.s32.totalorder %s483, 0
      %s485 = scalar_select %p484, %s483, 0
      %s486 = smul.u32 2, %s485
      %s487 = sadd.s32 %s26, 1
      %p488 = scmp.lt.s32.totalorder %s487, 1
      %s489 = scalar_select %p488, %s487, 1
      %s490 = smul.u32 2, %s489
      %p491 = scmp.lt.s32.totalorder %s25, 1
      %s492 = scalar_select %p491, %s25, 1
      %p493 = scmp.lt.s32.totalorder %s490, 3
      %s494 = scalar_select %p493, %s490, 3
      %s495 = smul.addr %s492, 4
      %s496 = sadd.s32 %s494, %s495
      %s497 = smul.addr %s496, 8
      %s498 = scalar_lea.vmem %s2, %s497
      %s499 = sadd.s32 %s26, 1
      %p500 = scmp.lt.s32.totalorder %s499, 1
      %s501 = scalar_select %p500, %s499, 1
      %s502 = smul.u32 2, %s501
      %s503 = smul.u32 2, %s26
      %p504 = scmp.lt.s32.totalorder %s25, 1
      %s505 = scalar_select %p504, %s25, 1
      %p506 = scmp.lt.s32.totalorder %s503, 3
      %s507 = scalar_select %p506, %s503, 3
      %s508 = smul.addr %s505, 4
      %s509 = sadd.s32 %s507, %s508
      %s510 = smul.addr %s509, 8
      %s511 = scalar_lea.vmem %s10, %s510
      %s512 = smul.u32 2, %s26
      %v513 = vld [vmem:[%s469] sm:$0xff]
      %v514 = vld [vmem:[%s469 + $0x8] sm:$0xff]
      %v515 = vld [vmem:[%s4] sm:$0xff]
      %v516 = vld [vmem:[%s4 + $0x8] sm:$0xff]
      %v517 = vld [vmem:[%s5] sm:$0xff]
      %v518 = vld [vmem:[%s5 + $0x8] sm:$0xff]
      %520 = vset.pattern.permute.xlu0 0
      %521 = vperm.xlu0 %520, %v517
      %v522 = vpop.permute.xlu0 %521
      %525 = vset.pattern.permute.xlu0 0
      %526 = vperm.xlu0 %525, %v518
      %v527 = vpop.permute.xlu0 %526
      %vm529 = vcmask 64512
      %v531 = vsel %vm529, %v515, 0
      %v534 = vsel %vm529, %v516, 0
      %536 = vmatprep.subr.mxu0 %v514
      %537 = vmatpush1.msra.mxu0 %v513
      %538 = vmatprep.subr.mxu0 0.0
      %539 = vmatpush1.msra.mxu0 0.0
      %540 = vmatprep.subr.mxu0 0.0
      %541 = vmatpush1.msra.mxu0 0.0
      %542 = vmatprep.subr.mxu0 0.0
      %543 = vmatpush1.msra.mxu0 0.0
      %544 = vmatprep.subr.mxu0 0.0
      %545 = vmatpush1.msra.mxu0 0.0
      %546 = vmatprep.subr.mxu0 0.0
      %547 = vmatpush1.msra.mxu0 0.0
      %548 = vmatprep.subr.mxu0 0.0
      %549 = vmatpush1.msra.mxu0 0.0
      %550 = vmatprep.subr.mxu0 0.0
      %551 = vmatpush1.msra.mxu0 0.0
      %552 = vmatprep.subr.mxu0 0.0
      %553 = vmatpush1.msra.mxu0 0.0
      %554 = vmatprep.subr.mxu0 0.0
      %555 = vmatpush1.msra.mxu0 0.0
      %556 = vmatprep.subr.mxu0 0.0
      %557 = vmatpush1.msra.mxu0 0.0
      %558 = vmatprep.subr.mxu0 0.0
      %559 = vmatpush1.msra.mxu0 0.0
      %560 = vmatprep.subr.mxu0 0.0
      %561 = vmatpush1.msra.mxu0 0.0
      %562 = vmatprep.subr.mxu0 0.0
      %563 = vmatpush1.msra.mxu0 0.0
      %564 = vmatprep.subr.mxu0 0.0
      %565 = vmatpush1.msra.mxu0 0.0
      %566 = vmatprep.subr.mxu0 0.0
      %567 = vmatpush1.msra.mxu0 0.0
      %568 = vmatprep.subr.mxu0 0.0
      %569 = vmatpush1.msra.mxu0 0.0
      %570 = vmatprep.subr.mxu0 0.0
      %571 = vmatpush1.msra.mxu0 0.0
      %572 = vmatprep.subr.mxu0 0.0
      %573 = vmatpush1.msra.mxu0 0.0
      %574 = vmatprep.subr.mxu0 0.0
      %575 = vmatpush1.msra.mxu0 0.0
      %576 = vmatprep.subr.mxu0 0.0
      %577 = vmatpush1.msra.mxu0 0.0
      %578 = vmatprep.subr.mxu0 0.0
      %579 = vmatpush1.msra.mxu0 0.0
      %580 = vmatprep.subr.mxu0 0.0
      %581 = vmatpush1.msra.mxu0 0.0
      %582 = vmatprep.subr.mxu0 0.0
      %583 = vmatpush1.msra.mxu0 0.0
      %584 = vmatprep.subr.mxu0 0.0
      %585 = vmatpush1.msra.mxu0 0.0
      %586 = vmatprep.subr.mxu0 0.0
      %587 = vmatpush1.msra.mxu0 0.0
      %588 = vmatprep.subr.mxu0 0.0
      %589 = vmatpush1.msra.mxu0 0.0
      %590 = vmatprep.subr.mxu0 0.0
      %591 = vmatpush1.msra.mxu0 0.0
      %592 = vmatprep.subr.mxu0 0.0
      %593 = vmatpush1.msra.mxu0 0.0
      %594 = vmatprep.subr.mxu0 0.0
      %595 = vmatpush1.msra.mxu0 0.0
      %596 = vmatprep.subr.mxu0 0.0
      %597 = vmatpush1.msra.mxu0 0.0
      %598 = vmatprep.subr.mxu0 0.0
      %599 = vmatpush1.msra.mxu0 0.0
      %600 = vmatprep.mubr.f32.mxu0 0.0
      %601 = vmatmul.mubr.f32.gmra.mrb[0].mxu0 %v531
      %v602 = vpop.f32.mrb[0].mxu0
      %v603 = vadd.f32 %v522, %v602
      %v604 = vpop.f32.mrb[0].mxu0
      %v605 = vadd.f32 %v522, %v604
      %606 = vmatprep.mubr.f32.mxu0 0.0
      %607 = vmatmul.mubr.f32.gmra.mrb[0].mxu0 %v534
      %v608 = vpop.f32.mrb[0].mxu0
      %v609 = vadd.f32 %v527, %v608
      %v610 = vpop.f32.mrb[0].mxu0
      %v611 = vadd.f32 %v527, %v610
      %612 = vdwg.mxu0
      %v613 = vmax.f32 %v603, 0.0
      %v614 = vmax.f32 %v605, 0.0
      %v615 = vmax.f32 %v609, 0.0
      %v616 = vmax.f32 %v611, 0.0
      %v617 = vmin.f32 %v613, 6.0
      %v618 = vmin.f32 %v614, 6.0
      %v619 = vmin.f32 %v615, 6.0
      %v620 = vmin.f32 %v616, 6.0
      %s621 = scalar_lea.vmem [#allocation2], 16
      %vm622 = vcmask 523264
      %623 = vst.msk [vmem:[%s621] sm:$0xff] %vm622, %v617
      %624 = vst.msk [vmem:[%s621 + $0x8] sm:$0xff] %vm622, %v619
      %627 = vrot.lane.b32.xlu0 %v617, 64
      %v628 = vpop.permute.xlu0 %627
      %629 = vrot.lane.b32.xlu0 %v619, 64
      %v630 = vpop.permute.xlu0 %629
      %s633 = scalar_lea.vmem [#allocation2], 32
      %634 = vst.msk [vmem:[%s633] sm:$0xff] %vm622, %v628
      %635 = vst.msk [vmem:[%s633 + $0x8] sm:$0xff] %vm622, %v630
      %s636 = scalar_lea.vmem [#allocation2], 48
      %637 = vst.msk [vmem:[%s636] sm:$0xff] %vm622, %v618
      %638 = vst.msk [vmem:[%s636 + $0x8] sm:$0xff] %vm622, %v620
      %641 = vrot.lane.b32.xlu0 %v618, 64
      %v642 = vpop.permute.xlu0 %641
      %643 = vrot.lane.b32.xlu0 %v620, 64
      %v644 = vpop.permute.xlu0 %643
      %s647 = scalar_lea.vmem [#allocation2], 64
      %648 = vst.msk [vmem:[%s647] sm:$0xff] %vm622, %v642
      %649 = vst.msk [vmem:[%s647 + $0x8] sm:$0xff] %vm622, %v644
      %p650 = scmp.gt.s32.totalorder %s26, 0
      // Predicated region
      $region61: #{inverted_residual.1} parent=59 // pred_check
        %p651 = pneg %p650
      $region62: #{inverted_residual.1} parent=59 // pred_check_branch
        %653 = sbr.rel (%p651) target = $region64
      $region63: #{inverted_residual.1} parent=59 // pred_region
        %v654 = vld [vmem:[%s482 + $0x8] sm:$0xff]
        %v655 = vld [vmem:[%s4] sm:$0xff]
        %v656 = vld [vmem:[%s4 + $0x8] sm:$0xff]
        %v657 = vld [vmem:[%s5] sm:$0xff]
        %v658 = vld [vmem:[%s5 + $0x8] sm:$0xff]
        %660 = vset.pattern.permute.xlu0 0
        %661 = vperm.xlu0 %660, %v657
        %v662 = vpop.permute.xlu0 %661
        %665 = vset.pattern.permute.xlu0 0
        %666 = vperm.xlu0 %665, %v658
        %v667 = vpop.permute.xlu0 %666
        %670 = vrot.lane.b32.xlu0 %v654, 64
        %v671 = vpop.permute.xlu0 %670
        %v674 = vsel %vm529, %v655, 0
        %v677 = vsel %vm529, %v656, 0
        %679 = vmatprep.subr.mxu0 0.0
        %680 = vmatpush1.msra.mxu0 %v671
        %681 = vmatprep.subr.mxu0 0.0
        %682 = vmatpush1.msra.mxu0 0.0
        %683 = vmatprep.subr.mxu0 0.0
        %684 = vmatpush1.msra.mxu0 0.0
        %685 = vmatprep.subr.mxu0 0.0
        %686 = vmatpush1.msra.mxu0 0.0
        %687 = vmatprep.subr.mxu0 0.0
        %688 = vmatpush1.msra.mxu0 0.0
        %689 = vmatprep.subr.mxu0 0.0
        %690 = vmatpush1.msra.mxu0 0.0
        %691 = vmatprep.subr.mxu0 0.0
        %692 = vmatpush1.msra.mxu0 0.0
        %693 = vmatprep.subr.mxu0 0.0
        %694 = vmatpush1.msra.mxu0 0.0
        %695 = vmatprep.subr.mxu0 0.0
        %696 = vmatpush1.msra.mxu0 0.0
        %697 = vmatprep.subr.mxu0 0.0
        %698 = vmatpush1.msra.mxu0 0.0
        %699 = vmatprep.subr.mxu0 0.0
        %700 = vmatpush1.msra.mxu0 0.0
        %701 = vmatprep.subr.mxu0 0.0
        %702 = vmatpush1.msra.mxu0 0.0
        %703 = vmatprep.subr.mxu0 0.0
        %704 = vmatpush1.msra.mxu0 0.0
        %705 = vmatprep.subr.mxu0 0.0
        %706 = vmatpush1.msra.mxu0 0.0
        %707 = vmatprep.subr.mxu0 0.0
        %708 = vmatpush1.msra.mxu0 0.0
        %709 = vmatprep.subr.mxu0 0.0
        %710 = vmatpush1.msra.mxu0 0.0
        %711 = vmatprep.subr.mxu0 0.0
        %712 = vmatpush1.msra.mxu0 0.0
        %713 = vmatprep.subr.mxu0 0.0
        %714 = vmatpush1.msra.mxu0 0.0
        %715 = vmatprep.subr.mxu0 0.0
        %716 = vmatpush1.msra.mxu0 0.0
        %717 = vmatprep.subr.mxu0 0.0
        %718 = vmatpush1.msra.mxu0 0.0
        %719 = vmatprep.subr.mxu0 0.0
        %720 = vmatpush1.msra.mxu0 0.0
        %721 = vmatprep.subr.mxu0 0.0
        %722 = vmatpush1.msra.mxu0 0.0
        %723 = vmatprep.subr.mxu0 0.0
        %724 = vmatpush1.msra.mxu0 0.0
        %725 = vmatprep.subr.mxu0 0.0
        %726 = vmatpush1.msra.mxu0 0.0
        %727 = vmatprep.subr.mxu0 0.0
        %728 = vmatpush1.msra.mxu0 0.0
        %729 = vmatprep.subr.mxu0 0.0
        %730 = vmatpush1.msra.mxu0 0.0
        %731 = vmatprep.subr.mxu0 0.0
        %732 = vmatpush1.msra.mxu0 0.0
        %733 = vmatprep.subr.mxu0 0.0
        %734 = vmatpush1.msra.mxu0 0.0
        %735 = vmatprep.subr.mxu0 0.0
        %736 = vmatpush1.msra.mxu0 0.0
        %737 = vmatprep.subr.mxu0 0.0
        %738 = vmatpush1.msra.mxu0 0.0
        %739 = vmatprep.subr.mxu0 0.0
        %740 = vmatpush1.msra.mxu0 0.0
        %741 = vmatprep.subr.mxu0 0.0
        %742 = vmatpush1.msra.mxu0 0.0
        %743 = vmatprep.mubr.f32.mxu0 0.0
        %744 = vmatmul.mubr.f32.gmra.mrb[0].mxu0 %v674
        %v745 = vpop.f32.mrb[0].mxu0
        %v746 = vadd.f32 %v662, %v745
        %v747 = vpop.f32.mrb[0].mxu0
        %748 = vmatprep.mubr.f32.mxu0 0.0
        %749 = vmatmul.mubr.f32.gmra.mrb[0].mxu0 %v677
        %v750 = vpop.f32.mrb[0].mxu0
        %v751 = vadd.f32 %v667, %v750
        %v752 = vpop.f32.mrb[0].mxu0
        %753 = vdwg.mxu0
        %v754 = vmax.f32 %v746, 0.0
        %v755 = vmax.f32 %v751, 0.0
        %v756 = vmin.f32 %v754, 6.0
        %v757 = vmin.f32 %v755, 6.0
        %758 = vst.msk [vmem:[#allocation2] sm:$0xff] %vm622, %v756
        %759 = vst.msk [vmem:[#allocation2 + $0x8] sm:$0xff] %vm622, %v757
      $region64: #{inverted_residual.1} parent=59 // pred_fallthru
        _
      %p760 = scmp.eq.s32.totalorder %s26, 0
      // Predicated region
      $region65: #{inverted_residual.1} parent=59 // pred_check
        %p761 = pneg %p760
      $region66: #{inverted_residual.1} parent=59 // pred_check_branch
        %763 = sbr.rel (%p761) target = $region68
      $region67: #{inverted_residual.1} parent=59 // pred_region
        %764 = vst.msk [vmem:[#allocation2] sm:$0xff] %vm622, 0.0
        %765 = vst.msk [vmem:[#allocation2 + $0x8] sm:$0xff] %vm622, 0.0
      $region68: #{inverted_residual.1} parent=59 // pred_fallthru
        _
      %p766 = scmp.lt.s32.totalorder %s26, 1
      // Predicated region
      $region69: #{inverted_residual.1} parent=59 // pred_check
        %p767 = pneg %p766
      $region70: #{inverted_residual.1} parent=59 // pred_check_branch
        %769 = sbr.rel (%p767) target = $region72
      $region71: #{inverted_residual.1} parent=59 // pred_region
        %v770 = vld [vmem:[%s498] sm:$0xff]
        %v771 = vld [vmem:[%s4] sm:$0xff]
        %v772 = vld [vmem:[%s4 + $0x8] sm:$0xff]
        %v773 = vld [vmem:[%s5] sm:$0xff]
        %v774 = vld [vmem:[%s5 + $0x8] sm:$0xff]
        %776 = vset.pattern.permute.xlu0 0
        %777 = vperm.xlu0 %776, %v773
        %v778 = vpop.permute.xlu0 %777
        %781 = vset.pattern.permute.xlu0 0
        %782 = vperm.xlu0 %781, %v774
        %v783 = vpop.permute.xlu0 %782
        %v786 = vsel %vm529, %v771, 0
        %v789 = vsel %vm529, %v772, 0
        %791 = vmatprep.subr.mxu0 0.0
        %792 = vmatpush1.msra.mxu0 %v770
        %793 = vmatprep.subr.mxu0 0.0
        %794 = vmatpush1.msra.mxu0 0.0
        %795 = vmatprep.subr.mxu0 0.0
        %796 = vmatpush1.msra.mxu0 0.0
        %797 = vmatprep.subr.mxu0 0.0
        %798 = vmatpush1.msra.mxu0 0.0
        %799 = vmatprep.subr.mxu0 0.0
        %800 = vmatpush1.msra.mxu0 0.0
        %801 = vmatprep.subr.mxu0 0.0
        %802 = vmatpush1.msra.mxu0 0.0
        %803 = vmatprep.subr.mxu0 0.0
        %804 = vmatpush1.msra.mxu0 0.0
        %805 = vmatprep.subr.mxu0 0.0
        %806 = vmatpush1.msra.mxu0 0.0
        %807 = vmatprep.subr.mxu0 0.0
        %808 = vmatpush1.msra.mxu0 0.0
        %809 = vmatprep.subr.mxu0 0.0
        %810 = vmatpush1.msra.mxu0 0.0
        %811 = vmatprep.subr.mxu0 0.0
        %812 = vmatpush1.msra.mxu0 0.0
        %813 = vmatprep.subr.mxu0 0.0
        %814 = vmatpush1.msra.mxu0 0.0
        %815 = vmatprep.subr.mxu0 0.0
        %816 = vmatpush1.msra.mxu0 0.0
        %817 = vmatprep.subr.mxu0 0.0
        %818 = vmatpush1.msra.mxu0 0.0
        %819 = vmatprep.subr.mxu0 0.0
        %820 = vmatpush1.msra.mxu0 0.0
        %821 = vmatprep.subr.mxu0 0.0
        %822 = vmatpush1.msra.mxu0 0.0
        %823 = vmatprep.subr.mxu0 0.0
        %824 = vmatpush1.msra.mxu0 0.0
        %825 = vmatprep.subr.mxu0 0.0
        %826 = vmatpush1.msra.mxu0 0.0
        %827 = vmatprep.subr.mxu0 0.0
        %828 = vmatpush1.msra.mxu0 0.0
        %829 = vmatprep.subr.mxu0 0.0
        %830 = vmatpush1.msra.mxu0 0.0
        %831 = vmatprep.subr.mxu0 0.0
        %832 = vmatpush1.msra.mxu0 0.0
        %833 = vmatprep.subr.mxu0 0.0
        %834 = vmatpush1.msra.mxu0 0.0
        %835 = vmatprep.subr.mxu0 0.0
        %836 = vmatpush1.msra.mxu0 0.0
        %837 = vmatprep.subr.mxu0 0.0
        %838 = vmatpush1.msra.mxu0 0.0
        %839 = vmatprep.subr.mxu0 0.0
        %840 = vmatpush1.msra.mxu0 0.0
        %841 = vmatprep.subr.mxu0 0.0
        %842 = vmatpush1.msra.mxu0 0.0
        %843 = vmatprep.subr.mxu0 0.0
        %844 = vmatpush1.msra.mxu0 0.0
        %845 = vmatprep.subr.mxu0 0.0
        %846 = vmatpush1.msra.mxu0 0.0
        %847 = vmatprep.subr.mxu0 0.0
        %848 = vmatpush1.msra.mxu0 0.0
        %849 = vmatprep.subr.mxu0 0.0
        %850 = vmatpush1.msra.mxu0 0.0
        %851 = vmatprep.subr.mxu0 0.0
        %852 = vmatpush1.msra.mxu0 0.0
        %853 = vmatprep.subr.mxu0 0.0
        %854 = vmatpush1.msra.mxu0 0.0
        %855 = vmatprep.mubr.f32.mxu0 0.0
        %856 = vmatmul.mubr.f32.gmra.mrb[0].mxu0 %v786
        %v857 = vpop.f32.mrb[0].mxu0
        %v858 = vadd.f32 %v778, %v857
        %v859 = vpop.f32.mrb[0].mxu0
        %860 = vmatprep.mubr.f32.mxu0 0.0
        %861 = vmatmul.mubr.f32.gmra.mrb[0].mxu0 %v789
        %v862 = vpop.f32.mrb[0].mxu0
        %v863 = vadd.f32 %v783, %v862
        %v864 = vpop.f32.mrb[0].mxu0
        %865 = vdwg.mxu0
        %v866 = vmax.f32 %v858, 0.0
        %v867 = vmax.f32 %v863, 0.0
        %v868 = vmin.f32 %v866, 6.0
        %v869 = vmin.f32 %v867, 6.0
        %s870 = scalar_lea.vmem [#allocation2], 80
        %871 = vst.msk [vmem:[%s870] sm:$0xff] %vm622, %v868
        %872 = vst.msk [vmem:[%s870 + $0x8] sm:$0xff] %vm622, %v869
      $region72: #{inverted_residual.1} parent=59 // pred_fallthru
        _
      %p873 = scmp.eq.s32.totalorder %s26, 1
      // Predicated region
      $region73: #{inverted_residual.1} parent=59 // pred_check
        %p874 = pneg %p873
      $region74: #{inverted_residual.1} parent=59 // pred_check_branch
        %876 = sbr.rel (%p874) target = $region76
      $region75: #{inverted_residual.1} parent=59 // pred_region
        %s877 = scalar_lea.vmem [#allocation2], 80
        %878 = vst.msk [vmem:[%s877] sm:$0xff] %vm622, 0.0
        %879 = vst.msk [vmem:[%s877 + $0x8] sm:$0xff] %vm622, 0.0
      $region76: #{inverted_residual.1} parent=59 // pred_fallthru
        _
      %v880 = vld [vmem:[#allocation2] sm:$0xff]
      %v881 = vld [vmem:[#allocation2 + $0x8] sm:$0xff]
      %v882 = vld [vmem:[%s621] sm:$0xff]
      %v883 = vld [vmem:[%s621 + $0x8] sm:$0xff]
      %v884 = vld [vmem:[%s633] sm:$0xff]
      %v885 = vld [vmem:[%s633 + $0x8] sm:$0xff]
      %v886 = vld [vmem:[%s6] sm:$0xff]
      %v887 = vld [vmem:[%s6 + $0x8] sm:$0xff]
      %889 = vset.pattern.permute.xlu0 0
      %890 = vperm.xlu0 %889, %v886
      %v891 = vpop.permute.xlu0 %890
      %894 = vset.pattern.permute.xlu0 0
      %895 = vperm.xlu0 %894, %v887
      %v896 = vpop.permute.xlu0 %895
      %v898 = vmul.f32 %v891, %v880
      %v899 = vmul.f32 %v896, %v881
      %s900 = scalar_lea.vmem %s6, 144
      %v901 = vld [vmem:[%s900] sm:$0xff]
      %v902 = vld [vmem:[%s900 + $0x8] sm:$0xff]
      %904 = vset.pattern.permute.xlu0 0
      %905 = vperm.xlu0 %904, %v901
      %v906 = vpop.permute.xlu0 %905
      %909 = vset.pattern.permute.xlu0 0
      %910 = vperm.xlu0 %909, %v902
      %v911 = vpop.permute.xlu0 %910
      %v913 = vmul.f32 %v906, %v882
      %v914 = vmul.f32 %v911, %v883
      %v915 = vadd.f32 %v898, %v913
      %v916 = vadd.f32 %v899, %v914
      %s917 = scalar_lea.vmem %s6, 288
      %v918 = vld [vmem:[%s917] sm:$0xff]
      %v919 = vld [vmem:[%s917 + $0x8] sm:$0xff]
      %921 = vset.pattern.permute.xlu0 0
      %922 = vperm.xlu0 %921, %v918
      %v923 = vpop.permute.xlu0 %922
      %926 = vset.pattern.permute.xlu0 0
      %927 = vperm.xlu0 %926, %v919
      %v928 = vpop.permute.xlu0 %927
      %v930 = vmul.f32 %v923, %v884
      %v931 = vmul.f32 %v928, %v885
      %v932 = vadd.f32 %v915, %v930
      %v933 = vadd.f32 %v916, %v931
      %936 = vrot.lane.b32.xlu0 %v932, 73
      %v937 = vpop.permute.xlu0 %936
      %938 = vrot.lane.b32.xlu0 %v933, 73
      %v939 = vpop.permute.xlu0 %938
      %942 = vrot.lane.b32.xlu0 %v932, 9
      %v943 = vpop.permute.xlu0 %942
      %944 = vrot.lane.b32.xlu0 %v933, 9
      %v945 = vpop.permute.xlu0 %944
      %vm948 = vcmask 72704
      %v949 = vsel %vm948, %v937, %v943
      %v950 = vsel %vm948, %v939, %v945
      %v951 = vld [vmem:[%s3] sm:$0x1]
      %v953 = vlaneseq
      %v954 = vshrl.u32 %v953, 7
      %v955 = vsub.s32 0, %v954
      %v956 = vrot.slane %v951, %v955
      %v958 = vmul.f32 %v956, %v949
      %v959 = vmul.f32 %v956, %v950
      %v960 = vadd.f32 %v958, 0.0
      %v961 = vadd.f32 %v959, 0.0
      %s962 = scalar_lea.vmem %s6, 16
      %v963 = vld [vmem:[%s962] sm:$0xff]
      %v964 = vld [vmem:[%s962 + $0x8] sm:$0xff]
      %966 = vset.pattern.permute.xlu0 0
      %967 = vperm.xlu0 %966, %v963
      %v968 = vpop.permute.xlu0 %967
      %971 = vset.pattern.permute.xlu0 0
      %972 = vperm.xlu0 %971, %v964
      %v973 = vpop.permute.xlu0 %972
      %v975 = vmul.f32 %v968, %v880
      %v976 = vmul.f32 %v973, %v881
      %s977 = scalar_lea.vmem %s6, 160
      %v978 = vld [vmem:[%s977] sm:$0xff]
      %v979 = vld [vmem:[%s977 + $0x8] sm:$0xff]
      %981 = vset.pattern.permute.xlu0 0
      %982 = vperm.xlu0 %981, %v978
      %v983 = vpop.permute.xlu0 %982
      %986 = vset.pattern.permute.xlu0 0
      %987 = vperm.xlu0 %986, %v979
      %v988 = vpop.permute.xlu0 %987
      %v990 = vmul.f32 %v983, %v882
      %v991 = vmul.f32 %v988, %v883
      %v992 = vadd.f32 %v975, %v990
      %v993 = vadd.f32 %v976, %v991
      %s994 = scalar_lea.vmem %s6, 304
      %v995 = vld [vmem:[%s994] sm:$0xff]
      %v996 = vld [vmem:[%s994 + $0x8] sm:$0xff]
      %998 = vset.pattern.permute.xlu0 0
      %999 = vperm.xlu0 %998, %v995
      %v1000 = vpop.permute.xlu0 %999
      %1003 = vset.pattern.permute.xlu0 0
      %1004 = vperm.xlu0 %1003, %v996
      %v1005 = vpop.permute.xlu0 %1004
      %v1007 = vmul.f32 %v1000, %v884
      %v1008 = vmul.f32 %v1005, %v885
      %v1009 = vadd.f32 %v992, %v1007
      %v1010 = vadd.f32 %v993, %v1008
      %1013 = vrot.lane.b32.xlu0 %v1009, 72
      %v1014 = vpop.permute.xlu0 %1013
      %1015 = vrot.lane.b32.xlu0 %v1010, 72
      %v1016 = vpop.permute.xlu0 %1015
      %1019 = vrot.lane.b32.xlu0 %v1009, 8
      %v1020 = vpop.permute.xlu0 %1019
      %1021 = vrot.lane.b32.xlu0 %v1010, 8
      %v1022 = vpop.permute.xlu0 %1021
      %v1025 = vsel %vm529, %v1014, %v1020
      %v1026 = vsel %vm529, %v1016, %v1022
      %s1027 = scalar_lea.vmem %s3, 1
      %v1028 = vld [vmem:[%s1027] sm:$0x1]
      %v1030 = vlaneseq
      %v1031 = vshrl.u32 %v1030, 7
      %v1032 = vsub.s32 0, %v1031
      %v1033 = vrot.slane %v1028, %v1032
      %v1035 = vmul.f32 %v1033, %v1025
      %v1036 = vmul.f32 %v1033, %v1026
      %v1037 = vadd.f32 %v960, %v1035
      %v1038 = vadd.f32 %v961, %v1036
      %s1039 = scalar_lea.vmem %s6, 32
      %v1040 = vld [vmem:[%s1039] sm:$0xff]
      %v1041 = vld [vmem:[%s1039 + $0x8] sm:$0xff]
      %1043 = vset.pattern.permute.xlu0 0
      %1044 = vperm.xlu0 %1043, %v1040
      %v1045 = vpop.permute.xlu0 %1044
      %1048 = vset.pattern.permute.xlu0 0
      %1049 = vperm.xlu0 %1048, %v1041
      %v1050 = vpop.permute.xlu0 %1049
      %v1052 = vmul.f32 %v1045, %v880
      %v1053 = vmul.f32 %v1050, %v881
      %s1054 = scalar_lea.vmem %s6, 176
      %v1055 = vld [vmem:[%s1054] sm:$0xff]
      %v1056 = vld [vmem:[%s1054 + $0x8] sm:$0xff]
      %1058 = vset.pattern.permute.xlu0 0
      %1059 = vperm.xlu0 %1058, %v1055
      %v1060 = vpop.permute.xlu0 %1059
      %1063 = vset.pattern.permute.xlu0 0
      %1064 = vperm.xlu0 %1063, %v1056
      %v1065 = vpop.permute.xlu0 %1064
      %v1067 = vmul.f32 %v1060, %v882
      %v1068 = vmul.f32 %v1065, %v883
      %v1069 = vadd.f32 %v1052, %v1067
      %v1070 = vadd.f32 %v1053, %v1068
      %s1071 = scalar_lea.vmem %s6, 320
      %v1072 = vld [vmem:[%s1071] sm:$0xff]
      %v1073 = vld [vmem:[%s1071 + $0x8] sm:$0xff]
      %1075 = vset.pattern.permute.xlu0 0
      %1076 = vperm.xlu0 %1075, %v1072
      %v1077 = vpop.permute.xlu0 %1076
      %1080 = vset.pattern.permute.xlu0 0
      %1081 = vperm.xlu0 %1080, %v1073
      %v1082 = vpop.permute.xlu0 %1081
      %v1084 = vmul.f32 %v1077, %v884
      %v1085 = vmul.f32 %v1082, %v885
      %v1086 = vadd.f32 %v1069, %v1084
      %v1087 = vadd.f32 %v1070, %v1085
      %1090 = vrot.lane.b32.xlu0 %v1086, 71
      %v1091 = vpop.permute.xlu0 %1090
      %1092 = vrot.lane.b32.xlu0 %v1087, 71
      %v1093 = vpop.permute.xlu0 %1092
      %1096 = vrot.lane.b32.xlu0 %v1086, 7
      %v1097 = vpop.permute.xlu0 %1096
      %1098 = vrot.lane.b32.xlu0 %v1087, 7
      %v1099 = vpop.permute.xlu0 %1098
      %vm1102 = vcmask 56320
      %v1103 = vsel %vm1102, %v1091, %v1097
      %v1104 = vsel %vm1102, %v1093, %v1099
      %s1105 = scalar_lea.vmem %s3, 2
      %v1106 = vld [vmem:[%s1105] sm:$0x1]
      %v1108 = vlaneseq
      %v1109 = vshrl.u32 %v1108, 7
      %v1110 = vsub.s32 0, %v1109
      %v1111 = vrot.slane %v1106, %v1110
      %v1113 = vmul.f32 %v1111, %v1103
      %v1114 = vmul.f32 %v1111, %v1104
      %v1115 = vadd.f32 %v1037, %v1113
      %v1116 = vadd.f32 %v1038, %v1114
      %s1117 = scalar_lea.vmem %s6, 48
      %v1118 = vld [vmem:[%s1117] sm:$0xff]
      %v1119 = vld [vmem:[%s1117 + $0x8] sm:$0xff]
      %1121 = vset.pattern.permute.xlu0 0
      %1122 = vperm.xlu0 %1121, %v1118
      %v1123 = vpop.permute.xlu0 %1122
      %1126 = vset.pattern.permute.xlu0 0
      %1127 = vperm.xlu0 %1126, %v1119
      %v1128 = vpop.permute.xlu0 %1127
      %v1130 = vmul.f32 %v1123, %v880
      %v1131 = vmul.f32 %v1128, %v881
      %s1132 = scalar_lea.vmem %s6, 192
      %v1133 = vld [vmem:[%s1132] sm:$0xff]
      %v1134 = vld [vmem:[%s1132 + $0x8] sm:$0xff]
      %1136 = vset.pattern.permute.xlu0 0
      %1137 = vperm.xlu0 %1136, %v1133
      %v1138 = vpop.permute.xlu0 %1137
      %1141 = vset.pattern.permute.xlu0 0
      %1142 = vperm.xlu0 %1141, %v1134
      %v1143 = vpop.permute.xlu0 %1142
      %v1145 = vmul.f32 %v1138, %v882
      %v1146 = vmul.f32 %v1143, %v883
      %v1147 = vadd.f32 %v1130, %v1145
      %v1148 = vadd.f32 %v1131, %v1146
      %s1149 = scalar_lea.vmem %s6, 336
      %v1150 = vld [vmem:[%s1149] sm:$0xff]
      %v1151 = vld [vmem:[%s1149 + $0x8] sm:$0xff]
      %1153 = vset.pattern.permute.xlu0 0
      %1154 = vperm.xlu0 %1153, %v1150
      %v1155 = vpop.permute.xlu0 %1154
      %1158 = vset.pattern.permute.xlu0 0
      %1159 = vperm.xlu0 %1158, %v1151
      %v1160 = vpop.permute.xlu0 %1159
      %v1162 = vmul.f32 %v1155, %v884
      %v1163 = vmul.f32 %v1160, %v885
      %v1164 = vadd.f32 %v1147, %v1162
      %v1165 = vadd.f32 %v1148, %v1163
      %1168 = vrot.lane.b32.xlu0 %v1164, 65
      %v1169 = vpop.permute.xlu0 %1168
      %1170 = vrot.lane.b32.xlu0 %v1165, 65
      %v1171 = vpop.permute.xlu0 %1170
      %1174 = vrot.lane.b32.xlu0 %v1164, 1
      %v1175 = vpop.permute.xlu0 %1174
      %1176 = vrot.lane.b32.xlu0 %v1165, 1
      %v1177 = vpop.permute.xlu0 %1176
      %vm1180 = vcmask 7168
      %v1181 = vsel %vm1180, %v1169, %v1175
      %v1182 = vsel %vm1180, %v1171, %v1177
      %s1183 = scalar_lea.vmem %s3, 3
      %v1184 = vld [vmem:[%s1183] sm:$0x1]
      %v1186 = vlaneseq
      %v1187 = vshrl.u32 %v1186, 7
      %v1188 = vsub.s32 0, %v1187
      %v1189 = vrot.slane %v1184, %v1188
      %v1191 = vmul.f32 %v1189, %v1181
      %v1192 = vmul.f32 %v1189, %v1182
      %v1193 = vadd.f32 %v1115, %v1191
      %v1194 = vadd.f32 %v1116, %v1192
      %s1195 = scalar_lea.vmem %s6, 64
      %v1196 = vld [vmem:[%s1195] sm:$0xff]
      %v1197 = vld [vmem:[%s1195 + $0x8] sm:$0xff]
      %1199 = vset.pattern.permute.xlu0 0
      %1200 = vperm.xlu0 %1199, %v1196
      %v1201 = vpop.permute.xlu0 %1200
      %1204 = vset.pattern.permute.xlu0 0
      %1205 = vperm.xlu0 %1204, %v1197
      %v1206 = vpop.permute.xlu0 %1205
      %v1208 = vmul.f32 %v1201, %v880
      %v1209 = vmul.f32 %v1206, %v881
      %s1210 = scalar_lea.vmem %s6, 208
      %v1211 = vld [vmem:[%s1210] sm:$0xff]
      %v1212 = vld [vmem:[%s1210 + $0x8] sm:$0xff]
      %1214 = vset.pattern.permute.xlu0 0
      %1215 = vperm.xlu0 %1214, %v1211
      %v1216 = vpop.permute.xlu0 %1215
      %1219 = vset.pattern.permute.xlu0 0
      %1220 = vperm.xlu0 %1219, %v1212
      %v1221 = vpop.permute.xlu0 %1220
      %v1223 = vmul.f32 %v1216, %v882
      %v1224 = vmul.f32 %v1221, %v883
      %v1225 = vadd.f32 %v1208, %v1223
      %v1226 = vadd.f32 %v1209, %v1224
      %s1227 = scalar_lea.vmem %s6, 352
      %v1228 = vld [vmem:[%s1227] sm:$0xff]
      %v1229 = vld [vmem:[%s1227 + $0x8] sm:$0xff]
      %1231 = vset.pattern.permute.xlu0 0
      %1232 = vperm.xlu0 %1231, %v1228
      %v1233 = vpop.permute.xlu0 %1232
      %1236 = vset.pattern.permute.xlu0 0
      %1237 = vperm.xlu0 %1236, %v1229
      %v1238 = vpop.permute.xlu0 %1237
      %v1240 = vmul.f32 %v1233, %v884
      %v1241 = vmul.f32 %v1238, %v885
      %v1242 = vadd.f32 %v1225, %v1240
      %v1243 = vadd.f32 %v1226, %v1241
      %s1244 = scalar_lea.vmem %s3, 4
      %v1245 = vld [vmem:[%s1244] sm:$0x1]
      %v1247 = vlaneseq
      %v1248 = vshrl.u32 %v1247, 7
      %v1249 = vsub.s32 0, %v1248
      %v1250 = vrot.slane %v1245, %v1249
      %v1252 = vmul.f32 %v1250, %v1242
      %v1253 = vmul.f32 %v1250, %v1243
      %v1254 = vadd.f32 %v1193, %v1252
      %v1255 = vadd.f32 %v1194, %v1253
      %s1256 = scalar_lea.vmem %s6, 80
      %v1257 = vld [vmem:[%s1256] sm:$0xff]
      %v1258 = vld [vmem:[%s1256 + $0x8] sm:$0xff]
      %1260 = vset.pattern.permute.xlu0 0
      %1261 = vperm.xlu0 %1260, %v1257
      %v1262 = vpop.permute.xlu0 %1261
      %1265 = vset.pattern.permute.xlu0 0
      %1266 = vperm.xlu0 %1265, %v1258
      %v1267 = vpop.permute.xlu0 %1266
      %v1269 = vmul.f32 %v1262, %v880
      %v1270 = vmul.f32 %v1267, %v881
      %s1271 = scalar_lea.vmem %s6, 224
      %v1272 = vld [vmem:[%s1271] sm:$0xff]
      %v1273 = vld [vmem:[%s1271 + $0x8] sm:$0xff]
      %1275 = vset.pattern.permute.xlu0 0
      %1276 = vperm.xlu0 %1275, %v1272
      %v1277 = vpop.permute.xlu0 %1276
      %1280 = vset.pattern.permute.xlu0 0
      %1281 = vperm.xlu0 %1280, %v1273
      %v1282 = vpop.permute.xlu0 %1281
      %v1284 = vmul.f32 %v1277, %v882
      %v1285 = vmul.f32 %v1282, %v883
      %v1286 = vadd.f32 %v1269, %v1284
      %v1287 = vadd.f32 %v1270, %v1285
      %s1288 = scalar_lea.vmem %s6, 368
      %v1289 = vld [vmem:[%s1288] sm:$0xff]
      %v1290 = vld [vmem:[%s1288 + $0x8] sm:$0xff]
      %1292 = vset.pattern.permute.xlu0 0
      %1293 = vperm.xlu0 %1292, %v1289
      %v1294 = vpop.permute.xlu0 %1293
      %1297 = vset.pattern.permute.xlu0 0
      %1298 = vperm.xlu0 %1297, %v1290
      %v1299 = vpop.permute.xlu0 %1298
      %v1301 = vmul.f32 %v1294, %v884
      %v1302 = vmul.f32 %v1299, %v885
      %v1303 = vadd.f32 %v1286, %v1301
      %v1304 = vadd.f32 %v1287, %v1302
      %1307 = vrot.lane.b32.xlu0 %v1303, 127
      %v1308 = vpop.permute.xlu0 %1307
      %1309 = vrot.lane.b32.xlu0 %v1304, 127
      %v1310 = vpop.permute.xlu0 %1309
      %1313 = vrot.lane.b32.xlu0 %v1303, 63
      %v1314 = vpop.permute.xlu0 %1313
      %1315 = vrot.lane.b32.xlu0 %v1304, 63
      %v1316 = vpop.permute.xlu0 %1315
      %vm1319 = vcmask 515072
      %v1320 = vsel %vm1319, %v1308, %v1314
      %v1321 = vsel %vm1319, %v1310, %v1316
      %s1322 = scalar_lea.vmem %s3, 5
      %v1323 = vld [vmem:[%s1322] sm:$0x1]
      %v1325 = vlaneseq
      %v1326 = vshrl.u32 %v1325, 7
      %v1327 = vsub.s32 0, %v1326
      %v1328 = vrot.slane %v1323, %v1327
      %v1330 = vmul.f32 %v1328, %v1320
      %v1331 = vmul.f32 %v1328, %v1321
      %v1332 = vadd.f32 %v1254, %v1330
      %v1333 = vadd.f32 %v1255, %v1331
      %s1334 = scalar_lea.vmem %s6, 96
      %v1335 = vld [vmem:[%s1334] sm:$0xff]
      %v1336 = vld [vmem:[%s1334 + $0x8] sm:$0xff]
      %1338 = vset.pattern.permute.xlu0 0
      %1339 = vperm.xlu0 %1338, %v1335
      %v1340 = vpop.permute.xlu0 %1339
      %1343 = vset.pattern.permute.xlu0 0
      %1344 = vperm.xlu0 %1343, %v1336
      %v1345 = vpop.permute.xlu0 %1344
      %v1347 = vmul.f32 %v1340, %v880
      %v1348 = vmul.f32 %v1345, %v881
      %s1349 = scalar_lea.vmem %s6, 240
      %v1350 = vld [vmem:[%s1349] sm:$0xff]
      %v1351 = vld [vmem:[%s1349 + $0x8] sm:$0xff]
      %1353 = vset.pattern.permute.xlu0 0
      %1354 = vperm.xlu0 %1353, %v1350
      %v1355 = vpop.permute.xlu0 %1354
      %1358 = vset.pattern.permute.xlu0 0
      %1359 = vperm.xlu0 %1358, %v1351
      %v1360 = vpop.permute.xlu0 %1359
      %v1362 = vmul.f32 %v1355, %v882
      %v1363 = vmul.f32 %v1360, %v883
      %v1364 = vadd.f32 %v1347, %v1362
      %v1365 = vadd.f32 %v1348, %v1363
      %s1366 = scalar_lea.vmem %s6, 384
      %v1367 = vld [vmem:[%s1366] sm:$0xff]
      %v1368 = vld [vmem:[%s1366 + $0x8] sm:$0xff]
      %1370 = vset.pattern.permute.xlu0 0
      %1371 = vperm.xlu0 %1370, %v1367
      %v1372 = vpop.permute.xlu0 %1371
      %1375 = vset.pattern.permute.xlu0 0
      %1376 = vperm.xlu0 %1375, %v1368
      %v1377 = vpop.permute.xlu0 %1376
      %v1379 = vmul.f32 %v1372, %v884
      %v1380 = vmul.f32 %v1377, %v885
      %v1381 = vadd.f32 %v1364, %v1379
      %v1382 = vadd.f32 %v1365, %v1380
      %1385 = vrot.lane.b32.xlu0 %v1381, 121
      %v1386 = vpop.permute.xlu0 %1385
      %1387 = vrot.lane.b32.xlu0 %v1382, 121
      %v1388 = vpop.permute.xlu0 %1387
      %1391 = vrot.lane.b32.xlu0 %v1381, 57
      %v1392 = vpop.permute.xlu0 %1391
      %1393 = vrot.lane.b32.xlu0 %v1382, 57
      %v1394 = vpop.permute.xlu0 %1393
      %vm1397 = vcmask 465920
      %v1398 = vsel %vm1397, %v1386, %v1392
      %v1399 = vsel %vm1397, %v1388, %v1394
      %s1400 = scalar_lea.vmem %s3, 6
      %v1401 = vld [vmem:[%s1400] sm:$0x1]
      %v1403 = vlaneseq
      %v1404 = vshrl.u32 %v1403, 7
      %v1405 = vsub.s32 0, %v1404
      %v1406 = vrot.slane %v1401, %v1405
      %v1408 = vmul.f32 %v1406, %v1398
      %v1409 = vmul.f32 %v1406, %v1399
      %v1410 = vadd.f32 %v1332, %v1408
      %v1411 = vadd.f32 %v1333, %v1409
      %s1412 = scalar_lea.vmem %s6, 112
      %v1413 = vld [vmem:[%s1412] sm:$0xff]
      %v1414 = vld [vmem:[%s1412 + $0x8] sm:$0xff]
      %1416 = vset.pattern.permute.xlu0 0
      %1417 = vperm.xlu0 %1416, %v1413
      %v1418 = vpop.permute.xlu0 %1417
      %1421 = vset.pattern.permute.xlu0 0
      %1422 = vperm.xlu0 %1421, %v1414
      %v1423 = vpop.permute.xlu0 %1422
      %v1425 = vmul.f32 %v1418, %v880
      %v1426 = vmul.f32 %v1423, %v881
      %s1427 = scalar_lea.vmem %s6, 256
      %v1428 = vld [vmem:[%s1427] sm:$0xff]
      %v1429 = vld [vmem:[%s1427 + $0x8] sm:$0xff]
      %1431 = vset.pattern.permute.xlu0 0
      %1432 = vperm.xlu0 %1431, %v1428
      %v1433 = vpop.permute.xlu0 %1432
      %1436 = vset.pattern.permute.xlu0 0
      %1437 = vperm.xlu0 %1436, %v1429
      %v1438 = vpop.permute.xlu0 %1437
      %v1440 = vmul.f32 %v1433, %v882
      %v1441 = vmul.f32 %v1438, %v883
      %v1442 = vadd.f32 %v1425, %v1440
      %v1443 = vadd.f32 %v1426, %v1441
      %s1444 = scalar_lea.vmem %s6, 400
      %v1445 = vld [vmem:[%s1444] sm:$0xff]
      %v1446 = vld [vmem:[%s1444 + $0x8] sm:$0xff]
      %1448 = vset.pattern.permute.xlu0 0
      %1449 = vperm.xlu0 %1448, %v1445
      %v1450 = vpop.permute.xlu0 %1449
      %1453 = vset.pattern.permute.xlu0 0
      %1454 = vperm.xlu0 %1453, %v1446
      %v1455 = vpop.permute.xlu0 %1454
      %v1457 = vmul.f32 %v1450, %v884
      %v1458 = vmul.f32 %v1455, %v885
      %v1459 = vadd.f32 %v1442, %v1457
      %v1460 = vadd.f32 %v1443, %v1458
      %1463 = vrot.lane.b32.xlu0 %v1459, 120
      %v1464 = vpop.permute.xlu0 %1463
      %1465 = vrot.lane.b32.xlu0 %v1460, 120
      %v1466 = vpop.permute.xlu0 %1465
      %1469 = vrot.lane.b32.xlu0 %v1459, 56
      %v1470 = vpop.permute.xlu0 %1469
      %1471 = vrot.lane.b32.xlu0 %v1460, 56
      %v1472 = vpop.permute.xlu0 %1471
      %vm1475 = vcmask 457728
      %v1476 = vsel %vm1475, %v1464, %v1470
      %v1477 = vsel %vm1475, %v1466, %v1472
      %s1478 = scalar_lea.vmem %s3, 7
      %v1479 = vld [vmem:[%s1478] sm:$0x1]
      %v1481 = vlaneseq
      %v1482 = vshrl.u32 %v1481, 7
      %v1483 = vsub.s32 0, %v1482
      %v1484 = vrot.slane %v1479, %v1483
      %v1486 = vmul.f32 %v1484, %v1476
      %v1487 = vmul.f32 %v1484, %v1477
      %v1488 = vadd.f32 %v1410, %v1486
      %v1489 = vadd.f32 %v1411, %v1487
      %s1490 = scalar_lea.vmem %s6, 128
      %v1491 = vld [vmem:[%s1490] sm:$0xff]
      %v1492 = vld [vmem:[%s1490 + $0x8] sm:$0xff]
      %1494 = vset.pattern.permute.xlu0 0
      %1495 = vperm.xlu0 %1494, %v1491
      %v1496 = vpop.permute.xlu0 %1495
      %1499 = vset.pattern.permute.xlu0 0
      %1500 = vperm.xlu0 %1499, %v1492
      %v1501 = vpop.permute.xlu0 %1500
      %v1503 = vmul.f32 %v1496, %v880
      %v1504 = vmul.f32 %v1501, %v881
      %s1505 = scalar_lea.vmem %s6, 272
      %v1506 = vld [vmem:[%s1505] sm:$0xff]
      %v1507 = vld [vmem:[%s1505 + $0x8] sm:$0xff]
      %1509 = vset.pattern.permute.xlu0 0
      %1510 = vperm.xlu0 %1509, %v1506
      %v1511 = vpop.permute.xlu0 %1510
      %1514 = vset.pattern.permute.xlu0 0
      %1515 = vperm.xlu0 %1514, %v1507
      %v1516 = vpop.permute.xlu0 %1515
      %v1518 = vmul.f32 %v1511, %v882
      %v1519 = vmul.f32 %v1516, %v883
      %v1520 = vadd.f32 %v1503, %v1518
      %v1521 = vadd.f32 %v1504, %v1519
      %s1522 = scalar_lea.vmem %s6, 416
      %v1523 = vld [vmem:[%s1522] sm:$0xff]
      %v1524 = vld [vmem:[%s1522 + $0x8] sm:$0xff]
      %1526 = vset.pattern.permute.xlu0 0
      %1527 = vperm.xlu0 %1526, %v1523
      %v1528 = vpop.permute.xlu0 %1527
      %1531 = vset.pattern.permute.xlu0 0
      %1532 = vperm.xlu0 %1531, %v1524
      %v1533 = vpop.permute.xlu0 %1532
      %v1535 = vmul.f32 %v1528, %v884
      %v1536 = vmul.f32 %v1533, %v885
      %v1537 = vadd.f32 %v1520, %v1535
      %v1538 = vadd.f32 %v1521, %v1536
      %1541 = vrot.lane.b32.xlu0 %v1537, 119
      %v1542 = vpop.permute.xlu0 %1541
      %1543 = vrot.lane.b32.xlu0 %v1538, 119
      %v1544 = vpop.permute.xlu0 %1543
      %1547 = vrot.lane.b32.xlu0 %v1537, 55
      %v1548 = vpop.permute.xlu0 %1547
      %1549 = vrot.lane.b32.xlu0 %v1538, 55
      %v1550 = vpop.permute.xlu0 %1549
      %vm1553 = vcmask 449536
      %v1554 = vsel %vm1553, %v1542, %v1548
      %v1555 = vsel %vm1553, %v1544, %v1550
      %s1556 = scalar_lea.vmem %s3, 8
      %v1557 = vld [vmem:[%s1556] sm:$0x1]
      %v1559 = vlaneseq
      %v1560 = vshrl.u32 %v1559, 7
      %v1561 = vsub.s32 0, %v1560
      %v1562 = vrot.slane %v1557, %v1561
      %v1564 = vmul.f32 %v1562, %v1554
      %v1565 = vmul.f32 %v1562, %v1555
      %v1566 = vadd.f32 %v1488, %v1564
      %v1567 = vadd.f32 %v1489, %v1565
      %v1568 = vld [vmem:[%s7] sm:$0xff]
      %v1569 = vld [vmem:[%s7 + $0x8] sm:$0xff]
      %1571 = vset.pattern.permute.xlu0 0
      %1572 = vperm.xlu0 %1571, %v1568
      %v1573 = vpop.permute.xlu0 %1572
      %1576 = vset.pattern.permute.xlu0 0
      %1577 = vperm.xlu0 %1576, %v1569
      %v1578 = vpop.permute.xlu0 %1577
      %v1580 = vadd.f32 %v1566, %v1573
      %v1581 = vadd.f32 %v1567, %v1578
      %v1582 = vmax.f32 %v1580, 0.0
      %v1583 = vmax.f32 %v1581, 0.0
      %v1584 = vmin.f32 %v1582, 6.0
      %v1585 = vmin.f32 %v1583, 6.0
      %v1586 = vld [vmem:[%s8] sm:$0xff]
      %v1587 = vld [vmem:[%s9] sm:$0xff]
      %1589 = vset.pattern.permute.xlu0 0
      %1590 = vperm.xlu0 %1589, %v1587
      %v1591 = vpop.permute.xlu0 %1590
      %vm1593 = vcmask 130048
      %v1595 = vsel %vm1593, %v1586, 0
      %1597 = vmatprep.subr.mxu0 0.0
      %1598 = vmatpush1.msra.mxu0 %v1584
      %1599 = vmatprep.subr.mxu0 0.0
      %1600 = vmatpush1.msra.mxu0 %v1585
      %1601 = vmatprep.subr.mxu0 0.0
      %1602 = vmatpush1.msra.mxu0 0.0
      %1603 = vmatprep.subr.mxu0 0.0
      %1604 = vmatpush1.msra.mxu0 0.0
      %1605 = vmatprep.subr.mxu0 0.0
      %1606 = vmatpush1.msra.mxu0 0.0
      %1607 = vmatprep.subr.mxu0 0.0
      %1608 = vmatpush1.msra.mxu0 0.0
      %1609 = vmatprep.subr.mxu0 0.0
      %1610 = vmatpush1.msra.mxu0 0.0
      %1611 = vmatprep.subr.mxu0 0.0
      %1612 = vmatpush1.msra.mxu0 0.0
      %1613 = vmatprep.subr.mxu0 0.0
      %1614 = vmatpush1.msra.mxu0 0.0
      %1615 = vmatprep.subr.mxu0 0.0
      %1616 = vmatpush1.msra.mxu0 0.0
      %1617 = vmatprep.subr.mxu0 0.0
      %1618 = vmatpush1.msra.mxu0 0.0
      %1619 = vmatprep.subr.mxu0 0.0
      %1620 = vmatpush1.msra.mxu0 0.0
      %1621 = vmatprep.subr.mxu0 0.0
      %1622 = vmatpush1.msra.mxu0 0.0
      %1623 = vmatprep.subr.mxu0 0.0
      %1624 = vmatpush1.msra.mxu0 0.0
      %1625 = vmatprep.subr.mxu0 0.0
      %1626 = vmatpush1.msra.mxu0 0.0
      %1627 = vmatprep.subr.mxu0 0.0
      %1628 = vmatpush1.msra.mxu0 0.0
      %1629 = vmatprep.subr.mxu0 0.0
      %1630 = vmatpush1.msra.mxu0 0.0
      %1631 = vmatprep.subr.mxu0 0.0
      %1632 = vmatpush1.msra.mxu0 0.0
      %1633 = vmatprep.subr.mxu0 0.0
      %1634 = vmatpush1.msra.mxu0 0.0
      %1635 = vmatprep.subr.mxu0 0.0
      %1636 = vmatpush1.msra.mxu0 0.0
      %1637 = vmatprep.subr.mxu0 0.0
      %1638 = vmatpush1.msra.mxu0 0.0
      %1639 = vmatprep.subr.mxu0 0.0
      %1640 = vmatpush1.msra.mxu0 0.0
      %1641 = vmatprep.subr.mxu0 0.0
      %1642 = vmatpush1.msra.mxu0 0.0
      %1643 = vmatprep.subr.mxu0 0.0
      %1644 = vmatpush1.msra.mxu0 0.0
      %1645 = vmatprep.subr.mxu0 0.0
      %1646 = vmatpush1.msra.mxu0 0.0
      %1647 = vmatprep.subr.mxu0 0.0
      %1648 = vmatpush1.msra.mxu0 0.0
      %1649 = vmatprep.subr.mxu0 0.0
      %1650 = vmatpush1.msra.mxu0 0.0
      %1651 = vmatprep.subr.mxu0 0.0
      %1652 = vmatpush1.msra.mxu0 0.0
      %1653 = vmatprep.subr.mxu0 0.0
      %1654 = vmatpush1.msra.mxu0 0.0
      %1655 = vmatprep.subr.mxu0 0.0
      %1656 = vmatpush1.msra.mxu0 0.0
      %1657 = vmatprep.subr.mxu0 0.0
      %1658 = vmatpush1.msra.mxu0 0.0
      %1659 = vmatprep.subr.mxu0 0.0
      %1660 = vmatpush1.msra.mxu0 0.0
      %1661 = vmatprep.mubr.f32.mxu0 0.0
      %1662 = vmatmul.mubr.f32.gmra.mrb[0].mxu0 %v1595
      %v1663 = vpop.f32.mrb[0].mxu0
      %v1664 = vadd.f32 %v1591, %v1663
      %v1665 = vpop.f32.mrb[0].mxu0
      %1666 = vdwg.mxu0
      %v1667 = vld [vmem:[%s469] sm:$0xff]
      %v1668 = vadd.f32 %v1664, %v1667
      %1669 = vst.msk [vmem:[%s511] sm:$0xff] %vm622, %v1668
      %v1670 = vld [vmem:[%s621] sm:$0xff]
      %v1671 = vld [vmem:[%s621 + $0x8] sm:$0xff]
      %v1672 = vld [vmem:[%s633] sm:$0xff]
      %v1673 = vld [vmem:[%s633 + $0x8] sm:$0xff]
      %v1674 = vld [vmem:[%s636] sm:$0xff]
      %v1675 = vld [vmem:[%s636 + $0x8] sm:$0xff]
      %v1676 = vld [vmem:[%s6] sm:$0xff]
      %v1677 = vld [vmem:[%s6 + $0x8] sm:$0xff]
      %1679 = vset.pattern.permute.xlu0 0
      %1680 = vperm.xlu0 %1679, %v1676
      %v1681 = vpop.permute.xlu0 %1680
      %1684 = vset.pattern.permute.xlu0 0
      %1685 = vperm.xlu0 %1684, %v1677
      %v1686 = vpop.permute.xlu0 %1685
      %v1688 = vmul.f32 %v1681, %v1670
      %v1689 = vmul.f32 %v1686, %v1671
      %v1690 = vld [vmem:[%s900] sm:$0xff]
      %v1691 = vld [vmem:[%s900 + $0x8] sm:$0xff]
      %1693 = vset.pattern.permute.xlu0 0
      %1694 = vperm.xlu0 %1693, %v1690
      %v1695 = vpop.permute.xlu0 %1694
      %1698 = vset.pattern.permute.xlu0 0
      %1699 = vperm.xlu0 %1698, %v1691
      %v1700 = vpop.permute.xlu0 %1699
      %v1702 = vmul.f32 %v1695, %v1672
      %v1703 = vmul.f32 %v1700, %v1673
      %v1704 = vadd.f32 %v1688, %v1702
      %v1705 = vadd.f32 %v1689, %v1703
      %v1706 = vld [vmem:[%s917] sm:$0xff]
      %v1707 = vld [vmem:[%s917 + $0x8] sm:$0xff]
      %1709 = vset.pattern.permute.xlu0 0
      %1710 = vperm.xlu0 %1709, %v1706
      %v1711 = vpop.permute.xlu0 %1710
      %1714 = vset.pattern.permute.xlu0 0
      %1715 = vperm.xlu0 %1714, %v1707
      %v1716 = vpop.permute.xlu0 %1715
      %v1718 = vmul.f32 %v1711, %v1674
      %v1719 = vmul.f32 %v1716, %v1675
      %v1720 = vadd.f32 %v1704, %v1718
      %v1721 = vadd.f32 %v1705, %v1719
      %1724 = vrot.lane.b32.xlu0 %v1720, 73
      %v1725 = vpop.permute.xlu0 %1724
      %1726 = vrot.lane.b32.xlu0 %v1721, 73
      %v1727 = vpop.permute.xlu0 %1726
      %1730 = vrot.lane.b32.xlu0 %v1720, 9
      %v1731 = vpop.permute.xlu0 %1730
      %1732 = vrot.lane.b32.xlu0 %v1721, 9
      %v1733 = vpop.permute.xlu0 %1732
      %v1736 = vsel %vm948, %v1725, %v1731
      %v1737 = vsel %vm948, %v1727, %v1733
      %v1738 = vld [vmem:[%s3] sm:$0x1]
      %v1740 = vlaneseq
      %v1741 = vshrl.u32 %v1740, 7
      %v1742 = vsub.s32 0, %v1741
      %v1743 = vrot.slane %v1738, %v1742
      %v1745 = vmul.f32 %v1743, %v1736
      %v1746 = vmul.f32 %v1743, %v1737
      %v1747 = vadd.f32 %v1745, 0.0
      %v1748 = vadd.f32 %v1746, 0.0
      %v1749 = vld [vmem:[%s962] sm:$0xff]
      %v1750 = vld [vmem:[%s962 + $0x8] sm:$0xff]
      %1752 = vset.pattern.permute.xlu0 0
      %1753 = vperm.xlu0 %1752, %v1749
      %v1754 = vpop.permute.xlu0 %1753
      %1757 = vset.pattern.permute.xlu0 0
      %1758 = vperm.xlu0 %1757, %v1750
      %v1759 = vpop.permute.xlu0 %1758
      %v1761 = vmul.f32 %v1754, %v1670
      %v1762 = vmul.f32 %v1759, %v1671
      %v1763 = vld [vmem:[%s977] sm:$0xff]
      %v1764 = vld [vmem:[%s977 + $0x8] sm:$0xff]
      %1766 = vset.pattern.permute.xlu0 0
      %1767 = vperm.xlu0 %1766, %v1763
      %v1768 = vpop.permute.xlu0 %1767
      %1771 = vset.pattern.permute.xlu0 0
      %1772 = vperm.xlu0 %1771, %v1764
      %v1773 = vpop.permute.xlu0 %1772
      %v1775 = vmul.f32 %v1768, %v1672
      %v1776 = vmul.f32 %v1773, %v1673
      %v1777 = vadd.f32 %v1761, %v1775
      %v1778 = vadd.f32 %v1762, %v1776
      %v1779 = vld [vmem:[%s994] sm:$0xff]
      %v1780 = vld [vmem:[%s994 + $0x8] sm:$0xff]
      %1782 = vset.pattern.permute.xlu0 0
      %1783 = vperm.xlu0 %1782, %v1779
      %v1784 = vpop.permute.xlu0 %1783
      %1787 = vset.pattern.permute.xlu0 0
      %1788 = vperm.xlu0 %1787, %v1780
      %v1789 = vpop.permute.xlu0 %1788
      %v1791 = vmul.f32 %v1784, %v1674
      %v1792 = vmul.f32 %v1789, %v1675
      %v1793 = vadd.f32 %v1777, %v1791
      %v1794 = vadd.f32 %v1778, %v1792
      %1797 = vrot.lane.b32.xlu0 %v1793, 72
      %v1798 = vpop.permute.xlu0 %1797
      %1799 = vrot.lane.b32.xlu0 %v1794, 72
      %v1800 = vpop.permute.xlu0 %1799
      %1803 = vrot.lane.b32.xlu0 %v1793, 8
      %v1804 = vpop.permute.xlu0 %1803
      %1805 = vrot.lane.b32.xlu0 %v1794, 8
      %v1806 = vpop.permute.xlu0 %1805
      %v1809 = vsel %vm529, %v1798, %v1804
      %v1810 = vsel %vm529, %v1800, %v1806
      %v1811 = vld [vmem:[%s1027] sm:$0x1]
      %v1813 = vlaneseq
      %v1814 = vshrl.u32 %v1813, 7
      %v1815 = vsub.s32 0, %v1814
      %v1816 = vrot.slane %v1811, %v1815
      %v1818 = vmul.f32 %v1816, %v1809
      %v1819 = vmul.f32 %v1816, %v1810
      %v1820 = vadd.f32 %v1747, %v1818
      %v1821 = vadd.f32 %v1748, %v1819
      %v1822 = vld [vmem:[%s1039] sm:$0xff]
      %v1823 = vld [vmem:[%s1039 + $0x8] sm:$0xff]
      %1825 = vset.pattern.permute.xlu0 0
      %1826 = vperm.xlu0 %1825, %v1822
      %v1827 = vpop.permute.xlu0 %1826
      %1830 = vset.pattern.permute.xlu0 0
      %1831 = vperm.xlu0 %1830, %v1823
      %v1832 = vpop.permute.xlu0 %1831
      %v1834 = vmul.f32 %v1827, %v1670
      %v1835 = vmul.f32 %v1832, %v1671
      %v1836 = vld [vmem:[%s1054] sm:$0xff]
      %v1837 = vld [vmem:[%s1054 + $0x8] sm:$0xff]
      %1839 = vset.pattern.permute.xlu0 0
      %1840 = vperm.xlu0 %1839, %v1836
      %v1841 = vpop.permute.xlu0 %1840
      %1844 = vset.pattern.permute.xlu0 0
      %1845 = vperm.xlu0 %1844, %v1837
      %v1846 = vpop.permute.xlu0 %1845
      %v1848 = vmul.f32 %v1841, %v1672
      %v1849 = vmul.f32 %v1846, %v1673
      %v1850 = vadd.f32 %v1834, %v1848
      %v1851 = vadd.f32 %v1835, %v1849
      %v1852 = vld [vmem:[%s1071] sm:$0xff]
      %v1853 = vld [vmem:[%s1071 + $0x8] sm:$0xff]
      %1855 = vset.pattern.permute.xlu0 0
      %1856 = vperm.xlu0 %1855, %v1852
      %v1857 = vpop.permute.xlu0 %1856
      %1860 = vset.pattern.permute.xlu0 0
      %1861 = vperm.xlu0 %1860, %v1853
      %v1862 = vpop.permute.xlu0 %1861
      %v1864 = vmul.f32 %v1857, %v1674
      %v1865 = vmul.f32 %v1862, %v1675
      %v1866 = vadd.f32 %v1850, %v1864
      %v1867 = vadd.f32 %v1851, %v1865
      %1870 = vrot.lane.b32.xlu0 %v1866, 71
      %v1871 = vpop.permute.xlu0 %1870
      %1872 = vrot.lane.b32.xlu0 %v1867, 71
      %v1873 = vpop.permute.xlu0 %1872
      %1876 = vrot.lane.b32.xlu0 %v1866, 7
      %v1877 = vpop.permute.xlu0 %1876
      %1878 = vrot.lane.b32.xlu0 %v1867, 7
      %v1879 = vpop.permute.xlu0 %1878
      %v1882 = vsel %vm1102, %v1871, %v1877
      %v1883 = vsel %vm1102, %v1873, %v1879
      %v1884 = vld [vmem:[%s1105] sm:$0x1]
      %v1886 = vlaneseq
      %v1887 = vshrl.u32 %v1886, 7
      %v1888 = vsub.s32 0, %v1887
      %v1889 = vrot.slane %v1884, %v1888
      %v1891 = vmul.f32 %v1889, %v1882
      %v1892 = vmul.f32 %v1889, %v1883
      %v1893 = vadd.f32 %v1820, %v1891
      %v1894 = vadd.f32 %v1821, %v1892
      %v1895 = vld [vmem:[%s1117] sm:$0xff]
      %v1896 = vld [vmem:[%s1117 + $0x8] sm:$0xff]
      %1898 = vset.pattern.permute.xlu0 0
      %1899 = vperm.xlu0 %1898, %v1895
      %v1900 = vpop.permute.xlu0 %1899
      %1903 = vset.pattern.permute.xlu0 0
      %1904 = vperm.xlu0 %1903, %v1896
      %v1905 = vpop.permute.xlu0 %1904
      %v1907 = vmul.f32 %v1900, %v1670
      %v1908 = vmul.f32 %v1905, %v1671
      %v1909 = vld [vmem:[%s1132] sm:$0xff]
      %v1910 = vld [vmem:[%s1132 + $0x8] sm:$0xff]
      %1912 = vset.pattern.permute.xlu0 0
      %1913 = vperm.xlu0 %1912, %v1909
      %v1914 = vpop.permute.xlu0 %1913
      %1917 = vset.pattern.permute.xlu0 0
      %1918 = vperm.xlu0 %1917, %v1910
      %v1919 = vpop.permute.xlu0 %1918
      %v1921 = vmul.f32 %v1914, %v1672
      %v1922 = vmul.f32 %v1919, %v1673
      %v1923 = vadd.f32 %v1907, %v1921
      %v1924 = vadd.f32 %v1908, %v1922
      %v1925 = vld [vmem:[%s1149] sm:$0xff]
      %v1926 = vld [vmem:[%s1149 + $0x8] sm:$0xff]
      %1928 = vset.pattern.permute.xlu0 0
      %1929 = vperm.xlu0 %1928, %v1925
      %v1930 = vpop.permute.xlu0 %1929
      %1933 = vset.pattern.permute.xlu0 0
      %1934 = vperm.xlu0 %1933, %v1926
      %v1935 = vpop.permute.xlu0 %1934
      %v1937 = vmul.f32 %v1930, %v1674
      %v1938 = vmul.f32 %v1935, %v1675
      %v1939 = vadd.f32 %v1923, %v1937
      %v1940 = vadd.f32 %v1924, %v1938
      %1943 = vrot.lane.b32.xlu0 %v1939, 65
      %v1944 = vpop.permute.xlu0 %1943
      %1945 = vrot.lane.b32.xlu0 %v1940, 65
      %v1946 = vpop.permute.xlu0 %1945
      %1949 = vrot.lane.b32.xlu0 %v1939, 1
      %v1950 = vpop.permute.xlu0 %1949
      %1951 = vrot.lane.b32.xlu0 %v1940, 1
      %v1952 = vpop.permute.xlu0 %1951
      %v1955 = vsel %vm1180, %v1944, %v1950
      %v1956 = vsel %vm1180, %v1946, %v1952
      %v1957 = vld [vmem:[%s1183] sm:$0x1]
      %v1959 = vlaneseq
      %v1960 = vshrl.u32 %v1959, 7
      %v1961 = vsub.s32 0, %v1960
      %v1962 = vrot.slane %v1957, %v1961
      %v1964 = vmul.f32 %v1962, %v1955
      %v1965 = vmul.f32 %v1962, %v1956
      %v1966 = vadd.f32 %v1893, %v1964
      %v1967 = vadd.f32 %v1894, %v1965
      %v1968 = vld [vmem:[%s1195] sm:$0xff]
      %v1969 = vld [vmem:[%s1195 + $0x8] sm:$0xff]
      %1971 = vset.pattern.permute.xlu0 0
      %1972 = vperm.xlu0 %1971, %v1968
      %v1973 = vpop.permute.xlu0 %1972
      %1976 = vset.pattern.permute.xlu0 0
      %1977 = vperm.xlu0 %1976, %v1969
      %v1978 = vpop.permute.xlu0 %1977
      %v1980 = vmul.f32 %v1973, %v1670
      %v1981 = vmul.f32 %v1978, %v1671
      %v1982 = vld [vmem:[%s1210] sm:$0xff]
      %v1983 = vld [vmem:[%s1210 + $0x8] sm:$0xff]
      %1985 = vset.pattern.permute.xlu0 0
      %1986 = vperm.xlu0 %1985, %v1982
      %v1987 = vpop.permute.xlu0 %1986
      %1990 = vset.pattern.permute.xlu0 0
      %1991 = vperm.xlu0 %1990, %v1983
      %v1992 = vpop.permute.xlu0 %1991
      %v1994 = vmul.f32 %v1987, %v1672
      %v1995 = vmul.f32 %v1992, %v1673
      %v1996 = vadd.f32 %v1980, %v1994
      %v1997 = vadd.f32 %v1981, %v1995
      %v1998 = vld [vmem:[%s1227] sm:$0xff]
      %v1999 = vld [vmem:[%s1227 + $0x8] sm:$0xff]
      %2001 = vset.pattern.permute.xlu0 0
      %2002 = vperm.xlu0 %2001, %v1998
      %v2003 = vpop.permute.xlu0 %2002
      %2006 = vset.pattern.permute.xlu0 0
      %2007 = vperm.xlu0 %2006, %v1999
      %v2008 = vpop.permute.xlu0 %2007
      %v2010 = vmul.f32 %v2003, %v1674
      %v2011 = vmul.f32 %v2008, %v1675
      %v2012 = vadd.f32 %v1996, %v2010
      %v2013 = vadd.f32 %v1997, %v2011
      %v2014 = vld [vmem:[%s1244] sm:$0x1]
      %v2016 = vlaneseq
      %v2017 = vshrl.u32 %v2016, 7
      %v2018 = vsub.s32 0, %v2017
      %v2019 = vrot.slane %v2014, %v2018
      %v2021 = vmul.f32 %v2019, %v2012
      %v2022 = vmul.f32 %v2019, %v2013
      %v2023 = vadd.f32 %v1966, %v2021
      %v2024 = vadd.f32 %v1967, %v2022
      %v2025 = vld [vmem:[%s1256] sm:$0xff]
      %v2026 = vld [vmem:[%s1256 + $0x8] sm:$0xff]
      %2028 = vset.pattern.permute.xlu0 0
      %2029 = vperm.xlu0 %2028, %v2025
      %v2030 = vpop.permute.xlu0 %2029
      %2033 = vset.pattern.permute.xlu0 0
      %2034 = vperm.xlu0 %2033, %v2026
      %v2035 = vpop.permute.xlu0 %2034
      %v2037 = vmul.f32 %v2030, %v1670
      %v2038 = vmul.f32 %v2035, %v1671
      %v2039 = vld [vmem:[%s1271] sm:$0xff]
      %v2040 = vld [vmem:[%s1271 + $0x8] sm:$0xff]
      %2042 = vset.pattern.permute.xlu0 0
      %2043 = vperm.xlu0 %2042, %v2039
      %v2044 = vpop.permute.xlu0 %2043
      %2047 = vset.pattern.permute.xlu0 0
      %2048 = vperm.xlu0 %2047, %v2040
      %v2049 = vpop.permute.xlu0 %2048
      %v2051 = vmul.f32 %v2044, %v1672
      %v2052 = vmul.f32 %v2049, %v1673
      %v2053 = vadd.f32 %v2037, %v2051
      %v2054 = vadd.f32 %v2038, %v2052
      %v2055 = vld [vmem:[%s1288] sm:$0xff]
      %v2056 = vld [vmem:[%s1288 + $0x8] sm:$0xff]
      %2058 = vset.pattern.permute.xlu0 0
      %2059 = vperm.xlu0 %2058, %v2055
      %v2060 = vpop.permute.xlu0 %2059
      %2063 = vset.pattern.permute.xlu0 0
      %2064 = vperm.xlu0 %2063, %v2056
      %v2065 = vpop.permute.xlu0 %2064
      %v2067 = vmul.f32 %v2060, %v1674
      %v2068 = vmul.f32 %v2065, %v1675
      %v2069 = vadd.f32 %v2053, %v2067
      %v2070 = vadd.f32 %v2054, %v2068
      %2073 = vrot.lane.b32.xlu0 %v2069, 127
      %v2074 = vpop.permute.xlu0 %2073
      %2075 = vrot.lane.b32.xlu0 %v2070, 127
      %v2076 = vpop.permute.xlu0 %2075
      %2079 = vrot.lane.b32.xlu0 %v2069, 63
      %v2080 = vpop.permute.xlu0 %2079
      %2081 = vrot.lane.b32.xlu0 %v2070, 63
      %v2082 = vpop.permute.xlu0 %2081
      %v2085 = vsel %vm1319, %v2074, %v2080
      %v2086 = vsel %vm1319, %v2076, %v2082
      %v2087 = vld [vmem:[%s1322] sm:$0x1]
      %v2089 = vlaneseq
      %v2090 = vshrl.u32 %v2089, 7
      %v2091 = vsub.s32 0, %v2090
      %v2092 = vrot.slane %v2087, %v2091
      %v2094 = vmul.f32 %v2092, %v2085
      %v2095 = vmul.f32 %v2092, %v2086
      %v2096 = vadd.f32 %v2023, %v2094
      %v2097 = vadd.f32 %v2024, %v2095
      %v2098 = vld [vmem:[%s1334] sm:$0xff]
      %v2099 = vld [vmem:[%s1334 + $0x8] sm:$0xff]
      %2101 = vset.pattern.permute.xlu0 0
      %2102 = vperm.xlu0 %2101, %v2098
      %v2103 = vpop.permute.xlu0 %2102
      %2106 = vset.pattern.permute.xlu0 0
      %2107 = vperm.xlu0 %2106, %v2099
      %v2108 = vpop.permute.xlu0 %2107
      %v2110 = vmul.f32 %v2103, %v1670
      %v2111 = vmul.f32 %v2108, %v1671
      %v2112 = vld [vmem:[%s1349] sm:$0xff]
      %v2113 = vld [vmem:[%s1349 + $0x8] sm:$0xff]
      %2115 = vset.pattern.permute.xlu0 0
      %2116 = vperm.xlu0 %2115, %v2112
      %v2117 = vpop.permute.xlu0 %2116
      %2120 = vset.pattern.permute.xlu0 0
      %2121 = vperm.xlu0 %2120, %v2113
      %v2122 = vpop.permute.xlu0 %2121
      %v2124 = vmul.f32 %v2117, %v1672
      %v2125 = vmul.f32 %v2122, %v1673
      %v2126 = vadd.f32 %v2110, %v2124
      %v2127 = vadd.f32 %v2111, %v2125
      %v2128 = vld [vmem:[%s1366] sm:$0xff]
      %v2129 = vld [vmem:[%s1366 + $0x8] sm:$0xff]
      %2131 = vset.pattern.permute.xlu0 0
      %2132 = vperm.xlu0 %2131, %v2128
      %v2133 = vpop.permute.xlu0 %2132
      %2136 = vset.pattern.permute.xlu0 0
      %2137 = vperm.xlu0 %2136, %v2129
      %v2138 = vpop.permute.xlu0 %2137
      %v2140 = vmul.f32 %v2133, %v1674
      %v2141 = vmul.f32 %v2138, %v1675
      %v2142 = vadd.f32 %v2126, %v2140
      %v2143 = vadd.f32 %v2127, %v2141
      %2146 = vrot.lane.b32.xlu0 %v2142, 121
      %v2147 = vpop.permute.xlu0 %2146
      %2148 = vrot.lane.b32.xlu0 %v2143, 121
      %v2149 = vpop.permute.xlu0 %2148
      %2152 = vrot.lane.b32.xlu0 %v2142, 57
      %v2153 = vpop.permute.xlu0 %2152
      %2154 = vrot.lane.b32.xlu0 %v2143, 57
      %v2155 = vpop.permute.xlu0 %2154
      %v2158 = vsel %vm1397, %v2147, %v2153
      %v2159 = vsel %vm1397, %v2149, %v2155
      %v2160 = vld [vmem:[%s1400] sm:$0x1]
      %v2162 = vlaneseq
      %v2163 = vshrl.u32 %v2162, 7
      %v2164 = vsub.s32 0, %v2163
      %v2165 = vrot.slane %v2160, %v2164
      %v2167 = vmul.f32 %v2165, %v2158
      %v2168 = vmul.f32 %v2165, %v2159
      %v2169 = vadd.f32 %v2096, %v2167
      %v2170 = vadd.f32 %v2097, %v2168
      %v2171 = vld [vmem:[%s1412] sm:$0xff]
      %v2172 = vld [vmem:[%s1412 + $0x8] sm:$0xff]
      %2174 = vset.pattern.permute.xlu0 0
      %2175 = vperm.xlu0 %2174, %v2171
      %v2176 = vpop.permute.xlu0 %2175
      %2179 = vset.pattern.permute.xlu0 0
      %2180 = vperm.xlu0 %2179, %v2172
      %v2181 = vpop.permute.xlu0 %2180
      %v2183 = vmul.f32 %v2176, %v1670
      %v2184 = vmul.f32 %v2181, %v1671
      %v2185 = vld [vmem:[%s1427] sm:$0xff]
      %v2186 = vld [vmem:[%s1427 + $0x8] sm:$0xff]
      %2188 = vset.pattern.permute.xlu0 0
      %2189 = vperm.xlu0 %2188, %v2185
      %v2190 = vpop.permute.xlu0 %2189
      %2193 = vset.pattern.permute.xlu0 0
      %2194 = vperm.xlu0 %2193, %v2186
      %v2195 = vpop.permute.xlu0 %2194
      %v2197 = vmul.f32 %v2190, %v1672
      %v2198 = vmul.f32 %v2195, %v1673
      %v2199 = vadd.f32 %v2183, %v2197
      %v2200 = vadd.f32 %v2184, %v2198
      %v2201 = vld [vmem:[%s1444] sm:$0xff]
      %v2202 = vld [vmem:[%s1444 + $0x8] sm:$0xff]
      %2204 = vset.pattern.permute.xlu0 0
      %2205 = vperm.xlu0 %2204, %v2201
      %v2206 = vpop.permute.xlu0 %2205
      %2209 = vset.pattern.permute.xlu0 0
      %2210 = vperm.xlu0 %2209, %v2202
      %v2211 = vpop.permute.xlu0 %2210
      %v2213 = vmul.f32 %v2206, %v1674
      %v2214 = vmul.f32 %v2211, %v1675
      %v2215 = vadd.f32 %v2199, %v2213
      %v2216 = vadd.f32 %v2200, %v2214
      %2219 = vrot.lane.b32.xlu0 %v2215, 120
      %v2220 = vpop.permute.xlu0 %2219
      %2221 = vrot.lane.b32.xlu0 %v2216, 120
      %v2222 = vpop.permute.xlu0 %2221
      %2225 = vrot.lane.b32.xlu0 %v2215, 56
      %v2226 = vpop.permute.xlu0 %2225
      %2227 = vrot.lane.b32.xlu0 %v2216, 56
      %v2228 = vpop.permute.xlu0 %2227
      %v2231 = vsel %vm1475, %v2220, %v2226
      %v2232 = vsel %vm1475, %v2222, %v2228
      %v2233 = vld [vmem:[%s1478] sm:$0x1]
      %v2235 = vlaneseq
      %v2236 = vshrl.u32 %v2235, 7
      %v2237 = vsub.s32 0, %v2236
      %v2238 = vrot.slane %v2233, %v2237
      %v2240 = vmul.f32 %v2238, %v2231
      %v2241 = vmul.f32 %v2238, %v2232
      %v2242 = vadd.f32 %v2169, %v2240
      %v2243 = vadd.f32 %v2170, %v2241
      %v2244 = vld [vmem:[%s1490] sm:$0xff]
      %v2245 = vld [vmem:[%s1490 + $0x8] sm:$0xff]
      %2247 = vset.pattern.permute.xlu0 0
      %2248 = vperm.xlu0 %2247, %v2244
      %v2249 = vpop.permute.xlu0 %2248
      %2252 = vset.pattern.permute.xlu0 0
      %2253 = vperm.xlu0 %2252, %v2245
      %v2254 = vpop.permute.xlu0 %2253
      %v2256 = vmul.f32 %v2249, %v1670
      %v2257 = vmul.f32 %v2254, %v1671
      %v2258 = vld [vmem:[%s1505] sm:$0xff]
      %v2259 = vld [vmem:[%s1505 + $0x8] sm:$0xff]
      %2261 = vset.pattern.permute.xlu0 0
      %2262 = vperm.xlu0 %2261, %v2258
      %v2263 = vpop.permute.xlu0 %2262
      %2266 = vset.pattern.permute.xlu0 0
      %2267 = vperm.xlu0 %2266, %v2259
      %v2268 = vpop.permute.xlu0 %2267
      %v2270 = vmul.f32 %v2263, %v1672
      %v2271 = vmul.f32 %v2268, %v1673
      %v2272 = vadd.f32 %v2256, %v2270
      %v2273 = vadd.f32 %v2257, %v2271
      %v2274 = vld [vmem:[%s1522] sm:$0xff]
      %v2275 = vld [vmem:[%s1522 + $0x8] sm:$0xff]
      %2277 = vset.pattern.permute.xlu0 0
      %2278 = vperm.xlu0 %2277, %v2274
      %v2279 = vpop.permute.xlu0 %2278
      %2282 = vset.pattern.permute.xlu0 0
      %2283 = vperm.xlu0 %2282, %v2275
      %v2284 = vpop.permute.xlu0 %2283
      %v2286 = vmul.f32 %v2279, %v1674
      %v2287 = vmul.f32 %v2284, %v1675
      %v2288 = vadd.f32 %v2272, %v2286
      %v2289 = vadd.f32 %v2273, %v2287
      %2292 = vrot.lane.b32.xlu0 %v2288, 119
      %v2293 = vpop.permute.xlu0 %2292
      %2294 = vrot.lane.b32.xlu0 %v2289, 119
      %v2295 = vpop.permute.xlu0 %2294
      %2298 = vrot.lane.b32.xlu0 %v2288, 55
      %v2299 = vpop.permute.xlu0 %2298
      %2300 = vrot.lane.b32.xlu0 %v2289, 55
      %v2301 = vpop.permute.xlu0 %2300
      %v2304 = vsel %vm1553, %v2293, %v2299
      %v2305 = vsel %vm1553, %v2295, %v2301
      %v2306 = vld [vmem:[%s1556] sm:$0x1]
      %v2308 = vlaneseq
      %v2309 = vshrl.u32 %v2308, 7
      %v2310 = vsub.s32 0, %v2309
      %v2311 = vrot.slane %v2306, %v2310
      %v2313 = vmul.f32 %v2311, %v2304
      %v2314 = vmul.f32 %v2311, %v2305
      %v2315 = vadd.f32 %v2242, %v2313
      %v2316 = vadd.f32 %v2243, %v2314
      %v2317 = vld [vmem:[%s7] sm:$0xff]
      %v2318 = vld [vmem:[%s7 + $0x8] sm:$0xff]
      %2320 = vset.pattern.permute.xlu0 0
      %2321 = vperm.xlu0 %2320, %v2317
      %v2322 = vpop.permute.xlu0 %2321
      %2325 = vset.pattern.permute.xlu0 0
      %2326 = vperm.xlu0 %2325, %v2318
      %v2327 = vpop.permute.xlu0 %2326
      %v2329 = vadd.f32 %v2315, %v2322
      %v2330 = vadd.f32 %v2316, %v2327
      %v2331 = vmax.f32 %v2329, 0.0
      %v2332 = vmax.f32 %v2330, 0.0
      %v2333 = vmin.f32 %v2331, 6.0
      %v2334 = vmin.f32 %v2332, 6.0
      %v2335 = vld [vmem:[%s8] sm:$0xff]
      %v2336 = vld [vmem:[%s9] sm:$0xff]
      %2338 = vset.pattern.permute.xlu0 0
      %2339 = vperm.xlu0 %2338, %v2336
      %v2340 = vpop.permute.xlu0 %2339
      %v2343 = vsel %vm1593, %v2335, 0
      %2345 = vmatprep.subr.mxu0 0.0
      %2346 = vmatpush1.msra.mxu0 %v2333
      %2347 = vmatprep.subr.mxu0 0.0
      %2348 = vmatpush1.msra.mxu0 %v2334
      %2349 = vmatprep.subr.mxu0 0.0
      %2350 = vmatpush1.msra.mxu0 0.0
      %2351 = vmatprep.subr.mxu0 0.0
      %2352 = vmatpush1.msra.mxu0 0.0
      %2353 = vmatprep.subr.mxu0 0.0
      %2354 = vmatpush1.msra.mxu0 0.0
      %2355 = vmatprep.subr.mxu0 0.0
      %2356 = vmatpush1.msra.mxu0 0.0
      %2357 = vmatprep.subr.mxu0 0.0
      %2358 = vmatpush1.msra.mxu0 0.0
      %2359 = vmatprep.subr.mxu0 0.0
      %2360 = vmatpush1.msra.mxu0 0.0
      %2361 = vmatprep.subr.mxu0 0.0
      %2362 = vmatpush1.msra.mxu0 0.0
      %2363 = vmatprep.subr.mxu0 0.0
      %2364 = vmatpush1.msra.mxu0 0.0
      %2365 = vmatprep.subr.mxu0 0.0
      %2366 = vmatpush1.msra.mxu0 0.0
      %2367 = vmatprep.subr.mxu0 0.0
      %2368 = vmatpush1.msra.mxu0 0.0
      %2369 = vmatprep.subr.mxu0 0.0
      %2370 = vmatpush1.msra.mxu0 0.0
      %2371 = vmatprep.subr.mxu0 0.0
      %2372 = vmatpush1.msra.mxu0 0.0
      %2373 = vmatprep.subr.mxu0 0.0
      %2374 = vmatpush1.msra.mxu0 0.0
      %2375 = vmatprep.subr.mxu0 0.0
      %2376 = vmatpush1.msra.mxu0 0.0
      %2377 = vmatprep.subr.mxu0 0.0
      %2378 = vmatpush1.msra.mxu0 0.0
      %2379 = vmatprep.subr.mxu0 0.0
      %2380 = vmatpush1.msra.mxu0 0.0
      %2381 = vmatprep.subr.mxu0 0.0
      %2382 = vmatpush1.msra.mxu0 0.0
      %2383 = vmatprep.subr.mxu0 0.0
      %2384 = vmatpush1.msra.mxu0 0.0
      %2385 = vmatprep.subr.mxu0 0.0
      %2386 = vmatpush1.msra.mxu0 0.0
      %2387 = vmatprep.subr.mxu0 0.0
      %2388 = vmatpush1.msra.mxu0 0.0
      %2389 = vmatprep.subr.mxu0 0.0
      %2390 = vmatpush1.msra.mxu0 0.0
      %2391 = vmatprep.subr.mxu0 0.0
      %2392 = vmatpush1.msra.mxu0 0.0
      %2393 = vmatprep.subr.mxu0 0.0
      %2394 = vmatpush1.msra.mxu0 0.0
      %2395 = vmatprep.subr.mxu0 0.0
      %2396 = vmatpush1.msra.mxu0 0.0
      %2397 = vmatprep.subr.mxu0 0.0
      %2398 = vmatpush1.msra.mxu0 0.0
      %2399 = vmatprep.subr.mxu0 0.0
      %2400 = vmatpush1.msra.mxu0 0.0
      %2401 = vmatprep.subr.mxu0 0.0
      %2402 = vmatpush1.msra.mxu0 0.0
      %2403 = vmatprep.subr.mxu0 0.0
      %2404 = vmatpush1.msra.mxu0 0.0
      %2405 = vmatprep.subr.mxu0 0.0
      %2406 = vmatpush1.msra.mxu0 0.0
      %2407 = vmatprep.subr.mxu0 0.0
      %2408 = vmatpush1.msra.mxu0 0.0
      %2409 = vmatprep.mubr.f32.mxu0 0.0
      %2410 = vmatmul.mubr.f32.gmra.mrb[0].mxu0 %v2343
      %v2411 = vpop.f32.mrb[0].mxu0
      %v2412 = vadd.f32 %v2340, %v2411
      %v2413 = vpop.f32.mrb[0].mxu0
      %2414 = vdwg.mxu0
      %v2415 = vld [vmem:[%s469] sm:$0xff]
      %2417 = vrot.lane.b32.xlu0 %v2415, 64
      %v2418 = vpop.permute.xlu0 %2417
      %v2420 = vadd.f32 %v2412, %v2418
      %2422 = vrot.lane.b32.xlu0 %v2420, 64
      %v2423 = vpop.permute.xlu0 %2422
      %vm2425 = vcmask 1048064
      %2426 = vst.msk [vmem:[%s511] sm:$0xff] %vm2425, %v2423
      %v2427 = vld [vmem:[%s633] sm:$0xff]
      %v2428 = vld [vmem:[%s633 + $0x8] sm:$0xff]
      %v2429 = vld [vmem:[%s636] sm:$0xff]
      %v2430 = vld [vmem:[%s636 + $0x8] sm:$0xff]
      %v2431 = vld [vmem:[%s647] sm:$0xff]
      %v2432 = vld [vmem:[%s647 + $0x8] sm:$0xff]
      %v2433 = vld [vmem:[%s6] sm:$0xff]
      %v2434 = vld [vmem:[%s6 + $0x8] sm:$0xff]
      %2436 = vset.pattern.permute.xlu0 0
      %2437 = vperm.xlu0 %2436, %v2433
      %v2438 = vpop.permute.xlu0 %2437
      %2441 = vset.pattern.permute.xlu0 0
      %2442 = vperm.xlu0 %2441, %v2434
      %v2443 = vpop.permute.xlu0 %2442
      %v2445 = vmul.f32 %v2438, %v2427
      %v2446 = vmul.f32 %v2443, %v2428
      %v2447 = vld [vmem:[%s900] sm:$0xff]
      %v2448 = vld [vmem:[%s900 + $0x8] sm:$0xff]
      %2450 = vset.pattern.permute.xlu0 0
      %2451 = vperm.xlu0 %2450, %v2447
      %v2452 = vpop.permute.xlu0 %2451
      %2455 = vset.pattern.permute.xlu0 0
      %2456 = vperm.xlu0 %2455, %v2448
      %v2457 = vpop.permute.xlu0 %2456
      %v2459 = vmul.f32 %v2452, %v2429
      %v2460 = vmul.f32 %v2457, %v2430
      %v2461 = vadd.f32 %v2445, %v2459
      %v2462 = vadd.f32 %v2446, %v2460
      %v2463 = vld [vmem:[%s917] sm:$0xff]
      %v2464 = vld [vmem:[%s917 + $0x8] sm:$0xff]
      %2466 = vset.pattern.permute.xlu0 0
      %2467 = vperm.xlu0 %2466, %v2463
      %v2468 = vpop.permute.xlu0 %2467
      %2471 = vset.pattern.permute.xlu0 0
      %2472 = vperm.xlu0 %2471, %v2464
      %v2473 = vpop.permute.xlu0 %2472
      %v2475 = vmul.f32 %v2468, %v2431
      %v2476 = vmul.f32 %v2473, %v2432
      %v2477 = vadd.f32 %v2461, %v2475
      %v2478 = vadd.f32 %v2462, %v2476
      %2481 = vrot.lane.b32.xlu0 %v2477, 73
      %v2482 = vpop.permute.xlu0 %2481
      %2483 = vrot.lane.b32.xlu0 %v2478, 73
      %v2484 = vpop.permute.xlu0 %2483
      %2487 = vrot.lane.b32.xlu0 %v2477, 9
      %v2488 = vpop.permute.xlu0 %2487
      %2489 = vrot.lane.b32.xlu0 %v2478, 9
      %v2490 = vpop.permute.xlu0 %2489
      %v2493 = vsel %vm948, %v2482, %v2488
      %v2494 = vsel %vm948, %v2484, %v2490
      %v2495 = vld [vmem:[%s3] sm:$0x1]
      %v2497 = vlaneseq
      %v2498 = vshrl.u32 %v2497, 7
      %v2499 = vsub.s32 0, %v2498
      %v2500 = vrot.slane %v2495, %v2499
      %v2502 = vmul.f32 %v2500, %v2493
      %v2503 = vmul.f32 %v2500, %v2494
      %v2504 = vadd.f32 %v2502, 0.0
      %v2505 = vadd.f32 %v2503, 0.0
      %v2506 = vld [vmem:[%s962] sm:$0xff]
      %v2507 = vld [vmem:[%s962 + $0x8] sm:$0xff]
      %2509 = vset.pattern.permute.xlu0 0
      %2510 = vperm.xlu0 %2509, %v2506
      %v2511 = vpop.permute.xlu0 %2510
      %2514 = vset.pattern.permute.xlu0 0
      %2515 = vperm.xlu0 %2514, %v2507
      %v2516 = vpop.permute.xlu0 %2515
      %v2518 = vmul.f32 %v2511, %v2427
      %v2519 = vmul.f32 %v2516, %v2428
      %v2520 = vld [vmem:[%s977] sm:$0xff]
      %v2521 = vld [vmem:[%s977 + $0x8] sm:$0xff]
      %2523 = vset.pattern.permute.xlu0 0
      %2524 = vperm.xlu0 %2523, %v2520
      %v2525 = vpop.permute.xlu0 %2524
      %2528 = vset.pattern.permute.xlu0 0
      %2529 = vperm.xlu0 %2528, %v2521
      %v2530 = vpop.permute.xlu0 %2529
      %v2532 = vmul.f32 %v2525, %v2429
      %v2533 = vmul.f32 %v2530, %v2430
      %v2534 = vadd.f32 %v2518, %v2532
      %v2535 = vadd.f32 %v2519, %v2533
      %v2536 = vld [vmem:[%s994] sm:$0xff]
      %v2537 = vld [vmem:[%s994 + $0x8] sm:$0xff]
      %2539 = vset.pattern.permute.xlu0 0
      %2540 = vperm.xlu0 %2539, %v2536
      %v2541 = vpop.permute.xlu0 %2540
      %2544 = vset.pattern.permute.xlu0 0
      %2545 = vperm.xlu0 %2544, %v2537
      %v2546 = vpop.permute.xlu0 %2545
      %v2548 = vmul.f32 %v2541, %v2431
      %v2549 = vmul.f32 %v2546, %v2432
      %v2550 = vadd.f32 %v2534, %v2548
      %v2551 = vadd.f32 %v2535, %v2549
      %2554 = vrot.lane.b32.xlu0 %v2550, 72
      %v2555 = vpop.permute.xlu0 %2554
      %2556 = vrot.lane.b32.xlu0 %v2551, 72
      %v2557 = vpop.permute.xlu0 %2556
      %2560 = vrot.lane.b32.xlu0 %v2550, 8
      %v2561 = vpop.permute.xlu0 %2560
      %2562 = vrot.lane.b32.xlu0 %v2551, 8
      %v2563 = vpop.permute.xlu0 %2562
      %v2566 = vsel %vm529, %v2555, %v2561
      %v2567 = vsel %vm529, %v2557, %v2563
      %v2568 = vld [vmem:[%s1027] sm:$0x1]
      %v2570 = vlaneseq
      %v2571 = vshrl.u32 %v2570, 7
      %v2572 = vsub.s32 0, %v2571
      %v2573 = vrot.slane %v2568, %v2572
      %v2575 = vmul.f32 %v2573, %v2566
      %v2576 = vmul.f32 %v2573, %v2567
      %v2577 = vadd.f32 %v2504, %v2575
      %v2578 = vadd.f32 %v2505, %v2576
      %v2579 = vld [vmem:[%s1039] sm:$0xff]
      %v2580 = vld [vmem:[%s1039 + $0x8] sm:$0xff]
      %2582 = vset.pattern.permute.xlu0 0
      %2583 = vperm.xlu0 %2582, %v2579
      %v2584 = vpop.permute.xlu0 %2583
      %2587 = vset.pattern.permute.xlu0 0
      %2588 = vperm.xlu0 %2587, %v2580
      %v2589 = vpop.permute.xlu0 %2588
      %v2591 = vmul.f32 %v2584, %v2427
      %v2592 = vmul.f32 %v2589, %v2428
      %v2593 = vld [vmem:[%s1054] sm:$0xff]
      %v2594 = vld [vmem:[%s1054 + $0x8] sm:$0xff]
      %2596 = vset.pattern.permute.xlu0 0
      %2597 = vperm.xlu0 %2596, %v2593
      %v2598 = vpop.permute.xlu0 %2597
      %2601 = vset.pattern.permute.xlu0 0
      %2602 = vperm.xlu0 %2601, %v2594
      %v2603 = vpop.permute.xlu0 %2602
      %v2605 = vmul.f32 %v2598, %v2429
      %v2606 = vmul.f32 %v2603, %v2430
      %v2607 = vadd.f32 %v2591, %v2605
      %v2608 = vadd.f32 %v2592, %v2606
      %v2609 = vld [vmem:[%s1071] sm:$0xff]
      %v2610 = vld [vmem:[%s1071 + $0x8] sm:$0xff]
      %2612 = vset.pattern.permute.xlu0 0
      %2613 = vperm.xlu0 %2612, %v2609
      %v2614 = vpop.permute.xlu0 %2613
      %2617 = vset.pattern.permute.xlu0 0
      %2618 = vperm.xlu0 %2617, %v2610
      %v2619 = vpop.permute.xlu0 %2618
      %v2621 = vmul.f32 %v2614, %v2431
      %v2622 = vmul.f32 %v2619, %v2432
      %v2623 = vadd.f32 %v2607, %v2621
      %v2624 = vadd.f32 %v2608, %v2622
      %2627 = vrot.lane.b32.xlu0 %v2623, 71
      %v2628 = vpop.permute.xlu0 %2627
      %2629 = vrot.lane.b32.xlu0 %v2624, 71
      %v2630 = vpop.permute.xlu0 %2629
      %2633 = vrot.lane.b32.xlu0 %v2623, 7
      %v2634 = vpop.permute.xlu0 %2633
      %2635 = vrot.lane.b32.xlu0 %v2624, 7
      %v2636 = vpop.permute.xlu0 %2635
      %v2639 = vsel %vm1102, %v2628, %v2634
      %v2640 = vsel %vm1102, %v2630, %v2636
      %v2641 = vld [vmem:[%s1105] sm:$0x1]
      %v2643 = vlaneseq
      %v2644 = vshrl.u32 %v2643, 7
      %v2645 = vsub.s32 0, %v2644
      %v2646 = vrot.slane %v2641, %v2645
      %v2648 = vmul.f32 %v2646, %v2639
      %v2649 = vmul.f32 %v2646, %v2640
      %v2650 = vadd.f32 %v2577, %v2648
      %v2651 = vadd.f32 %v2578, %v2649
      %v2652 = vld [vmem:[%s1117] sm:$0xff]
      %v2653 = vld [vmem:[%s1117 + $0x8] sm:$0xff]
      %2655 = vset.pattern.permute.xlu0 0
      %2656 = vperm.xlu0 %2655, %v2652
      %v2657 = vpop.permute.xlu0 %2656
      %2660 = vset.pattern.permute.xlu0 0
      %2661 = vperm.xlu0 %2660, %v2653
      %v2662 = vpop.permute.xlu0 %2661
      %v2664 = vmul.f32 %v2657, %v2427
      %v2665 = vmul.f32 %v2662, %v2428
      %v2666 = vld [vmem:[%s1132] sm:$0xff]
      %v2667 = vld [vmem:[%s1132 + $0x8] sm:$0xff]
      %2669 = vset.pattern.permute.xlu0 0
      %2670 = vperm.xlu0 %2669, %v2666
      %v2671 = vpop.permute.xlu0 %2670
      %2674 = vset.pattern.permute.xlu0 0
      %2675 = vperm.xlu0 %2674, %v2667
      %v2676 = vpop.permute.xlu0 %2675
      %v2678 = vmul.f32 %v2671, %v2429
      %v2679 = vmul.f32 %v2676, %v2430
      %v2680 = vadd.f32 %v2664, %v2678
      %v2681 = vadd.f32 %v2665, %v2679
      %v2682 = vld [vmem:[%s1149] sm:$0xff]
      %v2683 = vld [vmem:[%s1149 + $0x8] sm:$0xff]
      %2685 = vset.pattern.permute.xlu0 0
      %2686 = vperm.xlu0 %2685, %v2682
      %v2687 = vpop.permute.xlu0 %2686
      %2690 = vset.pattern.permute.xlu0 0
      %2691 = vperm.xlu0 %2690, %v2683
      %v2692 = vpop.permute.xlu0 %2691
      %v2694 = vmul.f32 %v2687, %v2431
      %v2695 = vmul.f32 %v2692, %v2432
      %v2696 = vadd.f32 %v2680, %v2694
      %v2697 = vadd.f32 %v2681, %v2695
      %2700 = vrot.lane.b32.xlu0 %v2696, 65
      %v2701 = vpop.permute.xlu0 %2700
      %2702 = vrot.lane.b32.xlu0 %v2697, 65
      %v2703 = vpop.permute.xlu0 %2702
      %2706 = vrot.lane.b32.xlu0 %v2696, 1
      %v2707 = vpop.permute.xlu0 %2706
      %2708 = vrot.lane.b32.xlu0 %v2697, 1
      %v2709 = vpop.permute.xlu0 %2708
      %v2712 = vsel %vm1180, %v2701, %v2707
      %v2713 = vsel %vm1180, %v2703, %v2709
      %v2714 = vld [vmem:[%s1183] sm:$0x1]
      %v2716 = vlaneseq
      %v2717 = vshrl.u32 %v2716, 7
      %v2718 = vsub.s32 0, %v2717
      %v2719 = vrot.slane %v2714, %v2718
      %v2721 = vmul.f32 %v2719, %v2712
      %v2722 = vmul.f32 %v2719, %v2713
      %v2723 = vadd.f32 %v2650, %v2721
      %v2724 = vadd.f32 %v2651, %v2722
      %v2725 = vld [vmem:[%s1195] sm:$0xff]
      %v2726 = vld [vmem:[%s1195 + $0x8] sm:$0xff]
      %2728 = vset.pattern.permute.xlu0 0
      %2729 = vperm.xlu0 %2728, %v2725
      %v2730 = vpop.permute.xlu0 %2729
      %2733 = vset.pattern.permute.xlu0 0
      %2734 = vperm.xlu0 %2733, %v2726
      %v2735 = vpop.permute.xlu0 %2734
      %v2737 = vmul.f32 %v2730, %v2427
      %v2738 = vmul.f32 %v2735, %v2428
      %v2739 = vld [vmem:[%s1210] sm:$0xff]
      %v2740 = vld [vmem:[%s1210 + $0x8] sm:$0xff]
      %2742 = vset.pattern.permute.xlu0 0
      %2743 = vperm.xlu0 %2742, %v2739
      %v2744 = vpop.permute.xlu0 %2743
      %2747 = vset.pattern.permute.xlu0 0
      %2748 = vperm.xlu0 %2747, %v2740
      %v2749 = vpop.permute.xlu0 %2748
      %v2751 = vmul.f32 %v2744, %v2429
      %v2752 = vmul.f32 %v2749, %v2430
      %v2753 = vadd.f32 %v2737, %v2751
      %v2754 = vadd.f32 %v2738, %v2752
      %v2755 = vld [vmem:[%s1227] sm:$0xff]
      %v2756 = vld [vmem:[%s1227 + $0x8] sm:$0xff]
      %2758 = vset.pattern.permute.xlu0 0
      %2759 = vperm.xlu0 %2758, %v2755
      %v2760 = vpop.permute.xlu0 %2759
      %2763 = vset.pattern.permute.xlu0 0
      %2764 = vperm.xlu0 %2763, %v2756
      %v2765 = vpop.permute.xlu0 %2764
      %v2767 = vmul.f32 %v2760, %v2431
      %v2768 = vmul.f32 %v2765, %v2432
      %v2769 = vadd.f32 %v2753, %v2767
      %v2770 = vadd.f32 %v2754, %v2768
      %v2771 = vld [vmem:[%s1244] sm:$0x1]
      %v2773 = vlaneseq
      %v2774 = vshrl.u32 %v2773, 7
      %v2775 = vsub.s32 0, %v2774
      %v2776 = vrot.slane %v2771, %v2775
      %v2778 = vmul.f32 %v2776, %v2769
      %v2779 = vmul.f32 %v2776, %v2770
      %v2780 = vadd.f32 %v2723, %v2778
      %v2781 = vadd.f32 %v2724, %v2779
      %v2782 = vld [vmem:[%s1256] sm:$0xff]
      %v2783 = vld [vmem:[%s1256 + $0x8] sm:$0xff]
      %2785 = vset.pattern.permute.xlu0 0
      %2786 = vperm.xlu0 %2785, %v2782
      %v2787 = vpop.permute.xlu0 %2786
      %2790 = vset.pattern.permute.xlu0 0
      %2791 = vperm.xlu0 %2790, %v2783
      %v2792 = vpop.permute.xlu0 %2791
      %v2794 = vmul.f32 %v2787, %v2427
      %v2795 = vmul.f32 %v2792, %v2428
      %v2796 = vld [vmem:[%s1271] sm:$0xff]
      %v2797 = vld [vmem:[%s1271 + $0x8] sm:$0xff]
      %2799 = vset.pattern.permute.xlu0 0
      %2800 = vperm.xlu0 %2799, %v2796
      %v2801 = vpop.permute.xlu0 %2800
      %2804 = vset.pattern.permute.xlu0 0
      %2805 = vperm.xlu0 %2804, %v2797
      %v2806 = vpop.permute.xlu0 %2805
      %v2808 = vmul.f32 %v2801, %v2429
      %v2809 = vmul.f32 %v2806, %v2430
      %v2810 = vadd.f32 %v2794, %v2808
      %v2811 = vadd.f32 %v2795, %v2809
      %v2812 = vld [vmem:[%s1288] sm:$0xff]
      %v2813 = vld [vmem:[%s1288 + $0x8] sm:$0xff]
      %2815 = vset.pattern.permute.xlu0 0
      %2816 = vperm.xlu0 %2815, %v2812
      %v2817 = vpop.permute.xlu0 %2816
      %2820 = vset.pattern.permute.xlu0 0
      %2821 = vperm.xlu0 %2820, %v2813
      %v2822 = vpop.permute.xlu0 %2821
      %v2824 = vmul.f32 %v2817, %v2431
      %v2825 = vmul.f32 %v2822, %v2432
      %v2826 = vadd.f32 %v2810, %v2824
      %v2827 = vadd.f32 %v2811, %v2825
      %2830 = vrot.lane.b32.xlu0 %v2826, 127
      %v2831 = vpop.permute.xlu0 %2830
      %2832 = vrot.lane.b32.xlu0 %v2827, 127
      %v2833 = vpop.permute.xlu0 %2832
      %2836 = vrot.lane.b32.xlu0 %v2826, 63
      %v2837 = vpop.permute.xlu0 %2836
      %2838 = vrot.lane.b32.xlu0 %v2827, 63
      %v2839 = vpop.permute.xlu0 %2838
      %v2842 = vsel %vm1319, %v2831, %v2837
      %v2843 = vsel %vm1319, %v2833, %v2839
      %v2844 = vld [vmem:[%s1322] sm:$0x1]
      %v2846 = vlaneseq
      %v2847 = vshrl.u32 %v2846, 7
      %v2848 = vsub.s32 0, %v2847
      %v2849 = vrot.slane %v2844, %v2848
      %v2851 = vmul.f32 %v2849, %v2842
      %v2852 = vmul.f32 %v2849, %v2843
      %v2853 = vadd.f32 %v2780, %v2851
      %v2854 = vadd.f32 %v2781, %v2852
      %v2855 = vld [vmem:[%s1334] sm:$0xff]
      %v2856 = vld [vmem:[%s1334 + $0x8] sm:$0xff]
      %2858 = vset.pattern.permute.xlu0 0
      %2859 = vperm.xlu0 %2858, %v2855
      %v2860 = vpop.permute.xlu0 %2859
      %2863 = vset.pattern.permute.xlu0 0
      %2864 = vperm.xlu0 %2863, %v2856
      %v2865 = vpop.permute.xlu0 %2864
      %v2867 = vmul.f32 %v2860, %v2427
      %v2868 = vmul.f32 %v2865, %v2428
      %v2869 = vld [vmem:[%s1349] sm:$0xff]
      %v2870 = vld [vmem:[%s1349 + $0x8] sm:$0xff]
      %2872 = vset.pattern.permute.xlu0 0
      %2873 = vperm.xlu0 %2872, %v2869
      %v2874 = vpop.permute.xlu0 %2873
      %2877 = vset.pattern.permute.xlu0 0
      %2878 = vperm.xlu0 %2877, %v2870
      %v2879 = vpop.permute.xlu0 %2878
      %v2881 = vmul.f32 %v2874, %v2429
      %v2882 = vmul.f32 %v2879, %v2430
      %v2883 = vadd.f32 %v2867, %v2881
      %v2884 = vadd.f32 %v2868, %v2882
      %v2885 = vld [vmem:[%s1366] sm:$0xff]
      %v2886 = vld [vmem:[%s1366 + $0x8] sm:$0xff]
      %2888 = vset.pattern.permute.xlu0 0
      %2889 = vperm.xlu0 %2888, %v2885
      %v2890 = vpop.permute.xlu0 %2889
      %2893 = vset.pattern.permute.xlu0 0
      %2894 = vperm.xlu0 %2893, %v2886
      %v2895 = vpop.permute.xlu0 %2894
      %v2897 = vmul.f32 %v2890, %v2431
      %v2898 = vmul.f32 %v2895, %v2432
      %v2899 = vadd.f32 %v2883, %v2897
      %v2900 = vadd.f32 %v2884, %v2898
      %2903 = vrot.lane.b32.xlu0 %v2899, 121
      %v2904 = vpop.permute.xlu0 %2903
      %2905 = vrot.lane.b32.xlu0 %v2900, 121
      %v2906 = vpop.permute.xlu0 %2905
      %2909 = vrot.lane.b32.xlu0 %v2899, 57
      %v2910 = vpop.permute.xlu0 %2909
      %2911 = vrot.lane.b32.xlu0 %v2900, 57
      %v2912 = vpop.permute.xlu0 %2911
      %v2915 = vsel %vm1397, %v2904, %v2910
      %v2916 = vsel %vm1397, %v2906, %v2912
      %v2917 = vld [vmem:[%s1400] sm:$0x1]
      %v2919 = vlaneseq
      %v2920 = vshrl.u32 %v2919, 7
      %v2921 = vsub.s32 0, %v2920
      %v2922 = vrot.slane %v2917, %v2921
      %v2924 = vmul.f32 %v2922, %v2915
      %v2925 = vmul.f32 %v2922, %v2916
      %v2926 = vadd.f32 %v2853, %v2924
      %v2927 = vadd.f32 %v2854, %v2925
      %v2928 = vld [vmem:[%s1412] sm:$0xff]
      %v2929 = vld [vmem:[%s1412 + $0x8] sm:$0xff]
      %2931 = vset.pattern.permute.xlu0 0
      %2932 = vperm.xlu0 %2931, %v2928
      %v2933 = vpop.permute.xlu0 %2932
      %2936 = vset.pattern.permute.xlu0 0
      %2937 = vperm.xlu0 %2936, %v2929
      %v2938 = vpop.permute.xlu0 %2937
      %v2940 = vmul.f32 %v2933, %v2427
      %v2941 = vmul.f32 %v2938, %v2428
      %v2942 = vld [vmem:[%s1427] sm:$0xff]
      %v2943 = vld [vmem:[%s1427 + $0x8] sm:$0xff]
      %2945 = vset.pattern.permute.xlu0 0
      %2946 = vperm.xlu0 %2945, %v2942
      %v2947 = vpop.permute.xlu0 %2946
      %2950 = vset.pattern.permute.xlu0 0
      %2951 = vperm.xlu0 %2950, %v2943
      %v2952 = vpop.permute.xlu0 %2951
      %v2954 = vmul.f32 %v2947, %v2429
      %v2955 = vmul.f32 %v2952, %v2430
      %v2956 = vadd.f32 %v2940, %v2954
      %v2957 = vadd.f32 %v2941, %v2955
      %v2958 = vld [vmem:[%s1444] sm:$0xff]
      %v2959 = vld [vmem:[%s1444 + $0x8] sm:$0xff]
      %2961 = vset.pattern.permute.xlu0 0
      %2962 = vperm.xlu0 %2961, %v2958
      %v2963 = vpop.permute.xlu0 %2962
      %2966 = vset.pattern.permute.xlu0 0
      %2967 = vperm.xlu0 %2966, %v2959
      %v2968 = vpop.permute.xlu0 %2967
      %v2970 = vmul.f32 %v2963, %v2431
      %v2971 = vmul.f32 %v2968, %v2432
      %v2972 = vadd.f32 %v2956, %v2970
      %v2973 = vadd.f32 %v2957, %v2971
      %2976 = vrot.lane.b32.xlu0 %v2972, 120
      %v2977 = vpop.permute.xlu0 %2976
      %2978 = vrot.lane.b32.xlu0 %v2973, 120
      %v2979 = vpop.permute.xlu0 %2978
      %2982 = vrot.lane.b32.xlu0 %v2972, 56
      %v2983 = vpop.permute.xlu0 %2982
      %2984 = vrot.lane.b32.xlu0 %v2973, 56
      %v2985 = vpop.permute.xlu0 %2984
      %v2988 = vsel %vm1475, %v2977, %v2983
      %v2989 = vsel %vm1475, %v2979, %v2985
      %v2990 = vld [vmem:[%s1478] sm:$0x1]
      %v2992 = vlaneseq
      %v2993 = vshrl.u32 %v2992, 7
      %v2994 = vsub.s32 0, %v2993
      %v2995 = vrot.slane %v2990, %v2994
      %v2997 = vmul.f32 %v2995, %v2988
      %v2998 = vmul.f32 %v2995, %v2989
      %v2999 = vadd.f32 %v2926, %v2997
      %v3000 = vadd.f32 %v2927, %v2998
      %v3001 = vld [vmem:[%s1490] sm:$0xff]
      %v3002 = vld [vmem:[%s1490 + $0x8] sm:$0xff]
      %3004 = vset.pattern.permute.xlu0 0
      %3005 = vperm.xlu0 %3004, %v3001
      %v3006 = vpop.permute.xlu0 %3005
      %3009 = vset.pattern.permute.xlu0 0
      %3010 = vperm.xlu0 %3009, %v3002
      %v3011 = vpop.permute.xlu0 %3010
      %v3013 = vmul.f32 %v3006, %v2427
      %v3014 = vmul.f32 %v3011, %v2428
      %v3015 = vld [vmem:[%s1505] sm:$0xff]
      %v3016 = vld [vmem:[%s1505 + $0x8] sm:$0xff]
      %3018 = vset.pattern.permute.xlu0 0
      %3019 = vperm.xlu0 %3018, %v3015
      %v3020 = vpop.permute.xlu0 %3019
      %3023 = vset.pattern.permute.xlu0 0
      %3024 = vperm.xlu0 %3023, %v3016
      %v3025 = vpop.permute.xlu0 %3024
      %v3027 = vmul.f32 %v3020, %v2429
      %v3028 = vmul.f32 %v3025, %v2430
      %v3029 = vadd.f32 %v3013, %v3027
      %v3030 = vadd.f32 %v3014, %v3028
      %v3031 = vld [vmem:[%s1522] sm:$0xff]
      %v3032 = vld [vmem:[%s1522 + $0x8] sm:$0xff]
      %3034 = vset.pattern.permute.xlu0 0
      %3035 = vperm.xlu0 %3034, %v3031
      %v3036 = vpop.permute.xlu0 %3035
      %3039 = vset.pattern.permute.xlu0 0
      %3040 = vperm.xlu0 %3039, %v3032
      %v3041 = vpop.permute.xlu0 %3040
      %v3043 = vmul.f32 %v3036, %v2431
      %v3044 = vmul.f32 %v3041, %v2432
      %v3045 = vadd.f32 %v3029, %v3043
      %v3046 = vadd.f32 %v3030, %v3044
      %3049 = vrot.lane.b32.xlu0 %v3045, 119
      %v3050 = vpop.permute.xlu0 %3049
      %3051 = vrot.lane.b32.xlu0 %v3046, 119
      %v3052 = vpop.permute.xlu0 %3051
      %3055 = vrot.lane.b32.xlu0 %v3045, 55
      %v3056 = vpop.permute.xlu0 %3055
      %3057 = vrot.lane.b32.xlu0 %v3046, 55
      %v3058 = vpop.permute.xlu0 %3057
      %v3061 = vsel %vm1553, %v3050, %v3056
      %v3062 = vsel %vm1553, %v3052, %v3058
      %v3063 = vld [vmem:[%s1556] sm:$0x1]
      %v3065 = vlaneseq
      %v3066 = vshrl.u32 %v3065, 7
      %v3067 = vsub.s32 0, %v3066
      %v3068 = vrot.slane %v3063, %v3067
      %v3070 = vmul.f32 %v3068, %v3061
      %v3071 = vmul.f32 %v3068, %v3062
      %v3072 = vadd.f32 %v2999, %v3070
      %v3073 = vadd.f32 %v3000, %v3071
      %v3074 = vld [vmem:[%s7] sm:$0xff]
      %v3075 = vld [vmem:[%s7 + $0x8] sm:$0xff]
      %3077 = vset.pattern.permute.xlu0 0
      %3078 = vperm.xlu0 %3077, %v3074
      %v3079 = vpop.permute.xlu0 %3078
      %3082 = vset.pattern.permute.xlu0 0
      %3083 = vperm.xlu0 %3082, %v3075
      %v3084 = vpop.permute.xlu0 %3083
      %v3086 = vadd.f32 %v3072, %v3079
      %v3087 = vadd.f32 %v3073, %v3084
      %v3088 = vmax.f32 %v3086, 0.0
      %v3089 = vmax.f32 %v3087, 0.0
      %v3090 = vmin.f32 %v3088, 6.0
      %v3091 = vmin.f32 %v3089, 6.0
      %v3092 = vld [vmem:[%s8] sm:$0xff]
      %v3093 = vld [vmem:[%s9] sm:$0xff]
      %3095 = vset.pattern.permute.xlu0 0
      %3096 = vperm.xlu0 %3095, %v3093
      %v3097 = vpop.permute.xlu0 %3096
      %v3100 = vsel %vm1593, %v3092, 0
      %3102 = vmatprep.subr.mxu0 0.0
      %3103 = vmatpush1.msra.mxu0 %v3090
      %3104 = vmatprep.subr.mxu0 0.0
      %3105 = vmatpush1.msra.mxu0 %v3091
      %3106 = vmatprep.subr.mxu0 0.0
      %3107 = vmatpush1.msra.mxu0 0.0
      %3108 = vmatprep.subr.mxu0 0.0
      %3109 = vmatpush1.msra.mxu0 0.0
      %3110 = vmatprep.subr.mxu0 0.0
      %3111 = vmatpush1.msra.mxu0 0.0
      %3112 = vmatprep.subr.mxu0 0.0
      %3113 = vmatpush1.msra.mxu0 0.0
      %3114 = vmatprep.subr.mxu0 0.0
      %3115 = vmatpush1.msra.mxu0 0.0
      %3116 = vmatprep.subr.mxu0 0.0
      %3117 = vmatpush1.msra.mxu0 0.0
      %3118 = vmatprep.subr.mxu0 0.0
      %3119 = vmatpush1.msra.mxu0 0.0
      %3120 = vmatprep.subr.mxu0 0.0
      %3121 = vmatpush1.msra.mxu0 0.0
      %3122 = vmatprep.subr.mxu0 0.0
      %3123 = vmatpush1.msra.mxu0 0.0
      %3124 = vmatprep.subr.mxu0 0.0
      %3125 = vmatpush1.msra.mxu0 0.0
      %3126 = vmatprep.subr.mxu0 0.0
      %3127 = vmatpush1.msra.mxu0 0.0
      %3128 = vmatprep.subr.mxu0 0.0
      %3129 = vmatpush1.msra.mxu0 0.0
      %3130 = vmatprep.subr.mxu0 0.0
      %3131 = vmatpush1.msra.mxu0 0.0
      %3132 = vmatprep.subr.mxu0 0.0
      %3133 = vmatpush1.msra.mxu0 0.0
      %3134 = vmatprep.subr.mxu0 0.0
      %3135 = vmatpush1.msra.mxu0 0.0
      %3136 = vmatprep.subr.mxu0 0.0
      %3137 = vmatpush1.msra.mxu0 0.0
      %3138 = vmatprep.subr.mxu0 0.0
      %3139 = vmatpush1.msra.mxu0 0.0
      %3140 = vmatprep.subr.mxu0 0.0
      %3141 = vmatpush1.msra.mxu0 0.0
      %3142 = vmatprep.subr.mxu0 0.0
      %3143 = vmatpush1.msra.mxu0 0.0
      %3144 = vmatprep.subr.mxu0 0.0
      %3145 = vmatpush1.msra.mxu0 0.0
      %3146 = vmatprep.subr.mxu0 0.0
      %3147 = vmatpush1.msra.mxu0 0.0
      %3148 = vmatprep.subr.mxu0 0.0
      %3149 = vmatpush1.msra.mxu0 0.0
      %3150 = vmatprep.subr.mxu0 0.0
      %3151 = vmatpush1.msra.mxu0 0.0
      %3152 = vmatprep.subr.mxu0 0.0
      %3153 = vmatpush1.msra.mxu0 0.0
      %3154 = vmatprep.subr.mxu0 0.0
      %3155 = vmatpush1.msra.mxu0 0.0
      %3156 = vmatprep.subr.mxu0 0.0
      %3157 = vmatpush1.msra.mxu0 0.0
      %3158 = vmatprep.subr.mxu0 0.0
      %3159 = vmatpush1.msra.mxu0 0.0
      %3160 = vmatprep.subr.mxu0 0.0
      %3161 = vmatpush1.msra.mxu0 0.0
      %3162 = vmatprep.subr.mxu0 0.0
      %3163 = vmatpush1.msra.mxu0 0.0
      %3164 = vmatprep.subr.mxu0 0.0
      %3165 = vmatpush1.msra.mxu0 0.0
      %3166 = vmatprep.mubr.f32.mxu0 0.0
      %3167 = vmatmul.mubr.f32.gmra.mrb[0].mxu0 %v3100
      %v3168 = vpop.f32.mrb[0].mxu0
      %v3169 = vadd.f32 %v3097, %v3168
      %v3170 = vpop.f32.mrb[0].mxu0
      %3171 = vdwg.mxu0
      %v3172 = vld [vmem:[%s469 + $0x8] sm:$0xff]
      %v3173 = vadd.f32 %v3169, %v3172
      %3174 = vst.msk [vmem:[%s511 + $0x8] sm:$0xff] %vm622, %v3173
      %v3175 = vld [vmem:[%s636] sm:$0xff]
      %v3176 = vld [vmem:[%s636 + $0x8] sm:$0xff]
      %v3177 = vld [vmem:[%s647] sm:$0xff]
      %v3178 = vld [vmem:[%s647 + $0x8] sm:$0xff]
      %s3179 = scalar_lea.vmem [#allocation2], 80
      %v3180 = vld [vmem:[%s3179] sm:$0xff]
      %v3181 = vld [vmem:[%s3179 + $0x8] sm:$0xff]
      %v3182 = vld [vmem:[%s6] sm:$0xff]
      %v3183 = vld [vmem:[%s6 + $0x8] sm:$0xff]
      %3185 = vset.pattern.permute.xlu0 0
      %3186 = vperm.xlu0 %3185, %v3182
      %v3187 = vpop.permute.xlu0 %3186
      %3190 = vset.pattern.permute.xlu0 0
      %3191 = vperm.xlu0 %3190, %v3183
      %v3192 = vpop.permute.xlu0 %3191
      %v3194 = vmul.f32 %v3187, %v3175
      %v3195 = vmul.f32 %v3192, %v3176
      %v3196 = vld [vmem:[%s900] sm:$0xff]
      %v3197 = vld [vmem:[%s900 + $0x8] sm:$0xff]
      %3199 = vset.pattern.permute.xlu0 0
      %3200 = vperm.xlu0 %3199, %v3196
      %v3201 = vpop.permute.xlu0 %3200
      %3204 = vset.pattern.permute.xlu0 0
      %3205 = vperm.xlu0 %3204, %v3197
      %v3206 = vpop.permute.xlu0 %3205
      %v3208 = vmul.f32 %v3201, %v3177
      %v3209 = vmul.f32 %v3206, %v3178
      %v3210 = vadd.f32 %v3194, %v3208
      %v3211 = vadd.f32 %v3195, %v3209
      %v3212 = vld [vmem:[%s917] sm:$0xff]
      %v3213 = vld [vmem:[%s917 + $0x8] sm:$0xff]
      %3215 = vset.pattern.permute.xlu0 0
      %3216 = vperm.xlu0 %3215, %v3212
      %v3217 = vpop.permute.xlu0 %3216
      %3220 = vset.pattern.permute.xlu0 0
      %3221 = vperm.xlu0 %3220, %v3213
      %v3222 = vpop.permute.xlu0 %3221
      %v3224 = vmul.f32 %v3217, %v3180
      %v3225 = vmul.f32 %v3222, %v3181
      %v3226 = vadd.f32 %v3210, %v3224
      %v3227 = vadd.f32 %v3211, %v3225
      %3230 = vrot.lane.b32.xlu0 %v3226, 73
      %v3231 = vpop.permute.xlu0 %3230
      %3232 = vrot.lane.b32.xlu0 %v3227, 73
      %v3233 = vpop.permute.xlu0 %3232
      %3236 = vrot.lane.b32.xlu0 %v3226, 9
      %v3237 = vpop.permute.xlu0 %3236
      %3238 = vrot.lane.b32.xlu0 %v3227, 9
      %v3239 = vpop.permute.xlu0 %3238
      %v3242 = vsel %vm948, %v3231, %v3237
      %v3243 = vsel %vm948, %v3233, %v3239
      %v3244 = vld [vmem:[%s3] sm:$0x1]
      %v3246 = vlaneseq
      %v3247 = vshrl.u32 %v3246, 7
      %v3248 = vsub.s32 0, %v3247
      %v3249 = vrot.slane %v3244, %v3248
      %v3251 = vmul.f32 %v3249, %v3242
      %v3252 = vmul.f32 %v3249, %v3243
      %v3253 = vadd.f32 %v3251, 0.0
      %v3254 = vadd.f32 %v3252, 0.0
      %v3255 = vld [vmem:[%s962] sm:$0xff]
      %v3256 = vld [vmem:[%s962 + $0x8] sm:$0xff]
      %3258 = vset.pattern.permute.xlu0 0
      %3259 = vperm.xlu0 %3258, %v3255
      %v3260 = vpop.permute.xlu0 %3259
      %3263 = vset.pattern.permute.xlu0 0
      %3264 = vperm.xlu0 %3263, %v3256
      %v3265 = vpop.permute.xlu0 %3264
      %v3267 = vmul.f32 %v3260, %v3175
      %v3268 = vmul.f32 %v3265, %v3176
      %v3269 = vld [vmem:[%s977] sm:$0xff]
      %v3270 = vld [vmem:[%s977 + $0x8] sm:$0xff]
      %3272 = vset.pattern.permute.xlu0 0
      %3273 = vperm.xlu0 %3272, %v3269
      %v3274 = vpop.permute.xlu0 %3273
      %3277 = vset.pattern.permute.xlu0 0
      %3278 = vperm.xlu0 %3277, %v3270
      %v3279 = vpop.permute.xlu0 %3278
      %v3281 = vmul.f32 %v3274, %v3177
      %v3282 = vmul.f32 %v3279, %v3178
      %v3283 = vadd.f32 %v3267, %v3281
      %v3284 = vadd.f32 %v3268, %v3282
      %v3285 = vld [vmem:[%s994] sm:$0xff]
      %v3286 = vld [vmem:[%s994 + $0x8] sm:$0xff]
      %3288 = vset.pattern.permute.xlu0 0
      %3289 = vperm.xlu0 %3288, %v3285
      %v3290 = vpop.permute.xlu0 %3289
      %3293 = vset.pattern.permute.xlu0 0
      %3294 = vperm.xlu0 %3293, %v3286
      %v3295 = vpop.permute.xlu0 %3294
      %v3297 = vmul.f32 %v3290, %v3180
      %v3298 = vmul.f32 %v3295, %v3181
      %v3299 = vadd.f32 %v3283, %v3297
      %v3300 = vadd.f32 %v3284, %v3298
      %3303 = vrot.lane.b32.xlu0 %v3299, 72
      %v3304 = vpop.permute.xlu0 %3303
      %3305 = vrot.lane.b32.xlu0 %v3300, 72
      %v3306 = vpop.permute.xlu0 %3305
      %3309 = vrot.lane.b32.xlu0 %v3299, 8
      %v3310 = vpop.permute.xlu0 %3309
      %3311 = vrot.lane.b32.xlu0 %v3300, 8
      %v3312 = vpop.permute.xlu0 %3311
      %v3315 = vsel %vm529, %v3304, %v3310
      %v3316 = vsel %vm529, %v3306, %v3312
      %v3317 = vld [vmem:[%s1027] sm:$0x1]
      %v3319 = vlaneseq
      %v3320 = vshrl.u32 %v3319, 7
      %v3321 = vsub.s32 0, %v3320
      %v3322 = vrot.slane %v3317, %v3321
      %v3324 = vmul.f32 %v3322, %v3315
      %v3325 = vmul.f32 %v3322, %v3316
      %v3326 = vadd.f32 %v3253, %v3324
      %v3327 = vadd.f32 %v3254, %v3325
      %v3328 = vld [vmem:[%s1039] sm:$0xff]
      %v3329 = vld [vmem:[%s1039 + $0x8] sm:$0xff]
      %3331 = vset.pattern.permute.xlu0 0
      %3332 = vperm.xlu0 %3331, %v3328
      %v3333 = vpop.permute.xlu0 %3332
      %3336 = vset.pattern.permute.xlu0 0
      %3337 = vperm.xlu0 %3336, %v3329
      %v3338 = vpop.permute.xlu0 %3337
      %v3340 = vmul.f32 %v3333, %v3175
      %v3341 = vmul.f32 %v3338, %v3176
      %v3342 = vld [vmem:[%s1054] sm:$0xff]
      %v3343 = vld [vmem:[%s1054 + $0x8] sm:$0xff]
      %3345 = vset.pattern.permute.xlu0 0
      %3346 = vperm.xlu0 %3345, %v3342
      %v3347 = vpop.permute.xlu0 %3346
      %3350 = vset.pattern.permute.xlu0 0
      %3351 = vperm.xlu0 %3350, %v3343
      %v3352 = vpop.permute.xlu0 %3351
      %v3354 = vmul.f32 %v3347, %v3177
      %v3355 = vmul.f32 %v3352, %v3178
      %v3356 = vadd.f32 %v3340, %v3354
      %v3357 = vadd.f32 %v3341, %v3355
      %v3358 = vld [vmem:[%s1071] sm:$0xff]
      %v3359 = vld [vmem:[%s1071 + $0x8] sm:$0xff]
      %3361 = vset.pattern.permute.xlu0 0
      %3362 = vperm.xlu0 %3361, %v3358
      %v3363 = vpop.permute.xlu0 %3362
      %3366 = vset.pattern.permute.xlu0 0
      %3367 = vperm.xlu0 %3366, %v3359
      %v3368 = vpop.permute.xlu0 %3367
      %v3370 = vmul.f32 %v3363, %v3180
      %v3371 = vmul.f32 %v3368, %v3181
      %v3372 = vadd.f32 %v3356, %v3370
      %v3373 = vadd.f32 %v3357, %v3371
      %3376 = vrot.lane.b32.xlu0 %v3372, 71
      %v3377 = vpop.permute.xlu0 %3376
      %3378 = vrot.lane.b32.xlu0 %v3373, 71
      %v3379 = vpop.permute.xlu0 %3378
      %3382 = vrot.lane.b32.xlu0 %v3372, 7
      %v3383 = vpop.permute.xlu0 %3382
      %3384 = vrot.lane.b32.xlu0 %v3373, 7
      %v3385 = vpop.permute.xlu0 %3384
      %v3388 = vsel %vm1102, %v3377, %v3383
      %v3389 = vsel %vm1102, %v3379, %v3385
      %v3390 = vld [vmem:[%s1105] sm:$0x1]
      %v3392 = vlaneseq
      %v3393 = vshrl.u32 %v3392, 7
      %v3394 = vsub.s32 0, %v3393
      %v3395 = vrot.slane %v3390, %v3394
      %v3397 = vmul.f32 %v3395, %v3388
      %v3398 = vmul.f32 %v3395, %v3389
      %v3399 = vadd.f32 %v3326, %v3397
      %v3400 = vadd.f32 %v3327, %v3398
      %v3401 = vld [vmem:[%s1117] sm:$0xff]
      %v3402 = vld [vmem:[%s1117 + $0x8] sm:$0xff]
      %3404 = vset.pattern.permute.xlu0 0
      %3405 = vperm.xlu0 %3404, %v3401
      %v3406 = vpop.permute.xlu0 %3405
      %3409 = vset.pattern.permute.xlu0 0
      %3410 = vperm.xlu0 %3409, %v3402
      %v3411 = vpop.permute.xlu0 %3410
      %v3413 = vmul.f32 %v3406, %v3175
      %v3414 = vmul.f32 %v3411, %v3176
      %v3415 = vld [vmem:[%s1132] sm:$0xff]
      %v3416 = vld [vmem:[%s1132 + $0x8] sm:$0xff]
      %3418 = vset.pattern.permute.xlu0 0
      %3419 = vperm.xlu0 %3418, %v3415
      %v3420 = vpop.permute.xlu0 %3419
      %3423 = vset.pattern.permute.xlu0 0
      %3424 = vperm.xlu0 %3423, %v3416
      %v3425 = vpop.permute.xlu0 %3424
      %v3427 = vmul.f32 %v3420, %v3177
      %v3428 = vmul.f32 %v3425, %v3178
      %v3429 = vadd.f32 %v3413, %v3427
      %v3430 = vadd.f32 %v3414, %v3428
      %v3431 = vld [vmem:[%s1149] sm:$0xff]
      %v3432 = vld [vmem:[%s1149 + $0x8] sm:$0xff]
      %3434 = vset.pattern.permute.xlu0 0
      %3435 = vperm.xlu0 %3434, %v3431
      %v3436 = vpop.permute.xlu0 %3435
      %3439 = vset.pattern.permute.xlu0 0
      %3440 = vperm.xlu0 %3439, %v3432
      %v3441 = vpop.permute.xlu0 %3440
      %v3443 = vmul.f32 %v3436, %v3180
      %v3444 = vmul.f32 %v3441, %v3181
      %v3445 = vadd.f32 %v3429, %v3443
      %v3446 = vadd.f32 %v3430, %v3444
      %3449 = vrot.lane.b32.xlu0 %v3445, 65
      %v3450 = vpop.permute.xlu0 %3449
      %3451 = vrot.lane.b32.xlu0 %v3446, 65
      %v3452 = vpop.permute.xlu0 %3451
      %3455 = vrot.lane.b32.xlu0 %v3445, 1
      %v3456 = vpop.permute.xlu0 %3455
      %3457 = vrot.lane.b32.xlu0 %v3446, 1
      %v3458 = vpop.permute.xlu0 %3457
      %v3461 = vsel %vm1180, %v3450, %v3456
      %v3462 = vsel %vm1180, %v3452, %v3458
      %v3463 = vld [vmem:[%s1183] sm:$0x1]
      %v3465 = vlaneseq
      %v3466 = vshrl.u32 %v3465, 7
      %v3467 = vsub.s32 0, %v3466
      %v3468 = vrot.slane %v3463, %v3467
      %v3470 = vmul.f32 %v3468, %v3461
      %v3471 = vmul.f32 %v3468, %v3462
      %v3472 = vadd.f32 %v3399, %v3470
      %v3473 = vadd.f32 %v3400, %v3471
      %v3474 = vld [vmem:[%s1195] sm:$0xff]
      %v3475 = vld [vmem:[%s1195 + $0x8] sm:$0xff]
      %3477 = vset.pattern.permute.xlu0 0
      %3478 = vperm.xlu0 %3477, %v3474
      %v3479 = vpop.permute.xlu0 %3478
      %3482 = vset.pattern.permute.xlu0 0
      %3483 = vperm.xlu0 %3482, %v3475
      %v3484 = vpop.permute.xlu0 %3483
      %v3486 = vmul.f32 %v3479, %v3175
      %v3487 = vmul.f32 %v3484, %v3176
      %v3488 = vld [vmem:[%s1210] sm:$0xff]
      %v3489 = vld [vmem:[%s1210 + $0x8] sm:$0xff]
      %3491 = vset.pattern.permute.xlu0 0
      %3492 = vperm.xlu0 %3491, %v3488
      %v3493 = vpop.permute.xlu0 %3492
      %3496 = vset.pattern.permute.xlu0 0
      %3497 = vperm.xlu0 %3496, %v3489
      %v3498 = vpop.permute.xlu0 %3497
      %v3500 = vmul.f32 %v3493, %v3177
      %v3501 = vmul.f32 %v3498, %v3178
      %v3502 = vadd.f32 %v3486, %v3500
      %v3503 = vadd.f32 %v3487, %v3501
      %v3504 = vld [vmem:[%s1227] sm:$0xff]
      %v3505 = vld [vmem:[%s1227 + $0x8] sm:$0xff]
      %3507 = vset.pattern.permute.xlu0 0
      %3508 = vperm.xlu0 %3507, %v3504
      %v3509 = vpop.permute.xlu0 %3508
      %3512 = vset.pattern.permute.xlu0 0
      %3513 = vperm.xlu0 %3512, %v3505
      %v3514 = vpop.permute.xlu0 %3513
      %v3516 = vmul.f32 %v3509, %v3180
      %v3517 = vmul.f32 %v3514, %v3181
      %v3518 = vadd.f32 %v3502, %v3516
      %v3519 = vadd.f32 %v3503, %v3517
      %v3520 = vld [vmem:[%s1244] sm:$0x1]
      %v3522 = vlaneseq
      %v3523 = vshrl.u32 %v3522, 7
      %v3524 = vsub.s32 0, %v3523
      %v3525 = vrot.slane %v3520, %v3524
      %v3527 = vmul.f32 %v3525, %v3518
      %v3528 = vmul.f32 %v3525, %v3519
      %v3529 = vadd.f32 %v3472, %v3527
      %v3530 = vadd.f32 %v3473, %v3528
      %v3531 = vld [vmem:[%s1256] sm:$0xff]
      %v3532 = vld [vmem:[%s1256 + $0x8] sm:$0xff]
      %3534 = vset.pattern.permute.xlu0 0
      %3535 = vperm.xlu0 %3534, %v3531
      %v3536 = vpop.permute.xlu0 %3535
      %3539 = vset.pattern.permute.xlu0 0
      %3540 = vperm.xlu0 %3539, %v3532
      %v3541 = vpop.permute.xlu0 %3540
      %v3543 = vmul.f32 %v3536, %v3175
      %v3544 = vmul.f32 %v3541, %v3176
      %v3545 = vld [vmem:[%s1271] sm:$0xff]
      %v3546 = vld [vmem:[%s1271 + $0x8] sm:$0xff]
      %3548 = vset.pattern.permute.xlu0 0
      %3549 = vperm.xlu0 %3548, %v3545
      %v3550 = vpop.permute.xlu0 %3549
      %3553 = vset.pattern.permute.xlu0 0
      %3554 = vperm.xlu0 %3553, %v3546
      %v3555 = vpop.permute.xlu0 %3554
      %v3557 = vmul.f32 %v3550, %v3177
      %v3558 = vmul.f32 %v3555, %v3178
      %v3559 = vadd.f32 %v3543, %v3557
      %v3560 = vadd.f32 %v3544, %v3558
      %v3561 = vld [vmem:[%s1288] sm:$0xff]
      %v3562 = vld [vmem:[%s1288 + $0x8] sm:$0xff]
      %3564 = vset.pattern.permute.xlu0 0
      %3565 = vperm.xlu0 %3564, %v3561
      %v3566 = vpop.permute.xlu0 %3565
      %3569 = vset.pattern.permute.xlu0 0
      %3570 = vperm.xlu0 %3569, %v3562
      %v3571 = vpop.permute.xlu0 %3570
      %v3573 = vmul.f32 %v3566, %v3180
      %v3574 = vmul.f32 %v3571, %v3181
      %v3575 = vadd.f32 %v3559, %v3573
      %v3576 = vadd.f32 %v3560, %v3574
      %3579 = vrot.lane.b32.xlu0 %v3575, 127
      %v3580 = vpop.permute.xlu0 %3579
      %3581 = vrot.lane.b32.xlu0 %v3576, 127
      %v3582 = vpop.permute.xlu0 %3581
      %3585 = vrot.lane.b32.xlu0 %v3575, 63
      %v3586 = vpop.permute.xlu0 %3585
      %3587 = vrot.lane.b32.xlu0 %v3576, 63
      %v3588 = vpop.permute.xlu0 %3587
      %v3591 = vsel %vm1319, %v3580, %v3586
      %v3592 = vsel %vm1319, %v3582, %v3588
      %v3593 = vld [vmem:[%s1322] sm:$0x1]
      %v3595 = vlaneseq
      %v3596 = vshrl.u32 %v3595, 7
      %v3597 = vsub.s32 0, %v3596
      %v3598 = vrot.slane %v3593, %v3597
      %v3600 = vmul.f32 %v3598, %v3591
      %v3601 = vmul.f32 %v3598, %v3592
      %v3602 = vadd.f32 %v3529, %v3600
      %v3603 = vadd.f32 %v3530, %v3601
      %v3604 = vld [vmem:[%s1334] sm:$0xff]
      %v3605 = vld [vmem:[%s1334 + $0x8] sm:$0xff]
      %3607 = vset.pattern.permute.xlu0 0
      %3608 = vperm.xlu0 %3607, %v3604
      %v3609 = vpop.permute.xlu0 %3608
      %3612 = vset.pattern.permute.xlu0 0
      %3613 = vperm.xlu0 %3612, %v3605
      %v3614 = vpop.permute.xlu0 %3613
      %v3616 = vmul.f32 %v3609, %v3175
      %v3617 = vmul.f32 %v3614, %v3176
      %v3618 = vld [vmem:[%s1349] sm:$0xff]
      %v3619 = vld [vmem:[%s1349 + $0x8] sm:$0xff]
      %3621 = vset.pattern.permute.xlu0 0
      %3622 = vperm.xlu0 %3621, %v3618
      %v3623 = vpop.permute.xlu0 %3622
      %3626 = vset.pattern.permute.xlu0 0
      %3627 = vperm.xlu0 %3626, %v3619
      %v3628 = vpop.permute.xlu0 %3627
      %v3630 = vmul.f32 %v3623, %v3177
      %v3631 = vmul.f32 %v3628, %v3178
      %v3632 = vadd.f32 %v3616, %v3630
      %v3633 = vadd.f32 %v3617, %v3631
      %v3634 = vld [vmem:[%s1366] sm:$0xff]
      %v3635 = vld [vmem:[%s1366 + $0x8] sm:$0xff]
      %3637 = vset.pattern.permute.xlu0 0
      %3638 = vperm.xlu0 %3637, %v3634
      %v3639 = vpop.permute.xlu0 %3638
      %3642 = vset.pattern.permute.xlu0 0
      %3643 = vperm.xlu0 %3642, %v3635
      %v3644 = vpop.permute.xlu0 %3643
      %v3646 = vmul.f32 %v3639, %v3180
      %v3647 = vmul.f32 %v3644, %v3181
      %v3648 = vadd.f32 %v3632, %v3646
      %v3649 = vadd.f32 %v3633, %v3647
      %3652 = vrot.lane.b32.xlu0 %v3648, 121
      %v3653 = vpop.permute.xlu0 %3652
      %3654 = vrot.lane.b32.xlu0 %v3649, 121
      %v3655 = vpop.permute.xlu0 %3654
      %3658 = vrot.lane.b32.xlu0 %v3648, 57
      %v3659 = vpop.permute.xlu0 %3658
      %3660 = vrot.lane.b32.xlu0 %v3649, 57
      %v3661 = vpop.permute.xlu0 %3660
      %v3664 = vsel %vm1397, %v3653, %v3659
      %v3665 = vsel %vm1397, %v3655, %v3661
      %v3666 = vld [vmem:[%s1400] sm:$0x1]
      %v3668 = vlaneseq
      %v3669 = vshrl.u32 %v3668, 7
      %v3670 = vsub.s32 0, %v3669
      %v3671 = vrot.slane %v3666, %v3670
      %v3673 = vmul.f32 %v3671, %v3664
      %v3674 = vmul.f32 %v3671, %v3665
      %v3675 = vadd.f32 %v3602, %v3673
      %v3676 = vadd.f32 %v3603, %v3674
      %v3677 = vld [vmem:[%s1412] sm:$0xff]
      %v3678 = vld [vmem:[%s1412 + $0x8] sm:$0xff]
      %3680 = vset.pattern.permute.xlu0 0
      %3681 = vperm.xlu0 %3680, %v3677
      %v3682 = vpop.permute.xlu0 %3681
      %3685 = vset.pattern.permute.xlu0 0
      %3686 = vperm.xlu0 %3685, %v3678
      %v3687 = vpop.permute.xlu0 %3686
      %v3689 = vmul.f32 %v3682, %v3175
      %v3690 = vmul.f32 %v3687, %v3176
      %v3691 = vld [vmem:[%s1427] sm:$0xff]
      %v3692 = vld [vmem:[%s1427 + $0x8] sm:$0xff]
      %3694 = vset.pattern.permute.xlu0 0
      %3695 = vperm.xlu0 %3694, %v3691
      %v3696 = vpop.permute.xlu0 %3695
      %3699 = vset.pattern.permute.xlu0 0
      %3700 = vperm.xlu0 %3699, %v3692
      %v3701 = vpop.permute.xlu0 %3700
      %v3703 = vmul.f32 %v3696, %v3177
      %v3704 = vmul.f32 %v3701, %v3178
      %v3705 = vadd.f32 %v3689, %v3703
      %v3706 = vadd.f32 %v3690, %v3704
      %v3707 = vld [vmem:[%s1444] sm:$0xff]
      %v3708 = vld [vmem:[%s1444 + $0x8] sm:$0xff]
      %3710 = vset.pattern.permute.xlu0 0
      %3711 = vperm.xlu0 %3710, %v3707
      %v3712 = vpop.permute.xlu0 %3711
      %3715 = vset.pattern.permute.xlu0 0
      %3716 = vperm.xlu0 %3715, %v3708
      %v3717 = vpop.permute.xlu0 %3716
      %v3719 = vmul.f32 %v3712, %v3180
      %v3720 = vmul.f32 %v3717, %v3181
      %v3721 = vadd.f32 %v3705, %v3719
      %v3722 = vadd.f32 %v3706, %v3720
      %3725 = vrot.lane.b32.xlu0 %v3721, 120
      %v3726 = vpop.permute.xlu0 %3725
      %3727 = vrot.lane.b32.xlu0 %v3722, 120
      %v3728 = vpop.permute.xlu0 %3727
      %3731 = vrot.lane.b32.xlu0 %v3721, 56
      %v3732 = vpop.permute.xlu0 %3731
      %3733 = vrot.lane.b32.xlu0 %v3722, 56
      %v3734 = vpop.permute.xlu0 %3733
      %v3737 = vsel %vm1475, %v3726, %v3732
      %v3738 = vsel %vm1475, %v3728, %v3734
      %v3739 = vld [vmem:[%s1478] sm:$0x1]
      %v3741 = vlaneseq
      %v3742 = vshrl.u32 %v3741, 7
      %v3743 = vsub.s32 0, %v3742
      %v3744 = vrot.slane %v3739, %v3743
      %v3746 = vmul.f32 %v3744, %v3737
      %v3747 = vmul.f32 %v3744, %v3738
      %v3748 = vadd.f32 %v3675, %v3746
      %v3749 = vadd.f32 %v3676, %v3747
      %v3750 = vld [vmem:[%s1490] sm:$0xff]
      %v3751 = vld [vmem:[%s1490 + $0x8] sm:$0xff]
      %3753 = vset.pattern.permute.xlu0 0
      %3754 = vperm.xlu0 %3753, %v3750
      %v3755 = vpop.permute.xlu0 %3754
      %3758 = vset.pattern.permute.xlu0 0
      %3759 = vperm.xlu0 %3758, %v3751
      %v3760 = vpop.permute.xlu0 %3759
      %v3762 = vmul.f32 %v3755, %v3175
      %v3763 = vmul.f32 %v3760, %v3176
      %v3764 = vld [vmem:[%s1505] sm:$0xff]
      %v3765 = vld [vmem:[%s1505 + $0x8] sm:$0xff]
      %3767 = vset.pattern.permute.xlu0 0
      %3768 = vperm.xlu0 %3767, %v3764
      %v3769 = vpop.permute.xlu0 %3768
      %3772 = vset.pattern.permute.xlu0 0
      %3773 = vperm.xlu0 %3772, %v3765
      %v3774 = vpop.permute.xlu0 %3773
      %v3776 = vmul.f32 %v3769, %v3177
      %v3777 = vmul.f32 %v3774, %v3178
      %v3778 = vadd.f32 %v3762, %v3776
      %v3779 = vadd.f32 %v3763, %v3777
      %v3780 = vld [vmem:[%s1522] sm:$0xff]
      %v3781 = vld [vmem:[%s1522 + $0x8] sm:$0xff]
      %3783 = vset.pattern.permute.xlu0 0
      %3784 = vperm.xlu0 %3783, %v3780
      %v3785 = vpop.permute.xlu0 %3784
      %3788 = vset.pattern.permute.xlu0 0
      %3789 = vperm.xlu0 %3788, %v3781
      %v3790 = vpop.permute.xlu0 %3789
      %v3792 = vmul.f32 %v3785, %v3180
      %v3793 = vmul.f32 %v3790, %v3181
      %v3794 = vadd.f32 %v3778, %v3792
      %v3795 = vadd.f32 %v3779, %v3793
      %3798 = vrot.lane.b32.xlu0 %v3794, 119
      %v3799 = vpop.permute.xlu0 %3798
      %3800 = vrot.lane.b32.xlu0 %v3795, 119
      %v3801 = vpop.permute.xlu0 %3800
      %3804 = vrot.lane.b32.xlu0 %v3794, 55
      %v3805 = vpop.permute.xlu0 %3804
      %3806 = vrot.lane.b32.xlu0 %v3795, 55
      %v3807 = vpop.permute.xlu0 %3806
      %v3810 = vsel %vm1553, %v3799, %v3805
      %v3811 = vsel %vm1553, %v3801, %v3807
      %v3812 = vld [vmem:[%s1556] sm:$0x1]
      %v3814 = vlaneseq
      %v3815 = vshrl.u32 %v3814, 7
      %v3816 = vsub.s32 0, %v3815
      %v3817 = vrot.slane %v3812, %v3816
      %v3819 = vmul.f32 %v3817, %v3810
      %v3820 = vmul.f32 %v3817, %v3811
      %v3821 = vadd.f32 %v3748, %v3819
      %v3822 = vadd.f32 %v3749, %v3820
      %v3823 = vld [vmem:[%s7] sm:$0xff]
      %v3824 = vld [vmem:[%s7 + $0x8] sm:$0xff]
      %3826 = vset.pattern.permute.xlu0 0
      %3827 = vperm.xlu0 %3826, %v3823
      %v3828 = vpop.permute.xlu0 %3827
      %3831 = vset.pattern.permute.xlu0 0
      %3832 = vperm.xlu0 %3831, %v3824
      %v3833 = vpop.permute.xlu0 %3832
      %v3835 = vadd.f32 %v3821, %v3828
      %v3836 = vadd.f32 %v3822, %v3833
      %v3837 = vmax.f32 %v3835, 0.0
      %v3838 = vmax.f32 %v3836, 0.0
      %v3839 = vmin.f32 %v3837, 6.0
      %v3840 = vmin.f32 %v3838, 6.0
      %v3841 = vld [vmem:[%s8] sm:$0xff]
      %v3842 = vld [vmem:[%s9] sm:$0xff]
      %3844 = vset.pattern.permute.xlu0 0
      %3845 = vperm.xlu0 %3844, %v3842
      %v3846 = vpop.permute.xlu0 %3845
      %v3849 = vsel %vm1593, %v3841, 0
      %3851 = vmatprep.subr.mxu0 0.0
      %3852 = vmatpush1.msra.mxu0 %v3839
      %3853 = vmatprep.subr.mxu0 0.0
      %3854 = vmatpush1.msra.mxu0 %v3840
      %3855 = vmatprep.subr.mxu0 0.0
      %3856 = vmatpush1.msra.mxu0 0.0
      %3857 = vmatprep.subr.mxu0 0.0
      %3858 = vmatpush1.msra.mxu0 0.0
      %3859 = vmatprep.subr.mxu0 0.0
      %3860 = vmatpush1.msra.mxu0 0.0
      %3861 = vmatprep.subr.mxu0 0.0
      %3862 = vmatpush1.msra.mxu0 0.0
      %3863 = vmatprep.subr.mxu0 0.0
      %3864 = vmatpush1.msra.mxu0 0.0
      %3865 = vmatprep.subr.mxu0 0.0
      %3866 = vmatpush1.msra.mxu0 0.0
      %3867 = vmatprep.subr.mxu0 0.0
      %3868 = vmatpush1.msra.mxu0 0.0
      %3869 = vmatprep.subr.mxu0 0.0
      %3870 = vmatpush1.msra.mxu0 0.0
      %3871 = vmatprep.subr.mxu0 0.0
      %3872 = vmatpush1.msra.mxu0 0.0
      %3873 = vmatprep.subr.mxu0 0.0
      %3874 = vmatpush1.msra.mxu0 0.0
      %3875 = vmatprep.subr.mxu0 0.0
      %3876 = vmatpush1.msra.mxu0 0.0
      %3877 = vmatprep.subr.mxu0 0.0
      %3878 = vmatpush1.msra.mxu0 0.0
      %3879 = vmatprep.subr.mxu0 0.0
      %3880 = vmatpush1.msra.mxu0 0.0
      %3881 = vmatprep.subr.mxu0 0.0
      %3882 = vmatpush1.msra.mxu0 0.0
      %3883 = vmatprep.subr.mxu0 0.0
      %3884 = vmatpush1.msra.mxu0 0.0
      %3885 = vmatprep.subr.mxu0 0.0
      %3886 = vmatpush1.msra.mxu0 0.0
      %3887 = vmatprep.subr.mxu0 0.0
      %3888 = vmatpush1.msra.mxu0 0.0
      %3889 = vmatprep.subr.mxu0 0.0
      %3890 = vmatpush1.msra.mxu0 0.0
      %3891 = vmatprep.subr.mxu0 0.0
      %3892 = vmatpush1.msra.mxu0 0.0
      %3893 = vmatprep.subr.mxu0 0.0
      %3894 = vmatpush1.msra.mxu0 0.0
      %3895 = vmatprep.subr.mxu0 0.0
      %3896 = vmatpush1.msra.mxu0 0.0
      %3897 = vmatprep.subr.mxu0 0.0
      %3898 = vmatpush1.msra.mxu0 0.0
      %3899 = vmatprep.subr.mxu0 0.0
      %3900 = vmatpush1.msra.mxu0 0.0
      %3901 = vmatprep.subr.mxu0 0.0
      %3902 = vmatpush1.msra.mxu0 0.0
      %3903 = vmatprep.subr.mxu0 0.0
      %3904 = vmatpush1.msra.mxu0 0.0
      %3905 = vmatprep.subr.mxu0 0.0
      %3906 = vmatpush1.msra.mxu0 0.0
      %3907 = vmatprep.subr.mxu0 0.0
      %3908 = vmatpush1.msra.mxu0 0.0
      %3909 = vmatprep.subr.mxu0 0.0
      %3910 = vmatpush1.msra.mxu0 0.0
      %3911 = vmatprep.subr.mxu0 0.0
      %3912 = vmatpush1.msra.mxu0 0.0
      %3913 = vmatprep.subr.mxu0 0.0
      %3914 = vmatpush1.msra.mxu0 0.0
      %3915 = vmatprep.mubr.f32.mxu0 0.0
      %3916 = vmatmul.mubr.f32.gmra.mrb[0].mxu0 %v3849
      %v3917 = vpop.f32.mrb[0].mxu0
      %v3918 = vadd.f32 %v3846, %v3917
      %v3919 = vpop.f32.mrb[0].mxu0
      %3920 = vdwg.mxu0
      %v3921 = vld [vmem:[%s469 + $0x8] sm:$0xff]
      %3923 = vrot.lane.b32.xlu0 %v3921, 64
      %v3924 = vpop.permute.xlu0 %3923
      %v3926 = vadd.f32 %v3918, %v3924
      %3928 = vrot.lane.b32.xlu0 %v3926, 64
      %v3929 = vpop.permute.xlu0 %3928
      %3931 = vst.msk [vmem:[%s511 + $0x8] sm:$0xff] %vm2425, %v3929
      %s3932 = smul.u32 2, %s26
      %p3933 = scmp.lt.s32.totalorder %s25, 1
      %s3934 = scalar_select %p3933, %s25, 1
      %p3935 = scmp.lt.s32.totalorder %s3932, 3
      %s3936 = scalar_select %p3935, %s3932, 3
      %s3937 = smul.addr %s3934, 4
      %s3938 = sadd.s32 %s3936, %s3937
      %s3939 = smul.addr %s3938, 8
      %s3940 = scalar_lea.vmem %s10, %s3939
      // Predicated region
      $region77: #{inverted_residual.1} parent=59 // pred_check
        %p3941 = pneg %p296
      $region78: #{inverted_residual.1} parent=59 // pred_check_branch
        %3943 = sbr.rel (%p3941) target = $region80
      $region79: #{inverted_residual.1} parent=59 // pred_region
        %s3944 = smul.u32 2, %s26
      $region80: #{inverted_residual.1} parent=59 // pred_fallthru
        _
    $region60: #{inverted_residual.1} parent=5 // pred_fallthru
      _
    %p3945 = scmp.le.s32.totalorder 2, %s16
    // Predicated region
    $region81: #{inverted_residual.1} parent=5 // pred_check
      %p3946 = pneg %p3945
    $region82: #{inverted_residual.1} parent=5 // pred_check_branch
      %3948 = sbr.rel (%p3946) target = $region84
    $region83: #{inverted_residual.1} parent=5 // pred_region
      %s3949 = ssub.s32 %s16, 2
      // Predicated region
      $region85: #{inverted_residual.1} parent=83 // pred_check
        %p3950 = pneg %p302
      $region86: #{inverted_residual.1} parent=83 // pred_check_branch
        %3952 = sbr.rel (%p3950) target = $region88
      $region87: #{inverted_residual.1} parent=83 // pred_region
        %s3953 = smul.u32 2, %s28
        %p3954 = scmp.lt.s32.totalorder %s27, 1
        %s3955 = scalar_select %p3954, %s27, 1
        %p3956 = scmp.lt.s32.totalorder %s3953, 3
        %s3957 = scalar_select %p3956, %s3953, 3
        %s3958 = smul.addr %s3955, 4
        %s3959 = sadd.s32 %s3957, %s3958
        %s3960 = smul.addr %s3959, 8
        %s3961 = scalar_lea.vmem %s10, %s3960
      $region88: #{inverted_residual.1} parent=83 // pred_fallthru
        _
    $region84: #{inverted_residual.1} parent=5 // pred_fallthru
      _
  $region6: #{inverted_residual.1} parent=0 // loop_footer
    %s20 = sadd.s32 1, %s16
  $region7: #{inverted_residual.1} parent=0 // loop_footer_branch
    %15 = sbr.rel target = $region3
  $region8: #{inverted_residual.1} parent=0 // loop_exit
    _

</llo_original>
